<compile_context>
chip_gen: v5e
topology: v5e:2x2
jax: 0.10.0
libtpu: 0.0.40
codegen_flags: <defaults>
</compile_context>

<pallas_src>
import math

import jax
import jax.numpy as jnp
from jax.experimental import pallas as pl
from jax.experimental.pallas import tpu as pltpu

EPS = 1e-5


# ---------------------------------------------------------------------------
# Kernel: TB batch elements per grid step; activations are (L, TB, C).
# ---------------------------------------------------------------------------
def tcn_kernel(
    x_ref,
    c00_w, c00_t,
    c01_w, c01_b, c01_t,
    c10_w, c10_t,
    c11_w, c11_b, c11_t,
    c20_w, c20_t,
    c21_w, c21_b, c21_t,
    fc0_w, fc0_t,
    fc1_w, fc1_t,
    out_w, out_b,
    o_ref,
):
    f32 = jnp.float32
    bf16 = jnp.bfloat16
    L0, TB, _ = x_ref.shape

    def dconv(x3, d, w_ref, add_ref):
        # y[l] = W0 @ x[l-d] + W1 @ x[l] + W2 @ x[l+d] + add
        # Implemented as ONE matmul against the (3*Cin, Cout) concat weight.
        L, _, C = x3.shape
        Cout = w_ref.shape[1]
        z = jnp.zeros((d, TB, C), x3.dtype)
        xm = jnp.concatenate([z, x3[: L - d]], axis=0)      # x[l - d]
        xp = jnp.concatenate([x3[d:], z], axis=0)           # x[l + d]
        xcat = jnp.concatenate([xm, x3, xp], axis=-1)       # (L, TB, 3C)
        y = jnp.dot(
            xcat.reshape(L * TB, 3 * C).astype(bf16),
            w_ref[...],
            preferred_element_type=f32,
        )
        y = y + add_ref[...]                                 # (L*TB, Cout)
        return y.reshape(L, TB, Cout)

    def avgpool(x3):
        # AvgPool1d(3, stride=2, padding=1, count_include_pad=True):
        # out[i] = (x[2i-1] + x[2i] + x[2i+1]) / 3 with zero padding.
        L, _, C = x3.shape
        Lo = -(-L // 2)
        zf = jnp.zeros((1, TB, C), x3.dtype)
        zb = jnp.zeros((2 * Lo - L + 1, TB, C), x3.dtype)
        xpd = jnp.concatenate([zf, x3, zb], axis=0)          # xpd[j] = x[j-1]
        a = xpd[: 2 * Lo].reshape(Lo, 2, TB, C)              # a[:,0]=x[2i-1], a[:,1]=x[2i]
        c = xpd[2: 2 * Lo + 2].reshape(Lo, 2, TB, C)         # c[:,0]=x[2i+1]
        return (a[:, 0] + a[:, 1] + c[:, 0]) * (1.0 / 3.0)

    def act(v):
        # ReLU in f32, store activation as bf16 (next consumer is a matmul).
        return jnp.maximum(v, 0.0).astype(bf16)

    x = x_ref[...]                                           # (L0, TB, Cin) bf16

    # ---- block 0 (dilation 2): conv+BN folded; conv->pool->BN split around pool ----
    h = act(dconv(x, 2, c00_w, c00_t))                       # (L0, TB, 32)
    h = act(avgpool(dconv(h, 2, c01_w, c01_b)) + c01_t[...]) # (L1, TB, 64)

    # ---- block 1 (dilation 2) ----
    h = act(dconv(h, 2, c10_w, c10_t))                       # (L1, TB, 64)
    h = act(avgpool(dconv(h, 2, c11_w, c11_b)) + c11_t[...]) # (L2, TB, 128)

    # ---- block 2 (dilation 4) ----
    h = act(dconv(h, 4, c20_w, c20_t))                       # (L2, TB, 128)
    h = act(avgpool(dconv(h, 4, c21_w, c21_b)) + c21_t[...]) # (L3, TB, 128)

    # ---- FC0: single (TB, L3*128) @ (L3*128, 256) matmul.
    #      fc0_w rows are ordered l*128 + c, matching the lane concat below
    #      and (via host re-order) torch's channel-major flatten(1).
    L3 = h.shape[0]
    hcat = jnp.concatenate([h[l] for l in range(L3)], axis=-1)   # (TB, L3*128) bf16
    z = jnp.dot(hcat, fc0_w[...], preferred_element_type=f32) + fc0_t[...]
    z = act(z)                                               # dropout: eval -> identity

    # ---- FC1 ----
    z = jnp.dot(z, fc1_w[...], preferred_element_type=f32) + fc1_t[...]
    z = act(z)                                               # dropout: eval -> identity

    # ---- GwayFC ----
    out = jnp.dot(z, out_w[...], preferred_element_type=f32) + out_b[...]
    o_ref[...] = out                                         # (TB, 2) f32


# ---------------------------------------------------------------------------
# Wrapper
# ---------------------------------------------------------------------------
def tcn_forward(x_ncl, params, tb=None):
    """x_ncl: (N, Cin, L) in PyTorch Conv1d layout. Returns (N, 2)."""
    N, Cin, L = x_ncl.shape
    if tb is None:
        # Fold as many batch rows per step as reasonable (multiple of 8,
        # capped so VMEM stays comfortable) to feed the MXU bigger M.
        tb = min(max(8, -(-N // 8) * 8), 128)
    assert tb % 8 == 0, "tb must be a multiple of 8 (sublane tile)"
    n_pad = -(-N // tb) * tb

    # NCW -> (L, N, Cin): batch on the sublane dim, channels on lanes.
    # bf16 on the host: identical matmul numerics, half the input DMA.
    x = jnp.transpose(x_ncl, (2, 0, 1)).astype(jnp.bfloat16)
    if n_pad != N:
        x = jnp.pad(x, ((0, 0), (0, n_pad - N), (0, 0)))

    def full_spec(a):
        nd = a.ndim
        return pl.BlockSpec(a.shape, lambda b, _nd=nd: (0,) * _nd)

    in_specs = [pl.BlockSpec((L, tb, Cin), lambda b: (0, b, 0))]
    in_specs += [full_spec(a) for a in params]

    out = pl.pallas_call(
        tcn_kernel,
        grid=(n_pad // tb,),
        in_specs=in_specs,
        out_specs=pl.BlockSpec((tb, 2), lambda b: (b, 0)),
        out_shape=jax.ShapeDtypeStruct((n_pad, 2), jnp.float32),
        compiler_params=pltpu.CompilerParams(dimension_semantics=("parallel",)),
    )(x, *params)
    return out[:N]


# ---------------------------------------------------------------------------
# Deterministic synthetic parameters (shapes from TCN_Network.__init__),
# converted/folded to the kernel's inference layouts on the host.
# ---------------------------------------------------------------------------
def init_params(key, history_signal, num_inputs, mm_dtype=jnp.bfloat16):
    keys = iter(jax.random.split(key, 64))

    def nrm(shape, scale=0.1):
        return (scale * jax.random.normal(next(keys), shape)).astype(jnp.float32)

    def conv_w(cin, cout):
        w = nrm((cout, cin, 3))                               # torch Conv1d layout
        b = nrm((cout,))
        # (Cout, Cin, 3) -> (3, Cin, Cout) -> (3*Cin, Cout): rows = tap*Cin + cin
        w_cat = jnp.transpose(w, (2, 1, 0)).reshape(3 * cin, cout)
        return w_cat, b

    def bn_sf(c):
        gamma = 1.0 + nrm((c,))
        beta = nrm((c,))
        mean = nrm((c,))
        var = jax.random.uniform(next(keys), (c,), minval=0.5, maxval=1.5).astype(jnp.float32)
        scale = gamma / jnp.sqrt(var + EPS)                   # eval-mode BN folded
        shift = beta - mean * scale
        return scale, shift

    def conv_bn(cin, cout):
        # conv -> BN -> ReLU : fold BN scale into W, (scale*bias + shift) into t.
        w, b = conv_w(cin, cout)
        s, t = bn_sf(cout)
        w_f = (w * s[None, :]).astype(mm_dtype)
        t_f = (t + s * b).reshape(1, cout)
        return w_f, t_f

    def conv_pool_bn(cin, cout):
        # conv -> pool -> BN -> ReLU : fold BN scale into W and bias (pre-pool),
        # BN shift applied after the pool (zero padding breaks bias commutation).
        w, b = conv_w(cin, cout)
        s, t = bn_sf(cout)
        w_f = (w * s[None, :]).astype(mm_dtype)
        b_f = (s * b).reshape(1, cout)
        t_f = t.reshape(1, cout)
        return w_f, b_f, t_f

    def linear(fin, fout):
        return nrm((fout, fin)), nrm((fout,))

    L3 = math.ceil(math.ceil(math.ceil(history_signal / 2) / 2) / 2)
    dim_fc = L3 * 128

    c00 = conv_bn(num_inputs, 32)
    c01 = conv_pool_bn(32, 64)
    c10 = conv_bn(64, 64)
    c11 = conv_pool_bn(64, 128)
    c20 = conv_bn(128, 128)
    c21 = conv_pool_bn(128, 128)

    # FC0: torch weight (256, dim_fc) with columns indexed c*L3 + l (flatten(1)).
    # Re-order to rows l*128 + c (kernel's position-major lane concat) and fold BN.
    fc0_wt, fc0_bt = linear(dim_fc, 256)
    s0, t0 = bn_sf(256)
    fc0_w = (jnp.transpose(fc0_wt.reshape(256, 128, L3), (2, 1, 0))
             .reshape(dim_fc, 256) * s0[None, :]).astype(mm_dtype)
    fc0_t = (t0 + s0 * fc0_bt).reshape(1, 256)

    fc1_wt, fc1_bt = linear(256, 64)
    s1, t1 = bn_sf(64)
    fc1_w = (fc1_wt.T * s1[None, :]).astype(mm_dtype)
    fc1_t = (t1 + s1 * fc1_bt).reshape(1, 64)

    out_wt, out_bt = linear(64, 2)
    out_w, out_b = out_wt.T.astype(mm_dtype), out_bt.reshape(1, 2)

    # NOTE: Dropout layers are identity in eval/inference mode (no params).
    return [
        *c00, *c01, *c10, *c11, *c20, *c21,
        fc0_w, fc0_t, fc1_w, fc1_t, out_w, out_b,
    ]


if __name__ == "__main__":
    history_signal = 32      # sequence length L
    num_inputs = 4           # input features
    batch = 2

    key = jax.random.PRNGKey(0)
    k_x, k_p = jax.random.split(key)

    x = jax.random.normal(k_x, (batch, num_inputs, history_signal), dtype=jnp.float32)
    params = init_params(k_p, history_signal, num_inputs)

    y = tcn_forward(x, params)
    y = jax.block_until_ready(y)
    assert y.shape == (batch, 2) and y.dtype == jnp.float32
    print("KERNEL_OK")
</pallas_src>

<mosaic_0001>
module attributes {stable_mosaic.version = 11 : i64} {
  func.func @tcn_kernel(%arg0: i32, %arg1: memref<32x8x4xbf16, #tpu.memory_space<vmem>>, %arg2: memref<12x32xbf16, #tpu.memory_space<vmem>>, %arg3: memref<1x32xf32, #tpu.memory_space<vmem>>, %arg4: memref<96x64xbf16, #tpu.memory_space<vmem>>, %arg5: memref<1x64xf32, #tpu.memory_space<vmem>>, %arg6: memref<1x64xf32, #tpu.memory_space<vmem>>, %arg7: memref<192x64xbf16, #tpu.memory_space<vmem>>, %arg8: memref<1x64xf32, #tpu.memory_space<vmem>>, %arg9: memref<192x128xbf16, #tpu.memory_space<vmem>>, %arg10: memref<1x128xf32, #tpu.memory_space<vmem>>, %arg11: memref<1x128xf32, #tpu.memory_space<vmem>>, %arg12: memref<384x128xbf16, #tpu.memory_space<vmem>>, %arg13: memref<1x128xf32, #tpu.memory_space<vmem>>, %arg14: memref<384x128xbf16, #tpu.memory_space<vmem>>, %arg15: memref<1x128xf32, #tpu.memory_space<vmem>>, %arg16: memref<1x128xf32, #tpu.memory_space<vmem>>, %arg17: memref<512x256xbf16, #tpu.memory_space<vmem>>, %arg18: memref<1x256xf32, #tpu.memory_space<vmem>>, %arg19: memref<256x64xbf16, #tpu.memory_space<vmem>>, %arg20: memref<1x64xf32, #tpu.memory_space<vmem>>, %arg21: memref<64x2xbf16, #tpu.memory_space<vmem>>, %arg22: memref<1x2xf32, #tpu.memory_space<vmem>>, %arg23: memref<8x2xf32, #tpu.memory_space<vmem>>) attributes {dimension_semantics = [#tpu.dimension_semantics<parallel>], iteration_bounds = array<i64: 1>, scalar_prefetch = 0 : i64, scratch_operands = 0 : i64, tpu.core_type = #tpu.core_type<tc>, window_params = [{transform_indices = @transform_0, window_bounds = array<i64: 32, 8, 4>}, {pipeline_mode = #tpu.pipeline_mode<synchronous>, transform_indices = @transform_1, window_bounds = array<i64: 12, 32>}, {pipeline_mode = #tpu.pipeline_mode<synchronous>, transform_indices = @transform_2, window_bounds = array<i64: 1, 32>}, {pipeline_mode = #tpu.pipeline_mode<synchronous>, transform_indices = @transform_3, window_bounds = array<i64: 96, 64>}, {pipeline_mode = #tpu.pipeline_mode<synchronous>, transform_indices = @transform_4, window_bounds = array<i64: 1, 64>}, {pipeline_mode = #tpu.pipeline_mode<synchronous>, transform_indices = @transform_5, window_bounds = array<i64: 1, 64>}, {pipeline_mode = #tpu.pipeline_mode<synchronous>, transform_indices = @transform_6, window_bounds = array<i64: 192, 64>}, {pipeline_mode = #tpu.pipeline_mode<synchronous>, transform_indices = @transform_7, window_bounds = array<i64: 1, 64>}, {pipeline_mode = #tpu.pipeline_mode<synchronous>, transform_indices = @transform_8, window_bounds = array<i64: 192, 128>}, {pipeline_mode = #tpu.pipeline_mode<synchronous>, transform_indices = @transform_9, window_bounds = array<i64: 1, 128>}, {pipeline_mode = #tpu.pipeline_mode<synchronous>, transform_indices = @transform_10, window_bounds = array<i64: 1, 128>}, {pipeline_mode = #tpu.pipeline_mode<synchronous>, transform_indices = @transform_11, window_bounds = array<i64: 384, 128>}, {pipeline_mode = #tpu.pipeline_mode<synchronous>, transform_indices = @transform_12, window_bounds = array<i64: 1, 128>}, {pipeline_mode = #tpu.pipeline_mode<synchronous>, transform_indices = @transform_13, window_bounds = array<i64: 384, 128>}, {pipeline_mode = #tpu.pipeline_mode<synchronous>, transform_indices = @transform_14, window_bounds = array<i64: 1, 128>}, {pipeline_mode = #tpu.pipeline_mode<synchronous>, transform_indices = @transform_15, window_bounds = array<i64: 1, 128>}, {pipeline_mode = #tpu.pipeline_mode<synchronous>, transform_indices = @transform_16, window_bounds = array<i64: 512, 256>}, {pipeline_mode = #tpu.pipeline_mode<synchronous>, transform_indices = @transform_17, window_bounds = array<i64: 1, 256>}, {pipeline_mode = #tpu.pipeline_mode<synchronous>, transform_indices = @transform_18, window_bounds = array<i64: 256, 64>}, {pipeline_mode = #tpu.pipeline_mode<synchronous>, transform_indices = @transform_19, window_bounds = array<i64: 1, 64>}, {pipeline_mode = #tpu.pipeline_mode<synchronous>, transform_indices = @transform_20, window_bounds = array<i64: 64, 2>}, {pipeline_mode = #tpu.pipeline_mode<synchronous>, transform_indices = @transform_21, window_bounds = array<i64: 1, 2>}, {transform_indices = @transform_22, window_bounds = array<i64: 8, 2>}]} {
    %c0 = arith.constant 0 : index
    %c0_0 = arith.constant 0 : index
    %c0_1 = arith.constant 0 : index
    %0 = vector.load %arg1[%c0, %c0_0, %c0_1] : memref<32x8x4xbf16, #tpu.memory_space<vmem>>, vector<32x8x4xbf16>
    %cst = arith.constant 0.000000e+00 : bf16
    %1 = vector.broadcast %cst : bf16 to vector<2x8x4xbf16>
    %2 = vector.extract_strided_slice %0 {offsets = [0, 0, 0], sizes = [30, 8, 4], strides = [1, 1, 1]} : vector<32x8x4xbf16> to vector<30x8x4xbf16>
    %3 = tpu.concatenate %1, %2 in 0 : vector<2x8x4xbf16>, vector<30x8x4xbf16> -> vector<32x8x4xbf16>
    %4 = vector.extract_strided_slice %0 {offsets = [2, 0, 0], sizes = [30, 8, 4], strides = [1, 1, 1]} : vector<32x8x4xbf16> to vector<30x8x4xbf16>
    %5 = tpu.concatenate %4, %1 in 0 : vector<30x8x4xbf16>, vector<2x8x4xbf16> -> vector<32x8x4xbf16>
    %6 = tpu.concatenate %3, %0, %5 in 2 : vector<32x8x4xbf16>, vector<32x8x4xbf16>, vector<32x8x4xbf16> -> vector<32x8x12xbf16>
    %7 = vector.shape_cast %6 : vector<32x8x12xbf16> to vector<256x12xbf16>
    %c0_2 = arith.constant 0 : index
    %c0_3 = arith.constant 0 : index
    %8 = vector.load %arg2[%c0_2, %c0_3] : memref<12x32xbf16, #tpu.memory_space<vmem>>, vector<12x32xbf16>
    %cst_4 = arith.constant dense<0.000000e+00> : vector<256x32xf32>
    %9 = tpu.matmul %7, %8, %cst_4 {dimension_numbers = #tpu.dot_dimension_numbers<[1], [0], [0], [1], [0, 0, 1, 1], [], []>} : vector<256x12xbf16>, vector<12x32xbf16>, vector<256x32xf32> -> vector<256x32xf32>
    %c0_5 = arith.constant 0 : index
    %c0_6 = arith.constant 0 : index
    %10 = vector.load %arg3[%c0_5, %c0_6] : memref<1x32xf32, #tpu.memory_space<vmem>>, vector<1x32xf32>
    %11 = vector.broadcast %10 : vector<1x32xf32> to vector<256x32xf32>
    %12 = arith.addf %9, %11 : vector<256x32xf32>
    %13 = vector.shape_cast %12 : vector<256x32xf32> to vector<32x8x32xf32>
    %cst_7 = arith.constant 0.000000e+00 : f32
    %14 = vector.broadcast %cst_7 : f32 to vector<32x8x32xf32>
    %15 = arith.maximumf %13, %14 : vector<32x8x32xf32>
    %16 = arith.truncf %15 : vector<32x8x32xf32> to vector<32x8x32xbf16>
    %cst_8 = arith.constant 0.000000e+00 : bf16
    %17 = vector.broadcast %cst_8 : bf16 to vector<2x8x32xbf16>
    %18 = vector.extract_strided_slice %16 {offsets = [0, 0, 0], sizes = [30, 8, 32], strides = [1, 1, 1]} : vector<32x8x32xbf16> to vector<30x8x32xbf16>
    %19 = tpu.concatenate %17, %18 in 0 : vector<2x8x32xbf16>, vector<30x8x32xbf16> -> vector<32x8x32xbf16>
    %20 = vector.extract_strided_slice %16 {offsets = [2, 0, 0], sizes = [30, 8, 32], strides = [1, 1, 1]} : vector<32x8x32xbf16> to vector<30x8x32xbf16>
    %21 = tpu.concatenate %20, %17 in 0 : vector<30x8x32xbf16>, vector<2x8x32xbf16> -> vector<32x8x32xbf16>
    %22 = tpu.concatenate %19, %16, %21 in 2 : vector<32x8x32xbf16>, vector<32x8x32xbf16>, vector<32x8x32xbf16> -> vector<32x8x96xbf16>
    %23 = vector.shape_cast %22 : vector<32x8x96xbf16> to vector<256x96xbf16>
    %c0_9 = arith.constant 0 : index
    %c0_10 = arith.constant 0 : index
    %24 = vector.load %arg4[%c0_9, %c0_10] : memref<96x64xbf16, #tpu.memory_space<vmem>>, vector<96x64xbf16>
    %cst_11 = arith.constant dense<0.000000e+00> : vector<256x64xf32>
    %25 = tpu.matmul %23, %24, %cst_11 {dimension_numbers = #tpu.dot_dimension_numbers<[1], [0], [0], [1], [0, 0, 1, 1], [], []>} : vector<256x96xbf16>, vector<96x64xbf16>, vector<256x64xf32> -> vector<256x64xf32>
    %c0_12 = arith.constant 0 : index
    %c0_13 = arith.constant 0 : index
    %26 = vector.load %arg5[%c0_12, %c0_13] : memref<1x64xf32, #tpu.memory_space<vmem>>, vector<1x64xf32>
    %27 = vector.broadcast %26 : vector<1x64xf32> to vector<256x64xf32>
    %28 = arith.addf %25, %27 : vector<256x64xf32>
    %29 = vector.shape_cast %28 : vector<256x64xf32> to vector<32x8x64xf32>
    %cst_14 = arith.constant 0.000000e+00 : f32
    %30 = vector.broadcast %cst_14 : f32 to vector<1x8x64xf32>
    %cst_15 = arith.constant 0.000000e+00 : f32
    %31 = vector.broadcast %cst_15 : f32 to vector<1x8x64xf32>
    %32 = tpu.concatenate %30, %29, %31 in 0 : vector<1x8x64xf32>, vector<32x8x64xf32>, vector<1x8x64xf32> -> vector<34x8x64xf32>
    %33 = vector.extract_strided_slice %32 {offsets = [0, 0, 0], sizes = [32, 8, 64], strides = [1, 1, 1]} : vector<34x8x64xf32> to vector<32x8x64xf32>
    %34 = vector.shape_cast %33 : vector<32x8x64xf32> to vector<16x2x8x64xf32>
    %35 = vector.extract_strided_slice %32 {offsets = [2, 0, 0], sizes = [32, 8, 64], strides = [1, 1, 1]} : vector<34x8x64xf32> to vector<32x8x64xf32>
    %36 = vector.shape_cast %35 : vector<32x8x64xf32> to vector<16x2x8x64xf32>
    %37 = vector.extract_strided_slice %34 {offsets = [0, 0, 0, 0], sizes = [16, 1, 8, 64], strides = [1, 1, 1, 1]} : vector<16x2x8x64xf32> to vector<16x1x8x64xf32>
    %38 = vector.shape_cast %37 : vector<16x1x8x64xf32> to vector<16x8x64xf32>
    %39 = vector.extract_strided_slice %34 {offsets = [0, 1, 0, 0], sizes = [16, 1, 8, 64], strides = [1, 1, 1, 1]} : vector<16x2x8x64xf32> to vector<16x1x8x64xf32>
    %40 = vector.shape_cast %39 : vector<16x1x8x64xf32> to vector<16x8x64xf32>
    %41 = arith.addf %38, %40 : vector<16x8x64xf32>
    %42 = vector.extract_strided_slice %36 {offsets = [0, 0, 0, 0], sizes = [16, 1, 8, 64], strides = [1, 1, 1, 1]} : vector<16x2x8x64xf32> to vector<16x1x8x64xf32>
    %43 = vector.shape_cast %42 : vector<16x1x8x64xf32> to vector<16x8x64xf32>
    %44 = arith.addf %41, %43 : vector<16x8x64xf32>
    %cst_16 = arith.constant 0.333333343 : f32
    %45 = vector.broadcast %cst_16 : f32 to vector<16x8x64xf32>
    %46 = arith.mulf %44, %45 : vector<16x8x64xf32>
    %c0_17 = arith.constant 0 : index
    %c0_18 = arith.constant 0 : index
    %47 = vector.load %arg6[%c0_17, %c0_18] : memref<1x64xf32, #tpu.memory_space<vmem>>, vector<1x64xf32>
    %48 = vector.shape_cast %47 : vector<1x64xf32> to vector<1x1x64xf32>
    %49 = vector.broadcast %48 : vector<1x1x64xf32> to vector<16x8x64xf32>
    %50 = arith.addf %46, %49 : vector<16x8x64xf32>
    %cst_19 = arith.constant 0.000000e+00 : f32
    %51 = vector.broadcast %cst_19 : f32 to vector<16x8x64xf32>
    %52 = arith.maximumf %50, %51 : vector<16x8x64xf32>
    %53 = arith.truncf %52 : vector<16x8x64xf32> to vector<16x8x64xbf16>
    %cst_20 = arith.constant 0.000000e+00 : bf16
    %54 = vector.broadcast %cst_20 : bf16 to vector<2x8x64xbf16>
    %55 = vector.extract_strided_slice %53 {offsets = [0, 0, 0], sizes = [14, 8, 64], strides = [1, 1, 1]} : vector<16x8x64xbf16> to vector<14x8x64xbf16>
    %56 = tpu.concatenate %54, %55 in 0 : vector<2x8x64xbf16>, vector<14x8x64xbf16> -> vector<16x8x64xbf16>
    %57 = vector.extract_strided_slice %53 {offsets = [2, 0, 0], sizes = [14, 8, 64], strides = [1, 1, 1]} : vector<16x8x64xbf16> to vector<14x8x64xbf16>
    %58 = tpu.concatenate %57, %54 in 0 : vector<14x8x64xbf16>, vector<2x8x64xbf16> -> vector<16x8x64xbf16>
    %59 = tpu.concatenate %56, %53, %58 in 2 : vector<16x8x64xbf16>, vector<16x8x64xbf16>, vector<16x8x64xbf16> -> vector<16x8x192xbf16>
    %60 = vector.shape_cast %59 : vector<16x8x192xbf16> to vector<128x192xbf16>
    %c0_21 = arith.constant 0 : index
    %c0_22 = arith.constant 0 : index
    %61 = vector.load %arg7[%c0_21, %c0_22] : memref<192x64xbf16, #tpu.memory_space<vmem>>, vector<192x64xbf16>
    %cst_23 = arith.constant dense<0.000000e+00> : vector<128x64xf32>
    %62 = tpu.matmul %60, %61, %cst_23 {dimension_numbers = #tpu.dot_dimension_numbers<[1], [0], [0], [1], [0, 0, 1, 1], [], []>} : vector<128x192xbf16>, vector<192x64xbf16>, vector<128x64xf32> -> vector<128x64xf32>
    %c0_24 = arith.constant 0 : index
    %c0_25 = arith.constant 0 : index
    %63 = vector.load %arg8[%c0_24, %c0_25] : memref<1x64xf32, #tpu.memory_space<vmem>>, vector<1x64xf32>
    %64 = vector.broadcast %63 : vector<1x64xf32> to vector<128x64xf32>
    %65 = arith.addf %62, %64 : vector<128x64xf32>
    %66 = vector.shape_cast %65 : vector<128x64xf32> to vector<16x8x64xf32>
    %cst_26 = arith.constant 0.000000e+00 : f32
    %67 = vector.broadcast %cst_26 : f32 to vector<16x8x64xf32>
    %68 = arith.maximumf %66, %67 : vector<16x8x64xf32>
    %69 = arith.truncf %68 : vector<16x8x64xf32> to vector<16x8x64xbf16>
    %cst_27 = arith.constant 0.000000e+00 : bf16
    %70 = vector.broadcast %cst_27 : bf16 to vector<2x8x64xbf16>
    %71 = vector.extract_strided_slice %69 {offsets = [0, 0, 0], sizes = [14, 8, 64], strides = [1, 1, 1]} : vector<16x8x64xbf16> to vector<14x8x64xbf16>
    %72 = tpu.concatenate %70, %71 in 0 : vector<2x8x64xbf16>, vector<14x8x64xbf16> -> vector<16x8x64xbf16>
    %73 = vector.extract_strided_slice %69 {offsets = [2, 0, 0], sizes = [14, 8, 64], strides = [1, 1, 1]} : vector<16x8x64xbf16> to vector<14x8x64xbf16>
    %74 = tpu.concatenate %73, %70 in 0 : vector<14x8x64xbf16>, vector<2x8x64xbf16> -> vector<16x8x64xbf16>
    %75 = tpu.concatenate %72, %69, %74 in 2 : vector<16x8x64xbf16>, vector<16x8x64xbf16>, vector<16x8x64xbf16> -> vector<16x8x192xbf16>
    %76 = vector.shape_cast %75 : vector<16x8x192xbf16> to vector<128x192xbf16>
    %c0_28 = arith.constant 0 : index
    %c0_29 = arith.constant 0 : index
    %77 = vector.load %arg9[%c0_28, %c0_29] : memref<192x128xbf16, #tpu.memory_space<vmem>>, vector<192x128xbf16>
    %cst_30 = arith.constant dense<0.000000e+00> : vector<128x128xf32>
    %78 = tpu.matmul %76, %77, %cst_30 {dimension_numbers = #tpu.dot_dimension_numbers<[1], [0], [0], [1], [0, 0, 1, 1], [], []>} : vector<128x192xbf16>, vector<192x128xbf16>, vector<128x128xf32> -> vector<128x128xf32>
    %c0_31 = arith.constant 0 : index
    %c0_32 = arith.constant 0 : index
    %79 = vector.load %arg10[%c0_31, %c0_32] : memref<1x128xf32, #tpu.memory_space<vmem>>, vector<1x128xf32>
    %80 = vector.broadcast %79 : vector<1x128xf32> to vector<128x128xf32>
    %81 = arith.addf %78, %80 : vector<128x128xf32>
    %82 = vector.shape_cast %81 : vector<128x128xf32> to vector<16x8x128xf32>
    %cst_33 = arith.constant 0.000000e+00 : f32
    %83 = vector.broadcast %cst_33 : f32 to vector<1x8x128xf32>
    %cst_34 = arith.constant 0.000000e+00 : f32
    %84 = vector.broadcast %cst_34 : f32 to vector<1x8x128xf32>
    %85 = tpu.concatenate %83, %82, %84 in 0 : vector<1x8x128xf32>, vector<16x8x128xf32>, vector<1x8x128xf32> -> vector<18x8x128xf32>
    %86 = vector.extract_strided_slice %85 {offsets = [0, 0, 0], sizes = [16, 8, 128], strides = [1, 1, 1]} : vector<18x8x128xf32> to vector<16x8x128xf32>
    %87 = vector.shape_cast %86 : vector<16x8x128xf32> to vector<8x2x8x128xf32>
    %88 = vector.extract_strided_slice %85 {offsets = [2, 0, 0], sizes = [16, 8, 128], strides = [1, 1, 1]} : vector<18x8x128xf32> to vector<16x8x128xf32>
    %89 = vector.shape_cast %88 : vector<16x8x128xf32> to vector<8x2x8x128xf32>
    %90 = vector.extract_strided_slice %87 {offsets = [0, 0, 0, 0], sizes = [8, 1, 8, 128], strides = [1, 1, 1, 1]} : vector<8x2x8x128xf32> to vector<8x1x8x128xf32>
    %91 = vector.shape_cast %90 : vector<8x1x8x128xf32> to vector<8x8x128xf32>
    %92 = vector.extract_strided_slice %87 {offsets = [0, 1, 0, 0], sizes = [8, 1, 8, 128], strides = [1, 1, 1, 1]} : vector<8x2x8x128xf32> to vector<8x1x8x128xf32>
    %93 = vector.shape_cast %92 : vector<8x1x8x128xf32> to vector<8x8x128xf32>
    %94 = arith.addf %91, %93 : vector<8x8x128xf32>
    %95 = vector.extract_strided_slice %89 {offsets = [0, 0, 0, 0], sizes = [8, 1, 8, 128], strides = [1, 1, 1, 1]} : vector<8x2x8x128xf32> to vector<8x1x8x128xf32>
    %96 = vector.shape_cast %95 : vector<8x1x8x128xf32> to vector<8x8x128xf32>
    %97 = arith.addf %94, %96 : vector<8x8x128xf32>
    %cst_35 = arith.constant 0.333333343 : f32
    %98 = vector.broadcast %cst_35 : f32 to vector<8x8x128xf32>
    %99 = arith.mulf %97, %98 : vector<8x8x128xf32>
    %c0_36 = arith.constant 0 : index
    %c0_37 = arith.constant 0 : index
    %100 = vector.load %arg11[%c0_36, %c0_37] : memref<1x128xf32, #tpu.memory_space<vmem>>, vector<1x128xf32>
    %101 = vector.shape_cast %100 : vector<1x128xf32> to vector<1x1x128xf32>
    %102 = vector.broadcast %101 : vector<1x1x128xf32> to vector<8x8x128xf32>
    %103 = arith.addf %99, %102 : vector<8x8x128xf32>
    %cst_38 = arith.constant 0.000000e+00 : f32
    %104 = vector.broadcast %cst_38 : f32 to vector<8x8x128xf32>
    %105 = arith.maximumf %103, %104 : vector<8x8x128xf32>
    %106 = arith.truncf %105 : vector<8x8x128xf32> to vector<8x8x128xbf16>
    %cst_39 = arith.constant 0.000000e+00 : bf16
    %107 = vector.broadcast %cst_39 : bf16 to vector<4x8x128xbf16>
    %108 = vector.extract_strided_slice %106 {offsets = [0, 0, 0], sizes = [4, 8, 128], strides = [1, 1, 1]} : vector<8x8x128xbf16> to vector<4x8x128xbf16>
    %109 = tpu.concatenate %107, %108 in 0 : vector<4x8x128xbf16>, vector<4x8x128xbf16> -> vector<8x8x128xbf16>
    %110 = vector.extract_strided_slice %106 {offsets = [4, 0, 0], sizes = [4, 8, 128], strides = [1, 1, 1]} : vector<8x8x128xbf16> to vector<4x8x128xbf16>
    %111 = tpu.concatenate %110, %107 in 0 : vector<4x8x128xbf16>, vector<4x8x128xbf16> -> vector<8x8x128xbf16>
    %112 = tpu.concatenate %109, %106, %111 in 2 : vector<8x8x128xbf16>, vector<8x8x128xbf16>, vector<8x8x128xbf16> -> vector<8x8x384xbf16>
    %113 = vector.shape_cast %112 : vector<8x8x384xbf16> to vector<64x384xbf16>
    %c0_40 = arith.constant 0 : index
    %c0_41 = arith.constant 0 : index
    %114 = vector.load %arg12[%c0_40, %c0_41] : memref<384x128xbf16, #tpu.memory_space<vmem>>, vector<384x128xbf16>
    %cst_42 = arith.constant dense<0.000000e+00> : vector<64x128xf32>
    %115 = tpu.matmul %113, %114, %cst_42 {dimension_numbers = #tpu.dot_dimension_numbers<[1], [0], [0], [1], [0, 0, 1, 1], [], []>} : vector<64x384xbf16>, vector<384x128xbf16>, vector<64x128xf32> -> vector<64x128xf32>
    %c0_43 = arith.constant 0 : index
    %c0_44 = arith.constant 0 : index
    %116 = vector.load %arg13[%c0_43, %c0_44] : memref<1x128xf32, #tpu.memory_space<vmem>>, vector<1x128xf32>
    %117 = vector.broadcast %116 : vector<1x128xf32> to vector<64x128xf32>
    %118 = arith.addf %115, %117 : vector<64x128xf32>
    %119 = vector.shape_cast %118 : vector<64x128xf32> to vector<8x8x128xf32>
    %cst_45 = arith.constant 0.000000e+00 : f32
    %120 = vector.broadcast %cst_45 : f32 to vector<8x8x128xf32>
    %121 = arith.maximumf %119, %120 : vector<8x8x128xf32>
    %122 = arith.truncf %121 : vector<8x8x128xf32> to vector<8x8x128xbf16>
    %cst_46 = arith.constant 0.000000e+00 : bf16
    %123 = vector.broadcast %cst_46 : bf16 to vector<4x8x128xbf16>
    %124 = vector.extract_strided_slice %122 {offsets = [0, 0, 0], sizes = [4, 8, 128], strides = [1, 1, 1]} : vector<8x8x128xbf16> to vector<4x8x128xbf16>
    %125 = tpu.concatenate %123, %124 in 0 : vector<4x8x128xbf16>, vector<4x8x128xbf16> -> vector<8x8x128xbf16>
    %126 = vector.extract_strided_slice %122 {offsets = [4, 0, 0], sizes = [4, 8, 128], strides = [1, 1, 1]} : vector<8x8x128xbf16> to vector<4x8x128xbf16>
    %127 = tpu.concatenate %126, %123 in 0 : vector<4x8x128xbf16>, vector<4x8x128xbf16> -> vector<8x8x128xbf16>
    %128 = tpu.concatenate %125, %122, %127 in 2 : vector<8x8x128xbf16>, vector<8x8x128xbf16>, vector<8x8x128xbf16> -> vector<8x8x384xbf16>
    %129 = vector.shape_cast %128 : vector<8x8x384xbf16> to vector<64x384xbf16>
    %c0_47 = arith.constant 0 : index
    %c0_48 = arith.constant 0 : index
    %130 = vector.load %arg14[%c0_47, %c0_48] : memref<384x128xbf16, #tpu.memory_space<vmem>>, vector<384x128xbf16>
    %cst_49 = arith.constant dense<0.000000e+00> : vector<64x128xf32>
    %131 = tpu.matmul %129, %130, %cst_49 {dimension_numbers = #tpu.dot_dimension_numbers<[1], [0], [0], [1], [0, 0, 1, 1], [], []>} : vector<64x384xbf16>, vector<384x128xbf16>, vector<64x128xf32> -> vector<64x128xf32>
    %c0_50 = arith.constant 0 : index
    %c0_51 = arith.constant 0 : index
    %132 = vector.load %arg15[%c0_50, %c0_51] : memref<1x128xf32, #tpu.memory_space<vmem>>, vector<1x128xf32>
    %133 = vector.broadcast %132 : vector<1x128xf32> to vector<64x128xf32>
    %134 = arith.addf %131, %133 : vector<64x128xf32>
    %135 = vector.shape_cast %134 : vector<64x128xf32> to vector<8x8x128xf32>
    %cst_52 = arith.constant 0.000000e+00 : f32
    %136 = vector.broadcast %cst_52 : f32 to vector<1x8x128xf32>
    %cst_53 = arith.constant 0.000000e+00 : f32
    %137 = vector.broadcast %cst_53 : f32 to vector<1x8x128xf32>
    %138 = tpu.concatenate %136, %135, %137 in 0 : vector<1x8x128xf32>, vector<8x8x128xf32>, vector<1x8x128xf32> -> vector<10x8x128xf32>
    %139 = vector.extract_strided_slice %138 {offsets = [0, 0, 0], sizes = [8, 8, 128], strides = [1, 1, 1]} : vector<10x8x128xf32> to vector<8x8x128xf32>
    %140 = vector.shape_cast %139 : vector<8x8x128xf32> to vector<4x2x8x128xf32>
    %141 = vector.extract_strided_slice %138 {offsets = [2, 0, 0], sizes = [8, 8, 128], strides = [1, 1, 1]} : vector<10x8x128xf32> to vector<8x8x128xf32>
    %142 = vector.shape_cast %141 : vector<8x8x128xf32> to vector<4x2x8x128xf32>
    %143 = vector.extract_strided_slice %140 {offsets = [0, 0, 0, 0], sizes = [4, 1, 8, 128], strides = [1, 1, 1, 1]} : vector<4x2x8x128xf32> to vector<4x1x8x128xf32>
    %144 = vector.shape_cast %143 : vector<4x1x8x128xf32> to vector<4x8x128xf32>
    %145 = vector.extract_strided_slice %140 {offsets = [0, 1, 0, 0], sizes = [4, 1, 8, 128], strides = [1, 1, 1, 1]} : vector<4x2x8x128xf32> to vector<4x1x8x128xf32>
    %146 = vector.shape_cast %145 : vector<4x1x8x128xf32> to vector<4x8x128xf32>
    %147 = arith.addf %144, %146 : vector<4x8x128xf32>
    %148 = vector.extract_strided_slice %142 {offsets = [0, 0, 0, 0], sizes = [4, 1, 8, 128], strides = [1, 1, 1, 1]} : vector<4x2x8x128xf32> to vector<4x1x8x128xf32>
    %149 = vector.shape_cast %148 : vector<4x1x8x128xf32> to vector<4x8x128xf32>
    %150 = arith.addf %147, %149 : vector<4x8x128xf32>
    %cst_54 = arith.constant 0.333333343 : f32
    %151 = vector.broadcast %cst_54 : f32 to vector<4x8x128xf32>
    %152 = arith.mulf %150, %151 : vector<4x8x128xf32>
    %c0_55 = arith.constant 0 : index
    %c0_56 = arith.constant 0 : index
    %153 = vector.load %arg16[%c0_55, %c0_56] : memref<1x128xf32, #tpu.memory_space<vmem>>, vector<1x128xf32>
    %154 = vector.shape_cast %153 : vector<1x128xf32> to vector<1x1x128xf32>
    %155 = vector.broadcast %154 : vector<1x1x128xf32> to vector<4x8x128xf32>
    %156 = arith.addf %152, %155 : vector<4x8x128xf32>
    %cst_57 = arith.constant 0.000000e+00 : f32
    %157 = vector.broadcast %cst_57 : f32 to vector<4x8x128xf32>
    %158 = arith.maximumf %156, %157 : vector<4x8x128xf32>
    %159 = arith.truncf %158 : vector<4x8x128xf32> to vector<4x8x128xbf16>
    %160 = vector.extract_strided_slice %159 {offsets = [0, 0, 0], sizes = [1, 8, 128], strides = [1, 1, 1]} : vector<4x8x128xbf16> to vector<1x8x128xbf16>
    %161 = vector.shape_cast %160 : vector<1x8x128xbf16> to vector<8x128xbf16>
    %162 = vector.extract_strided_slice %159 {offsets = [1, 0, 0], sizes = [1, 8, 128], strides = [1, 1, 1]} : vector<4x8x128xbf16> to vector<1x8x128xbf16>
    %163 = vector.shape_cast %162 : vector<1x8x128xbf16> to vector<8x128xbf16>
    %164 = vector.extract_strided_slice %159 {offsets = [2, 0, 0], sizes = [1, 8, 128], strides = [1, 1, 1]} : vector<4x8x128xbf16> to vector<1x8x128xbf16>
    %165 = vector.shape_cast %164 : vector<1x8x128xbf16> to vector<8x128xbf16>
    %166 = vector.extract_strided_slice %159 {offsets = [3, 0, 0], sizes = [1, 8, 128], strides = [1, 1, 1]} : vector<4x8x128xbf16> to vector<1x8x128xbf16>
    %167 = vector.shape_cast %166 : vector<1x8x128xbf16> to vector<8x128xbf16>
    %168 = tpu.concatenate %161, %163, %165, %167 in 1 : vector<8x128xbf16>, vector<8x128xbf16>, vector<8x128xbf16>, vector<8x128xbf16> -> vector<8x512xbf16>
    %c0_58 = arith.constant 0 : index
    %c0_59 = arith.constant 0 : index
    %169 = vector.load %arg17[%c0_58, %c0_59] : memref<512x256xbf16, #tpu.memory_space<vmem>>, vector<512x256xbf16>
    %cst_60 = arith.constant dense<0.000000e+00> : vector<8x256xf32>
    %170 = tpu.matmul %168, %169, %cst_60 {dimension_numbers = #tpu.dot_dimension_numbers<[1], [0], [0], [1], [0, 0, 1, 1], [], []>} : vector<8x512xbf16>, vector<512x256xbf16>, vector<8x256xf32> -> vector<8x256xf32>
    %c0_61 = arith.constant 0 : index
    %c0_62 = arith.constant 0 : index
    %171 = vector.load %arg18[%c0_61, %c0_62] : memref<1x256xf32, #tpu.memory_space<vmem>>, vector<1x256xf32>
    %172 = vector.broadcast %171 : vector<1x256xf32> to vector<8x256xf32>
    %173 = arith.addf %170, %172 : vector<8x256xf32>
    %cst_63 = arith.constant 0.000000e+00 : f32
    %174 = vector.broadcast %cst_63 : f32 to vector<8x256xf32>
    %175 = arith.maximumf %173, %174 : vector<8x256xf32>
    %176 = arith.truncf %175 : vector<8x256xf32> to vector<8x256xbf16>
    %c0_64 = arith.constant 0 : index
    %c0_65 = arith.constant 0 : index
    %177 = vector.load %arg19[%c0_64, %c0_65] : memref<256x64xbf16, #tpu.memory_space<vmem>>, vector<256x64xbf16>
    %cst_66 = arith.constant dense<0.000000e+00> : vector<8x64xf32>
    %178 = tpu.matmul %176, %177, %cst_66 {dimension_numbers = #tpu.dot_dimension_numbers<[1], [0], [0], [1], [0, 0, 1, 1], [], []>} : vector<8x256xbf16>, vector<256x64xbf16>, vector<8x64xf32> -> vector<8x64xf32>
    %c0_67 = arith.constant 0 : index
    %c0_68 = arith.constant 0 : index
    %179 = vector.load %arg20[%c0_67, %c0_68] : memref<1x64xf32, #tpu.memory_space<vmem>>, vector<1x64xf32>
    %180 = vector.broadcast %179 : vector<1x64xf32> to vector<8x64xf32>
    %181 = arith.addf %178, %180 : vector<8x64xf32>
    %cst_69 = arith.constant 0.000000e+00 : f32
    %182 = vector.broadcast %cst_69 : f32 to vector<8x64xf32>
    %183 = arith.maximumf %181, %182 : vector<8x64xf32>
    %184 = arith.truncf %183 : vector<8x64xf32> to vector<8x64xbf16>
    %c0_70 = arith.constant 0 : index
    %c0_71 = arith.constant 0 : index
    %185 = vector.load %arg21[%c0_70, %c0_71] : memref<64x2xbf16, #tpu.memory_space<vmem>>, vector<64x2xbf16>
    %cst_72 = arith.constant dense<0.000000e+00> : vector<8x2xf32>
    %186 = tpu.matmul %184, %185, %cst_72 {dimension_numbers = #tpu.dot_dimension_numbers<[1], [0], [0], [1], [0, 0, 1, 1], [], []>} : vector<8x64xbf16>, vector<64x2xbf16>, vector<8x2xf32> -> vector<8x2xf32>
    %c0_73 = arith.constant 0 : index
    %c0_74 = arith.constant 0 : index
    %187 = vector.load %arg22[%c0_73, %c0_74] : memref<1x2xf32, #tpu.memory_space<vmem>>, vector<1x2xf32>
    %188 = vector.broadcast %187 : vector<1x2xf32> to vector<8x2xf32>
    %189 = arith.addf %186, %188 : vector<8x2xf32>
    %c0_75 = arith.constant 0 : index
    %c0_76 = arith.constant 0 : index
    %190 = vector.load %arg23[%c0_75, %c0_76] : memref<8x2xf32, #tpu.memory_space<vmem>>, vector<8x2xf32>
    tpu.vector_store %arg23[%c0_75, %c0_76], %189 {strides = array<i32>} : memref<8x2xf32, #tpu.memory_space<vmem>>, vector<8x2xf32>,
    return
  }
  func.func @transform_0(%arg0: i32) -> (i32, i32, i32) {
    %c0_i32 = arith.constant 0 : i32
    %c0_i32_0 = arith.constant 0 : i32
    %c0_i32_1 = arith.constant 0 : i32
    return %c0_i32, %arg0, %c0_i32_0 : i32, i32, i32
  }
  func.func @transform_1(%arg0: i32) -> (i32, i32) {
    %c0_i32 = arith.constant 0 : i32
    %c0_i32_0 = arith.constant 0 : i32
    %c0_i32_1 = arith.constant 0 : i32
    return %c0_i32, %c0_i32_0 : i32, i32
  }
  func.func @transform_2(%arg0: i32) -> (i32, i32) {
    %c0_i32 = arith.constant 0 : i32
    %c0_i32_0 = arith.constant 0 : i32
    %c0_i32_1 = arith.constant 0 : i32
    return %c0_i32, %c0_i32_0 : i32, i32
  }
  func.func @transform_3(%arg0: i32) -> (i32, i32) {
    %c0_i32 = arith.constant 0 : i32
    %c0_i32_0 = arith.constant 0 : i32
    %c0_i32_1 = arith.constant 0 : i32
    return %c0_i32, %c0_i32_0 : i32, i32
  }
  func.func @transform_4(%arg0: i32) -> (i32, i32) {
    %c0_i32 = arith.constant 0 : i32
    %c0_i32_0 = arith.constant 0 : i32
    %c0_i32_1 = arith.constant 0 : i32
    return %c0_i32, %c0_i32_0 : i32, i32
  }
  func.func @transform_5(%arg0: i32) -> (i32, i32) {
    %c0_i32 = arith.constant 0 : i32
    %c0_i32_0 = arith.constant 0 : i32
    %c0_i32_1 = arith.constant 0 : i32
    return %c0_i32, %c0_i32_0 : i32, i32
  }
  func.func @transform_6(%arg0: i32) -> (i32, i32) {
    %c0_i32 = arith.constant 0 : i32
    %c0_i32_0 = arith.constant 0 : i32
    %c0_i32_1 = arith.constant 0 : i32
    return %c0_i32, %c0_i32_0 : i32, i32
  }
  func.func @transform_7(%arg0: i32) -> (i32, i32) {
    %c0_i32 = arith.constant 0 : i32
    %c0_i32_0 = arith.constant 0 : i32
    %c0_i32_1 = arith.constant 0 : i32
    return %c0_i32, %c0_i32_0 : i32, i32
  }
  func.func @transform_8(%arg0: i32) -> (i32, i32) {
    %c0_i32 = arith.constant 0 : i32
    %c0_i32_0 = arith.constant 0 : i32
    %c0_i32_1 = arith.constant 0 : i32
    return %c0_i32, %c0_i32_0 : i32, i32
  }
  func.func @transform_9(%arg0: i32) -> (i32, i32) {
    %c0_i32 = arith.constant 0 : i32
    %c0_i32_0 = arith.constant 0 : i32
    %c0_i32_1 = arith.constant 0 : i32
    return %c0_i32, %c0_i32_0 : i32, i32
  }
  func.func @transform_10(%arg0: i32) -> (i32, i32) {
    %c0_i32 = arith.constant 0 : i32
    %c0_i32_0 = arith.constant 0 : i32
    %c0_i32_1 = arith.constant 0 : i32
    return %c0_i32, %c0_i32_0 : i32, i32
  }
  func.func @transform_11(%arg0: i32) -> (i32, i32) {
    %c0_i32 = arith.constant 0 : i32
    %c0_i32_0 = arith.constant 0 : i32
    %c0_i32_1 = arith.constant 0 : i32
    return %c0_i32, %c0_i32_0 : i32, i32
  }
  func.func @transform_12(%arg0: i32) -> (i32, i32) {
    %c0_i32 = arith.constant 0 : i32
    %c0_i32_0 = arith.constant 0 : i32
    %c0_i32_1 = arith.constant 0 : i32
    return %c0_i32, %c0_i32_0 : i32, i32
  }
  func.func @transform_13(%arg0: i32) -> (i32, i32) {
    %c0_i32 = arith.constant 0 : i32
    %c0_i32_0 = arith.constant 0 : i32
    %c0_i32_1 = arith.constant 0 : i32
    return %c0_i32, %c0_i32_0 : i32, i32
  }
  func.func @transform_14(%arg0: i32) -> (i32, i32) {
    %c0_i32 = arith.constant 0 : i32
    %c0_i32_0 = arith.constant 0 : i32
    %c0_i32_1 = arith.constant 0 : i32
    return %c0_i32, %c0_i32_0 : i32, i32
  }
  func.func @transform_15(%arg0: i32) -> (i32, i32) {
    %c0_i32 = arith.constant 0 : i32
    %c0_i32_0 = arith.constant 0 : i32
    %c0_i32_1 = arith.constant 0 : i32
    return %c0_i32, %c0_i32_0 : i32, i32
  }
  func.func @transform_16(%arg0: i32) -> (i32, i32) {
    %c0_i32 = arith.constant 0 : i32
    %c0_i32_0 = arith.constant 0 : i32
    %c0_i32_1 = arith.constant 0 : i32
    return %c0_i32, %c0_i32_0 : i32, i32
  }
  func.func @transform_17(%arg0: i32) -> (i32, i32) {
    %c0_i32 = arith.constant 0 : i32
    %c0_i32_0 = arith.constant 0 : i32
    %c0_i32_1 = arith.constant 0 : i32
    return %c0_i32, %c0_i32_0 : i32, i32
  }
  func.func @transform_18(%arg0: i32) -> (i32, i32) {
    %c0_i32 = arith.constant 0 : i32
    %c0_i32_0 = arith.constant 0 : i32
    %c0_i32_1 = arith.constant 0 : i32
    return %c0_i32, %c0_i32_0 : i32, i32
  }
  func.func @transform_19(%arg0: i32) -> (i32, i32) {
    %c0_i32 = arith.constant 0 : i32
    %c0_i32_0 = arith.constant 0 : i32
    %c0_i32_1 = arith.constant 0 : i32
    return %c0_i32, %c0_i32_0 : i32, i32
  }
  func.func @transform_20(%arg0: i32) -> (i32, i32) {
    %c0_i32 = arith.constant 0 : i32
    %c0_i32_0 = arith.constant 0 : i32
    %c0_i32_1 = arith.constant 0 : i32
    return %c0_i32, %c0_i32_0 : i32, i32
  }
  func.func @transform_21(%arg0: i32) -> (i32, i32) {
    %c0_i32 = arith.constant 0 : i32
    %c0_i32_0 = arith.constant 0 : i32
    %c0_i32_1 = arith.constant 0 : i32
    return %c0_i32, %c0_i32_0 : i32, i32
  }
  func.func @transform_22(%arg0: i32) -> (i32, i32) {
    %c0_i32 = arith.constant 0 : i32
    %c0_i32_0 = arith.constant 0 : i32
    return %arg0, %c0_i32 : i32, i32
  }
}

</mosaic_0001>

<llo_original>
// kernel: tpu_custom_call.1
$region0: #{tpu_custom_call.1}
  #allocation0 [shape = 'u32[]', space=smem, size = 0x4, offset = 0x4, fixed_abs, tag = 'smem constant byte address 0x4 - core index']
  #allocation1 [shape = 'u32[72,128]{1,0:T(1,128)}', space=vmem, size = 0x9000, scoped, tag = 'internal scratch']
  %s0 = inlined_call_operand.vmem [shape: bf16[32,8,4], index: 0, kind: input, shape index: {}]
  %s1 = inlined_call_operand.vmem [shape: bf16[12,32], index: 1, kind: input, shape index: {}]
  %s2 = inlined_call_operand.vmem [shape: f32[1,32], index: 2, kind: input, shape index: {}]
  %s3 = inlined_call_operand.vmem [shape: bf16[96,64], index: 3, kind: input, shape index: {}]
  %s4 = inlined_call_operand.vmem [shape: f32[1,64], index: 4, kind: input, shape index: {}]
  %s5 = inlined_call_operand.vmem [shape: f32[1,64], index: 5, kind: input, shape index: {}]
  %s6 = inlined_call_operand.vmem [shape: bf16[192,64], index: 6, kind: input, shape index: {}]
  %s7 = inlined_call_operand.vmem [shape: f32[1,64], index: 7, kind: input, shape index: {}]
  %s8 = inlined_call_operand.hbm [shape: bf16[192,128], index: 8, kind: input, shape index: {}]
  %s9 = inlined_call_operand.vmem [shape: f32[1,128], index: 9, kind: input, shape index: {}]
  %s10 = inlined_call_operand.vmem [shape: f32[1,128], index: 10, kind: input, shape index: {}]
  %s11 = inlined_call_operand.vmem [shape: bf16[384,128], index: 11, kind: input, shape index: {}]
  %s12 = inlined_call_operand.vmem [shape: f32[1,128], index: 12, kind: input, shape index: {}]
  %s13 = inlined_call_operand.vmem [shape: bf16[384,128], index: 13, kind: input, shape index: {}]
  %s14 = inlined_call_operand.vmem [shape: f32[1,128], index: 14, kind: input, shape index: {}]
  %s15 = inlined_call_operand.vmem [shape: f32[1,128], index: 15, kind: input, shape index: {}]
  %s16 = inlined_call_operand.hbm [shape: bf16[512,256], index: 16, kind: input, shape index: {}]
  %s17 = inlined_call_operand.vmem [shape: f32[1,256], index: 17, kind: input, shape index: {}]
  %s18 = inlined_call_operand.vmem [shape: bf16[256,64], index: 18, kind: input, shape index: {}]
  %s19 = inlined_call_operand.vmem [shape: f32[1,64], index: 19, kind: input, shape index: {}]
  %s20 = inlined_call_operand.vmem [shape: bf16[64,2], index: 20, kind: input, shape index: {}]
  %s21 = inlined_call_operand.vmem [shape: f32[1,2], index: 21, kind: input, shape index: {}]
  %s22 = inlined_call_operand.vmem [shape: f32[8,2], index: 22, kind: output, shape index: {}]
  %s23 = sld [smem:[#allocation0]]
  $region106: #{tpu_custom_call.1} parent=0
    _
  %s25 = ssub.s32 1, %s23
  %s26 = scalar_select 0, %s25, %s23
  $region1: #{tpu_custom_call.1} parent=0
    #allocation2 [shape = 'u8[49152]{0}', space=vmem, size = 0xc000, scoped, tag = 'input window, operand 8, single buffered']
    #allocation3 [shape = 's32[1]{0}', space=sflag, size = 0x4, scoped, tag = 'scoped memory for tpu_custom_call.1']
    #allocation4 [shape = 'u8[262144]{0}', space=vmem, size = 0x40000, scoped, tag = 'input window, operand 16, single buffered']
    #allocation5 [shape = 's32[1]{0}', space=sflag, size = 0x4, scoped, tag = 'scoped memory for tpu_custom_call.1']
    %27 = vsyncpa [#allocation3], 0
    %28 = vsyncpa [#allocation5], 0
    // Predicated region
    $region2: #{tpu_custom_call.1} parent=1 // pred_check
      _
    $region3: #{tpu_custom_call.1} parent=1 // pred_check_branch
      %30 = sbr.rel (0) target = $region5
    $region4: #{tpu_custom_call.1} parent=1 // pred_region
      _
    $region5: #{tpu_custom_call.1} parent=1 // pred_fallthru
      _
    // Predicated region
    $region6: #{tpu_custom_call.1} parent=1 // pred_check
      _
    $region7: #{tpu_custom_call.1} parent=1 // pred_check_branch
      %32 = sbr.rel (0) target = $region9
    $region8: #{tpu_custom_call.1} parent=1 // pred_region
      _
    $region9: #{tpu_custom_call.1} parent=1 // pred_fallthru
      _
    // Predicated region
    $region10: #{tpu_custom_call.1} parent=1 // pred_check
      _
    $region11: #{tpu_custom_call.1} parent=1 // pred_check_branch
      %34 = sbr.rel (0) target = $region13
    $region12: #{tpu_custom_call.1} parent=1 // pred_region
      _
    $region13: #{tpu_custom_call.1} parent=1 // pred_fallthru
      _
    // Predicated region
    $region14: #{tpu_custom_call.1} parent=1 // pred_check
      _
    $region15: #{tpu_custom_call.1} parent=1 // pred_check_branch
      %36 = sbr.rel (0) target = $region17
    $region16: #{tpu_custom_call.1} parent=1 // pred_region
      _
    $region17: #{tpu_custom_call.1} parent=1 // pred_fallthru
      _
    // Predicated region
    $region18: #{tpu_custom_call.1} parent=1 // pred_check
      _
    $region19: #{tpu_custom_call.1} parent=1 // pred_check_branch
      %38 = sbr.rel (0) target = $region21
    $region20: #{tpu_custom_call.1} parent=1 // pred_region
      _
    $region21: #{tpu_custom_call.1} parent=1 // pred_fallthru
      _
    // Predicated region
    $region22: #{tpu_custom_call.1} parent=1 // pred_check
      _
    $region23: #{tpu_custom_call.1} parent=1 // pred_check_branch
      %40 = sbr.rel (0) target = $region25
    $region24: #{tpu_custom_call.1} parent=1 // pred_region
      _
    $region25: #{tpu_custom_call.1} parent=1 // pred_fallthru
      _
    // Predicated region
    $region26: #{tpu_custom_call.1} parent=1 // pred_check
      _
    $region27: #{tpu_custom_call.1} parent=1 // pred_check_branch
      %42 = sbr.rel (0) target = $region29
    $region28: #{tpu_custom_call.1} parent=1 // pred_region
      _
    $region29: #{tpu_custom_call.1} parent=1 // pred_fallthru
      _
    // Predicated region
    $region30: #{tpu_custom_call.1} parent=1 // pred_check
      _
    $region31: #{tpu_custom_call.1} parent=1 // pred_check_branch
      %44 = sbr.rel (0) target = $region33
    $region32: #{tpu_custom_call.1} parent=1 // pred_region
      _
    $region33: #{tpu_custom_call.1} parent=1 // pred_fallthru
      _
    // Predicated region
    $region34: #{tpu_custom_call.1} parent=1 // pred_check
      _
    $region35: #{tpu_custom_call.1} parent=1 // pred_check_branch
      %46 = sbr.rel (0) target = $region37
    $region36: #{tpu_custom_call.1} parent=1 // pred_region
      %48 = vsyncadd [#allocation3], 0
      %s49 = sshll.u32 %s8, 4
      %s50 = int_to_ptr.hbm [resolvable:$true] %s49
      %s51 = sshll.u32 [#allocation2], 4
      %s52 = int_to_ptr.vmem [resolvable:$true] %s51
      %57 = dma.hbm_to_vmem [thread:$0]  %s50, 1536, %s52, [#allocation3], 64, 64, 4
    $region37: #{tpu_custom_call.1} parent=1 // pred_fallthru
      _
    // Predicated region
    $region38: #{tpu_custom_call.1} parent=1 // pred_check
      _
    $region39: #{tpu_custom_call.1} parent=1 // pred_check_branch
      %59 = sbr.rel (0) target = $region41
    $region40: #{tpu_custom_call.1} parent=1 // pred_region
      _
    $region41: #{tpu_custom_call.1} parent=1 // pred_fallthru
      _
    // Predicated region
    $region42: #{tpu_custom_call.1} parent=1 // pred_check
      _
    $region43: #{tpu_custom_call.1} parent=1 // pred_check_branch
      %61 = sbr.rel (0) target = $region45
    $region44: #{tpu_custom_call.1} parent=1 // pred_region
      _
    $region45: #{tpu_custom_call.1} parent=1 // pred_fallthru
      _
    // Predicated region
    $region46: #{tpu_custom_call.1} parent=1 // pred_check
      _
    $region47: #{tpu_custom_call.1} parent=1 // pred_check_branch
      %63 = sbr.rel (0) target = $region49
    $region48: #{tpu_custom_call.1} parent=1 // pred_region
      _
    $region49: #{tpu_custom_call.1} parent=1 // pred_fallthru
      _
    // Predicated region
    $region50: #{tpu_custom_call.1} parent=1 // pred_check
      _
    $region51: #{tpu_custom_call.1} parent=1 // pred_check_branch
      %65 = sbr.rel (0) target = $region53
    $region52: #{tpu_custom_call.1} parent=1 // pred_region
      _
    $region53: #{tpu_custom_call.1} parent=1 // pred_fallthru
      _
    // Predicated region
    $region54: #{tpu_custom_call.1} parent=1 // pred_check
      _
    $region55: #{tpu_custom_call.1} parent=1 // pred_check_branch
      %67 = sbr.rel (0) target = $region57
    $region56: #{tpu_custom_call.1} parent=1 // pred_region
      _
    $region57: #{tpu_custom_call.1} parent=1 // pred_fallthru
      _
    // Predicated region
    $region58: #{tpu_custom_call.1} parent=1 // pred_check
      _
    $region59: #{tpu_custom_call.1} parent=1 // pred_check_branch
      %69 = sbr.rel (0) target = $region61
    $region60: #{tpu_custom_call.1} parent=1 // pred_region
      _
    $region61: #{tpu_custom_call.1} parent=1 // pred_fallthru
      _
    // Predicated region
    $region62: #{tpu_custom_call.1} parent=1 // pred_check
      _
    $region63: #{tpu_custom_call.1} parent=1 // pred_check_branch
      %71 = sbr.rel (0) target = $region65
    $region64: #{tpu_custom_call.1} parent=1 // pred_region
      _
    $region65: #{tpu_custom_call.1} parent=1 // pred_fallthru
      _
    // Predicated region
    $region66: #{tpu_custom_call.1} parent=1 // pred_check
      _
    $region67: #{tpu_custom_call.1} parent=1 // pred_check_branch
      %73 = sbr.rel (0) target = $region69
    $region68: #{tpu_custom_call.1} parent=1 // pred_region
      %75 = vsyncadd [#allocation5], 0
      %s76 = sshll.u32 %s16, 4
      %s77 = int_to_ptr.hbm [resolvable:$true] %s76
      %s78 = sshll.u32 [#allocation4], 4
      %s79 = int_to_ptr.vmem [resolvable:$true] %s78
      %84 = dma.hbm_to_vmem [thread:$0]  %s77, 8192, %s79, [#allocation5], 128, 128, 8
    $region69: #{tpu_custom_call.1} parent=1 // pred_fallthru
      _
    // Predicated region
    $region70: #{tpu_custom_call.1} parent=1 // pred_check
      _
    $region71: #{tpu_custom_call.1} parent=1 // pred_check_branch
      %86 = sbr.rel (0) target = $region73
    $region72: #{tpu_custom_call.1} parent=1 // pred_region
      _
    $region73: #{tpu_custom_call.1} parent=1 // pred_fallthru
      _
    // Predicated region
    $region74: #{tpu_custom_call.1} parent=1 // pred_check
      _
    $region75: #{tpu_custom_call.1} parent=1 // pred_check_branch
      %88 = sbr.rel (0) target = $region77
    $region76: #{tpu_custom_call.1} parent=1 // pred_region
      _
    $region77: #{tpu_custom_call.1} parent=1 // pred_fallthru
      _
    // Predicated region
    $region78: #{tpu_custom_call.1} parent=1 // pred_check
      _
    $region79: #{tpu_custom_call.1} parent=1 // pred_check_branch
      %90 = sbr.rel (0) target = $region81
    $region80: #{tpu_custom_call.1} parent=1 // pred_region
      _
    $region81: #{tpu_custom_call.1} parent=1 // pred_fallthru
      _
    // Predicated region
    $region82: #{tpu_custom_call.1} parent=1 // pred_check
      _
    $region83: #{tpu_custom_call.1} parent=1 // pred_check_branch
      %92 = sbr.rel (0) target = $region85
    $region84: #{tpu_custom_call.1} parent=1 // pred_region
      _
    $region85: #{tpu_custom_call.1} parent=1 // pred_fallthru
      _
    // Predicated region
    $region86: #{tpu_custom_call.1} parent=1 // pred_check
      _
    $region87: #{tpu_custom_call.1} parent=1 // pred_check_branch
      %94 = sbr.rel (0) target = $region89
    $region88: #{tpu_custom_call.1} parent=1 // pred_region
      _
    $region89: #{tpu_custom_call.1} parent=1 // pred_fallthru
      _
    // Predicated region
    $region90: #{tpu_custom_call.1} parent=1 // pred_check
      _
    $region91: #{tpu_custom_call.1} parent=1 // pred_check_branch
      %96 = sbr.rel (0) target = $region93
    $region92: #{tpu_custom_call.1} parent=1 // pred_region
      %98 = dma.done [#allocation3], 1536
    $region93: #{tpu_custom_call.1} parent=1 // pred_fallthru
      _
    // Predicated region
    $region94: #{tpu_custom_call.1} parent=1 // pred_check
      _
    $region95: #{tpu_custom_call.1} parent=1 // pred_check_branch
      %100 = sbr.rel (0) target = $region97
    $region96: #{tpu_custom_call.1} parent=1 // pred_region
      %102 = dma.done [#allocation5], 8192
    $region97: #{tpu_custom_call.1} parent=1 // pred_fallthru
      _
    %v104 = vld [vmem:[%s0] sm:$0xf]
    %v105 = vld [vmem:[%s0 + $0x4] sm:$0xf]
    %v106 = vld [vmem:[%s0 + $0x8] sm:$0xf]
    %v107 = vld [vmem:[%s0 + $0xc] sm:$0xf]
    %v108 = vld [vmem:[%s0 + $0x10] sm:$0xf]
    %v109 = vld [vmem:[%s0 + $0x14] sm:$0xf]
    %v110 = vld [vmem:[%s0 + $0x18] sm:$0xf]
    %v111 = vld [vmem:[%s0 + $0x1c] sm:$0xf]
    %v112 = vld [vmem:[%s0 + $0x20] sm:$0xf]
    %v113 = vld [vmem:[%s0 + $0x24] sm:$0xf]
    %v114 = vld [vmem:[%s0 + $0x28] sm:$0xf]
    %v115 = vld [vmem:[%s0 + $0x2c] sm:$0xf]
    %v116 = vld [vmem:[%s0 + $0x30] sm:$0xf]
    %v117 = vld [vmem:[%s0 + $0x34] sm:$0xf]
    %v118 = vld [vmem:[%s0 + $0x38] sm:$0xf]
    %v119 = vld [vmem:[%s0 + $0x3c] sm:$0xf]
    %v120 = vld [vmem:[%s0 + $0x40] sm:$0xf]
    %v121 = vld [vmem:[%s0 + $0x44] sm:$0xf]
    %v122 = vld [vmem:[%s0 + $0x48] sm:$0xf]
    %v123 = vld [vmem:[%s0 + $0x4c] sm:$0xf]
    %v124 = vld [vmem:[%s0 + $0x50] sm:$0xf]
    %v125 = vld [vmem:[%s0 + $0x54] sm:$0xf]
    %v126 = vld [vmem:[%s0 + $0x58] sm:$0xf]
    %v127 = vld [vmem:[%s0 + $0x5c] sm:$0xf]
    %v128 = vld [vmem:[%s0 + $0x60] sm:$0xf]
    %v129 = vld [vmem:[%s0 + $0x64] sm:$0xf]
    %v130 = vld [vmem:[%s0 + $0x68] sm:$0xf]
    %v131 = vld [vmem:[%s0 + $0x6c] sm:$0xf]
    %v132 = vld [vmem:[%s0 + $0x70] sm:$0xf]
    %v133 = vld [vmem:[%s0 + $0x74] sm:$0xf]
    %v134 = vld [vmem:[%s0 + $0x78] sm:$0xf]
    %v135 = vld [vmem:[%s0 + $0x7c] sm:$0xf]
    %v168 = vunpack.c.l.b16 %v104
    %v169 = vunpack.c.l.b16 %v105
    %v170 = vunpack.c.l.b16 %v106
    %v171 = vunpack.c.l.b16 %v107
    %v172 = vunpack.c.l.b16 %v108
    %v173 = vunpack.c.l.b16 %v109
    %v174 = vunpack.c.l.b16 %v110
    %v175 = vunpack.c.l.b16 %v111
    %v176 = vunpack.c.l.b16 %v112
    %v177 = vunpack.c.l.b16 %v113
    %v178 = vunpack.c.l.b16 %v114
    %v179 = vunpack.c.l.b16 %v115
    %v180 = vunpack.c.l.b16 %v116
    %v181 = vunpack.c.l.b16 %v117
    %v182 = vunpack.c.l.b16 %v118
    %v183 = vunpack.c.l.b16 %v119
    %v184 = vunpack.c.l.b16 %v120
    %v185 = vunpack.c.l.b16 %v121
    %v186 = vunpack.c.l.b16 %v122
    %v187 = vunpack.c.l.b16 %v123
    %v188 = vunpack.c.l.b16 %v124
    %v189 = vunpack.c.l.b16 %v125
    %v190 = vunpack.c.l.b16 %v126
    %v191 = vunpack.c.l.b16 %v127
    %v192 = vunpack.c.l.b16 %v128
    %v193 = vunpack.c.l.b16 %v129
    %v194 = vunpack.c.l.b16 %v130
    %v195 = vunpack.c.l.b16 %v131
    %v196 = vunpack.c.l.b16 %v132
    %v197 = vunpack.c.l.b16 %v133
    %v198 = vunpack.c.l.b16 %v134
    %v199 = vunpack.c.l.b16 %v135
    %v200 = vpack.c.b16 %v168, %v168
    %v201 = vpack.c.b16 %v169, %v169
    %v202 = vpack.c.b16 %v170, %v170
    %v203 = vpack.c.b16 %v171, %v171
    %v204 = vpack.c.b16 %v172, %v172
    %v205 = vpack.c.b16 %v173, %v173
    %v206 = vpack.c.b16 %v174, %v174
    %v207 = vpack.c.b16 %v175, %v175
    %v208 = vpack.c.b16 %v176, %v176
    %v209 = vpack.c.b16 %v177, %v177
    %v210 = vpack.c.b16 %v178, %v178
    %v211 = vpack.c.b16 %v179, %v179
    %v212 = vpack.c.b16 %v180, %v180
    %v213 = vpack.c.b16 %v181, %v181
    %v214 = vpack.c.b16 %v182, %v182
    %v215 = vpack.c.b16 %v183, %v183
    %v216 = vpack.c.b16 %v184, %v184
    %v217 = vpack.c.b16 %v185, %v185
    %v218 = vpack.c.b16 %v186, %v186
    %v219 = vpack.c.b16 %v187, %v187
    %v220 = vpack.c.b16 %v188, %v188
    %v221 = vpack.c.b16 %v189, %v189
    %v222 = vpack.c.b16 %v190, %v190
    %v223 = vpack.c.b16 %v191, %v191
    %v224 = vpack.c.b16 %v192, %v192
    %v225 = vpack.c.b16 %v193, %v193
    %v226 = vpack.c.b16 %v194, %v194
    %v227 = vpack.c.b16 %v195, %v195
    %v228 = vpack.c.b16 %v196, %v196
    %v229 = vpack.c.b16 %v197, %v197
    %v230 = vpack.c.b16 %v198, %v198
    %v231 = vpack.c.b16 %v199, %v199
    %232 = vrot.lane.b32.xlu0 %v200, 4
    %v233 = vpop.permute.xlu0 %232
    %234 = vrot.lane.b32.xlu0 %v201, 4
    %v235 = vpop.permute.xlu0 %234
    %236 = vrot.lane.b32.xlu0 %v202, 4
    %v237 = vpop.permute.xlu0 %236
    %238 = vrot.lane.b32.xlu0 %v203, 4
    %v239 = vpop.permute.xlu0 %238
    %240 = vrot.lane.b32.xlu0 %v204, 4
    %v241 = vpop.permute.xlu0 %240
    %242 = vrot.lane.b32.xlu0 %v205, 4
    %v243 = vpop.permute.xlu0 %242
    %244 = vrot.lane.b32.xlu0 %v206, 4
    %v245 = vpop.permute.xlu0 %244
    %246 = vrot.lane.b32.xlu0 %v207, 4
    %v247 = vpop.permute.xlu0 %246
    %248 = vrot.lane.b32.xlu0 %v208, 4
    %v249 = vpop.permute.xlu0 %248
    %250 = vrot.lane.b32.xlu0 %v209, 4
    %v251 = vpop.permute.xlu0 %250
    %252 = vrot.lane.b32.xlu0 %v210, 4
    %v253 = vpop.permute.xlu0 %252
    %254 = vrot.lane.b32.xlu0 %v211, 4
    %v255 = vpop.permute.xlu0 %254
    %256 = vrot.lane.b32.xlu0 %v212, 4
    %v257 = vpop.permute.xlu0 %256
    %258 = vrot.lane.b32.xlu0 %v213, 4
    %v259 = vpop.permute.xlu0 %258
    %260 = vrot.lane.b32.xlu0 %v214, 4
    %v261 = vpop.permute.xlu0 %260
    %262 = vrot.lane.b32.xlu0 %v215, 4
    %v263 = vpop.permute.xlu0 %262
    %264 = vrot.lane.b32.xlu0 %v216, 4
    %v265 = vpop.permute.xlu0 %264
    %266 = vrot.lane.b32.xlu0 %v217, 4
    %v267 = vpop.permute.xlu0 %266
    %268 = vrot.lane.b32.xlu0 %v218, 4
    %v269 = vpop.permute.xlu0 %268
    %270 = vrot.lane.b32.xlu0 %v219, 4
    %v271 = vpop.permute.xlu0 %270
    %272 = vrot.lane.b32.xlu0 %v220, 4
    %v273 = vpop.permute.xlu0 %272
    %274 = vrot.lane.b32.xlu0 %v221, 4
    %v275 = vpop.permute.xlu0 %274
    %276 = vrot.lane.b32.xlu0 %v222, 4
    %v277 = vpop.permute.xlu0 %276
    %278 = vrot.lane.b32.xlu0 %v223, 4
    %v279 = vpop.permute.xlu0 %278
    %280 = vrot.lane.b32.xlu0 %v224, 4
    %v281 = vpop.permute.xlu0 %280
    %282 = vrot.lane.b32.xlu0 %v225, 4
    %v283 = vpop.permute.xlu0 %282
    %284 = vrot.lane.b32.xlu0 %v226, 4
    %v285 = vpop.permute.xlu0 %284
    %286 = vrot.lane.b32.xlu0 %v227, 4
    %v287 = vpop.permute.xlu0 %286
    %288 = vrot.lane.b32.xlu0 %v228, 4
    %v289 = vpop.permute.xlu0 %288
    %290 = vrot.lane.b32.xlu0 %v229, 4
    %v291 = vpop.permute.xlu0 %290
    %292 = vrot.lane.b32.xlu0 %v230, 4
    %v293 = vpop.permute.xlu0 %292
    %294 = vrot.lane.b32.xlu0 %v231, 4
    %v295 = vpop.permute.xlu0 %294
    %v297 = vunpack.c.l.b16 0
    %v298 = vpack.c.b16 %v297, %v297
    %299 = vrot.lane.b32.xlu0 %v202, 8
    %v300 = vpop.permute.xlu0 %299
    %301 = vrot.lane.b32.xlu0 %v203, 8
    %v302 = vpop.permute.xlu0 %301
    %303 = vrot.lane.b32.xlu0 %v204, 8
    %v304 = vpop.permute.xlu0 %303
    %305 = vrot.lane.b32.xlu0 %v205, 8
    %v306 = vpop.permute.xlu0 %305
    %307 = vrot.lane.b32.xlu0 %v206, 8
    %v308 = vpop.permute.xlu0 %307
    %309 = vrot.lane.b32.xlu0 %v207, 8
    %v310 = vpop.permute.xlu0 %309
    %311 = vrot.lane.b32.xlu0 %v208, 8
    %v312 = vpop.permute.xlu0 %311
    %313 = vrot.lane.b32.xlu0 %v209, 8
    %v314 = vpop.permute.xlu0 %313
    %315 = vrot.lane.b32.xlu0 %v210, 8
    %v316 = vpop.permute.xlu0 %315
    %317 = vrot.lane.b32.xlu0 %v211, 8
    %v318 = vpop.permute.xlu0 %317
    %319 = vrot.lane.b32.xlu0 %v212, 8
    %v320 = vpop.permute.xlu0 %319
    %321 = vrot.lane.b32.xlu0 %v213, 8
    %v322 = vpop.permute.xlu0 %321
    %323 = vrot.lane.b32.xlu0 %v214, 8
    %v324 = vpop.permute.xlu0 %323
    %325 = vrot.lane.b32.xlu0 %v215, 8
    %v326 = vpop.permute.xlu0 %325
    %327 = vrot.lane.b32.xlu0 %v216, 8
    %v328 = vpop.permute.xlu0 %327
    %329 = vrot.lane.b32.xlu0 %v217, 8
    %v330 = vpop.permute.xlu0 %329
    %331 = vrot.lane.b32.xlu0 %v218, 8
    %v332 = vpop.permute.xlu0 %331
    %333 = vrot.lane.b32.xlu0 %v219, 8
    %v334 = vpop.permute.xlu0 %333
    %335 = vrot.lane.b32.xlu0 %v220, 8
    %v336 = vpop.permute.xlu0 %335
    %337 = vrot.lane.b32.xlu0 %v221, 8
    %v338 = vpop.permute.xlu0 %337
    %339 = vrot.lane.b32.xlu0 %v222, 8
    %v340 = vpop.permute.xlu0 %339
    %341 = vrot.lane.b32.xlu0 %v223, 8
    %v342 = vpop.permute.xlu0 %341
    %343 = vrot.lane.b32.xlu0 %v224, 8
    %v344 = vpop.permute.xlu0 %343
    %345 = vrot.lane.b32.xlu0 %v225, 8
    %v346 = vpop.permute.xlu0 %345
    %347 = vrot.lane.b32.xlu0 %v226, 8
    %v348 = vpop.permute.xlu0 %347
    %349 = vrot.lane.b32.xlu0 %v227, 8
    %v350 = vpop.permute.xlu0 %349
    %351 = vrot.lane.b32.xlu0 %v228, 8
    %v352 = vpop.permute.xlu0 %351
    %353 = vrot.lane.b32.xlu0 %v229, 8
    %v354 = vpop.permute.xlu0 %353
    %355 = vrot.lane.b32.xlu0 %v230, 8
    %v356 = vpop.permute.xlu0 %355
    %357 = vrot.lane.b32.xlu0 %v231, 8
    %v358 = vpop.permute.xlu0 %357
    %359 = vrot.lane.b32.xlu0 %v298, 8
    %v360 = vpop.permute.xlu0 %359
    %vm361 = vcmask 31744
    %v364 = vsel %vm361, 0, %v233
    %v366 = vsel %vm361, 0, %v235
    %v369 = vsel %vm361, %v104, %v237
    %v372 = vsel %vm361, %v105, %v239
    %v375 = vsel %vm361, %v106, %v241
    %v378 = vsel %vm361, %v107, %v243
    %v381 = vsel %vm361, %v108, %v245
    %v384 = vsel %vm361, %v109, %v247
    %v387 = vsel %vm361, %v110, %v249
    %v390 = vsel %vm361, %v111, %v251
    %v393 = vsel %vm361, %v112, %v253
    %v396 = vsel %vm361, %v113, %v255
    %v399 = vsel %vm361, %v114, %v257
    %v402 = vsel %vm361, %v115, %v259
    %v405 = vsel %vm361, %v116, %v261
    %v408 = vsel %vm361, %v117, %v263
    %v411 = vsel %vm361, %v118, %v265
    %v414 = vsel %vm361, %v119, %v267
    %v417 = vsel %vm361, %v120, %v269
    %v420 = vsel %vm361, %v121, %v271
    %v423 = vsel %vm361, %v122, %v273
    %v426 = vsel %vm361, %v123, %v275
    %v429 = vsel %vm361, %v124, %v277
    %v432 = vsel %vm361, %v125, %v279
    %v435 = vsel %vm361, %v126, %v281
    %v438 = vsel %vm361, %v127, %v283
    %v441 = vsel %vm361, %v128, %v285
    %v444 = vsel %vm361, %v129, %v287
    %v447 = vsel %vm361, %v130, %v289
    %v450 = vsel %vm361, %v131, %v291
    %v453 = vsel %vm361, %v132, %v293
    %v456 = vsel %vm361, %v133, %v295
    %vm457 = vcmask 64512
    %v459 = vsel %vm457, %v364, %v300
    %v461 = vsel %vm457, %v366, %v302
    %v463 = vsel %vm457, %v369, %v304
    %v465 = vsel %vm457, %v372, %v306
    %v467 = vsel %vm457, %v375, %v308
    %v469 = vsel %vm457, %v378, %v310
    %v471 = vsel %vm457, %v381, %v312
    %v473 = vsel %vm457, %v384, %v314
    %v475 = vsel %vm457, %v387, %v316
    %v477 = vsel %vm457, %v390, %v318
    %v479 = vsel %vm457, %v393, %v320
    %v481 = vsel %vm457, %v396, %v322
    %v483 = vsel %vm457, %v399, %v324
    %v485 = vsel %vm457, %v402, %v326
    %v487 = vsel %vm457, %v405, %v328
    %v489 = vsel %vm457, %v408, %v330
    %v491 = vsel %vm457, %v411, %v332
    %v493 = vsel %vm457, %v414, %v334
    %v495 = vsel %vm457, %v417, %v336
    %v497 = vsel %vm457, %v420, %v338
    %v499 = vsel %vm457, %v423, %v340
    %v501 = vsel %vm457, %v426, %v342
    %v503 = vsel %vm457, %v429, %v344
    %v505 = vsel %vm457, %v432, %v346
    %v507 = vsel %vm457, %v435, %v348
    %v509 = vsel %vm457, %v438, %v350
    %v511 = vsel %vm457, %v441, %v352
    %v513 = vsel %vm457, %v444, %v354
    %v515 = vsel %vm457, %v447, %v356
    %v517 = vsel %vm457, %v450, %v358
    %v519 = vsel %vm457, %v453, %v360
    %v520 = vsel %vm457, %v456, %v360
    %v521 = vld [vmem:[%s1] sm:$0xf]
    %v522 = vld [vmem:[%s1 + $0x4] sm:$0x3]
    %v523 = vld [vmem:[%s2] sm:$0x1]
    %v525 = vperm.slane %v523, 0
    %v559 = vunpack.c.l.b16 %v459
    %v560 = vunpack.c.l.b16 %v461
    %v561 = vunpack.c.l.b16 %v463
    %v562 = vunpack.c.l.b16 %v465
    %v563 = vunpack.c.l.b16 %v467
    %v564 = vunpack.c.l.b16 %v469
    %v565 = vunpack.c.l.b16 %v471
    %v566 = vunpack.c.l.b16 %v473
    %v567 = vunpack.c.l.b16 %v475
    %v568 = vunpack.c.l.b16 %v477
    %v569 = vunpack.c.l.b16 %v479
    %v570 = vunpack.c.l.b16 %v481
    %v571 = vunpack.c.l.b16 %v483
    %v572 = vunpack.c.l.b16 %v485
    %v573 = vunpack.c.l.b16 %v487
    %v574 = vunpack.c.l.b16 %v489
    %v575 = vunpack.c.l.b16 %v491
    %v576 = vunpack.c.l.b16 %v493
    %v577 = vunpack.c.l.b16 %v495
    %v578 = vunpack.c.l.b16 %v497
    %v579 = vunpack.c.l.b16 %v499
    %v580 = vunpack.c.l.b16 %v501
    %v581 = vunpack.c.l.b16 %v503
    %v582 = vunpack.c.l.b16 %v505
    %v583 = vunpack.c.l.b16 %v507
    %v584 = vunpack.c.l.b16 %v509
    %v585 = vunpack.c.l.b16 %v511
    %v586 = vunpack.c.l.b16 %v513
    %v587 = vunpack.c.l.b16 %v515
    %v588 = vunpack.c.l.b16 %v517
    %v589 = vunpack.c.l.b16 %v519
    %v590 = vunpack.c.l.b16 %v520
    %v591 = vpack.c.b16 %v560, %v559
    %v592 = vpack.c.b16 %v562, %v561
    %v593 = vpack.c.b16 %v564, %v563
    %v594 = vpack.c.b16 %v566, %v565
    %v595 = vpack.c.b16 %v568, %v567
    %v596 = vpack.c.b16 %v570, %v569
    %v597 = vpack.c.b16 %v572, %v571
    %v598 = vpack.c.b16 %v574, %v573
    %v599 = vpack.c.b16 %v576, %v575
    %v600 = vpack.c.b16 %v578, %v577
    %v601 = vpack.c.b16 %v580, %v579
    %v602 = vpack.c.b16 %v582, %v581
    %v603 = vpack.c.b16 %v584, %v583
    %v604 = vpack.c.b16 %v586, %v585
    %v605 = vpack.c.b16 %v588, %v587
    %v606 = vpack.c.b16 %v590, %v589
    %v609 = vunpack.c.l.b16 %v521
    %v610 = vunpack.c.l.b16 %v522
    %v611 = vpack.c.b16 %v610, %v609
    %vm612 = vcmask 97280
    %v614 = vsel %vm612, %v591, 0
    %v617 = vsel %vm612, %v592, 0
    %v620 = vsel %vm612, %v593, 0
    %v623 = vsel %vm612, %v594, 0
    %v626 = vsel %vm612, %v595, 0
    %v629 = vsel %vm612, %v596, 0
    %v632 = vsel %vm612, %v597, 0
    %v635 = vsel %vm612, %v598, 0
    %v638 = vsel %vm612, %v599, 0
    %v641 = vsel %vm612, %v600, 0
    %v644 = vsel %vm612, %v601, 0
    %v647 = vsel %vm612, %v602, 0
    %v650 = vsel %vm612, %v603, 0
    %v653 = vsel %vm612, %v604, 0
    %v656 = vsel %vm612, %v605, 0
    %v659 = vsel %vm612, %v606, 0
    %vm661 = vcmask 1045504
    %v663 = vsel %vm661, %v611, 0
    %665 = vmatpush.bf16.msra.mxu0 0
    %666 = vmatpush.bf16.msra.mxu0 0
    %667 = vmatpush.bf16.msra.mxu0 0
    %668 = vmatpush.bf16.msra.mxu0 0
    %669 = vmatpush.bf16.msra.mxu0 0
    %670 = vmatpush.bf16.msra.mxu0 0
    %671 = vmatpush.bf16.msra.mxu0 0
    %672 = vmatpush.bf16.msra.mxu0 %v663
    %673 = vmatmul.bf16.gmra.mxu0 %v614
    %v674 = vpop.f32.mrf.mxu0
    %v675 = vadd.f32 %v525, %v674
    %v676 = vpop.f32.mrf.mxu0
    %v677 = vadd.f32 %v525, %v676
    %678 = vmatmul.bf16.gmra.mxu0 %v617
    %v679 = vpop.f32.mrf.mxu0
    %v680 = vadd.f32 %v525, %v679
    %v681 = vpop.f32.mrf.mxu0
    %v682 = vadd.f32 %v525, %v681
    %683 = vmatmul.bf16.gmra.mxu0 %v620
    %v684 = vpop.f32.mrf.mxu0
    %v685 = vadd.f32 %v525, %v684
    %v686 = vpop.f32.mrf.mxu0
    %v687 = vadd.f32 %v525, %v686
    %688 = vmatmul.bf16.gmra.mxu0 %v623
    %v689 = vpop.f32.mrf.mxu0
    %v690 = vadd.f32 %v525, %v689
    %v691 = vpop.f32.mrf.mxu0
    %v692 = vadd.f32 %v525, %v691
    %693 = vmatmul.bf16.gmra.mxu0 %v626
    %v694 = vpop.f32.mrf.mxu0
    %v695 = vadd.f32 %v525, %v694
    %v696 = vpop.f32.mrf.mxu0
    %v697 = vadd.f32 %v525, %v696
    %698 = vmatmul.bf16.gmra.mxu0 %v629
    %v699 = vpop.f32.mrf.mxu0
    %v700 = vadd.f32 %v525, %v699
    %v701 = vpop.f32.mrf.mxu0
    %v702 = vadd.f32 %v525, %v701
    %703 = vmatmul.bf16.gmra.mxu0 %v632
    %v704 = vpop.f32.mrf.mxu0
    %v705 = vadd.f32 %v525, %v704
    %v706 = vpop.f32.mrf.mxu0
    %v707 = vadd.f32 %v525, %v706
    %708 = vmatmul.bf16.gmra.mxu0 %v635
    %v709 = vpop.f32.mrf.mxu0
    %v710 = vadd.f32 %v525, %v709
    %v711 = vpop.f32.mrf.mxu0
    %v712 = vadd.f32 %v525, %v711
    %713 = vmatmul.bf16.gmra.mxu0 %v638
    %v714 = vpop.f32.mrf.mxu0
    %v715 = vadd.f32 %v525, %v714
    %v716 = vpop.f32.mrf.mxu0
    %v717 = vadd.f32 %v525, %v716
    %718 = vmatmul.bf16.gmra.mxu0 %v641
    %v719 = vpop.f32.mrf.mxu0
    %v720 = vadd.f32 %v525, %v719
    %v721 = vpop.f32.mrf.mxu0
    %v722 = vadd.f32 %v525, %v721
    %723 = vmatmul.bf16.gmra.mxu0 %v644
    %v724 = vpop.f32.mrf.mxu0
    %v725 = vadd.f32 %v525, %v724
    %v726 = vpop.f32.mrf.mxu0
    %v727 = vadd.f32 %v525, %v726
    %728 = vmatmul.bf16.gmra.mxu0 %v647
    %v729 = vpop.f32.mrf.mxu0
    %v730 = vadd.f32 %v525, %v729
    %v731 = vpop.f32.mrf.mxu0
    %v732 = vadd.f32 %v525, %v731
    %733 = vmatmul.bf16.gmra.mxu0 %v650
    %v734 = vpop.f32.mrf.mxu0
    %v735 = vadd.f32 %v525, %v734
    %v736 = vpop.f32.mrf.mxu0
    %v737 = vadd.f32 %v525, %v736
    %738 = vmatmul.bf16.gmra.mxu0 %v653
    %v739 = vpop.f32.mrf.mxu0
    %v740 = vadd.f32 %v525, %v739
    %v741 = vpop.f32.mrf.mxu0
    %v742 = vadd.f32 %v525, %v741
    %743 = vmatmul.bf16.gmra.mxu0 %v656
    %v744 = vpop.f32.mrf.mxu0
    %v745 = vadd.f32 %v525, %v744
    %v746 = vpop.f32.mrf.mxu0
    %v747 = vadd.f32 %v525, %v746
    %748 = vmatmul.bf16.gmra.mxu0 %v659
    %v749 = vpop.f32.mrf.mxu0
    %v750 = vadd.f32 %v525, %v749
    %v751 = vpop.f32.mrf.mxu0
    %v752 = vadd.f32 %v525, %v751
    %753 = vdwg.mxu0
    %v754 = vmax.f32 %v675, 0.0
    %v755 = vmax.f32 %v677, 0.0
    %v756 = vmax.f32 %v680, 0.0
    %v757 = vmax.f32 %v682, 0.0
    %v758 = vmax.f32 %v685, 0.0
    %v759 = vmax.f32 %v687, 0.0
    %v760 = vmax.f32 %v690, 0.0
    %v761 = vmax.f32 %v692, 0.0
    %v762 = vmax.f32 %v695, 0.0
    %v763 = vmax.f32 %v697, 0.0
    %v764 = vmax.f32 %v700, 0.0
    %v765 = vmax.f32 %v702, 0.0
    %v766 = vmax.f32 %v705, 0.0
    %v767 = vmax.f32 %v707, 0.0
    %v768 = vmax.f32 %v710, 0.0
    %v769 = vmax.f32 %v712, 0.0
    %v770 = vmax.f32 %v715, 0.0
    %v771 = vmax.f32 %v717, 0.0
    %v772 = vmax.f32 %v720, 0.0
    %v773 = vmax.f32 %v722, 0.0
    %v774 = vmax.f32 %v725, 0.0
    %v775 = vmax.f32 %v727, 0.0
    %v776 = vmax.f32 %v730, 0.0
    %v777 = vmax.f32 %v732, 0.0
    %v778 = vmax.f32 %v735, 0.0
    %v779 = vmax.f32 %v737, 0.0
    %v780 = vmax.f32 %v740, 0.0
    %v781 = vmax.f32 %v742, 0.0
    %v782 = vmax.f32 %v745, 0.0
    %v783 = vmax.f32 %v747, 0.0
    %v784 = vmax.f32 %v750, 0.0
    %v785 = vmax.f32 %v752, 0.0
    %v786 = vpack.c.bf16 %v754, %v754
    %v787 = vpack.c.bf16 %v755, %v755
    %v788 = vpack.c.bf16 %v756, %v756
    %v789 = vpack.c.bf16 %v757, %v757
    %v790 = vpack.c.bf16 %v758, %v758
    %v791 = vpack.c.bf16 %v759, %v759
    %v792 = vpack.c.bf16 %v760, %v760
    %v793 = vpack.c.bf16 %v761, %v761
    %v794 = vpack.c.bf16 %v762, %v762
    %v795 = vpack.c.bf16 %v763, %v763
    %v796 = vpack.c.bf16 %v764, %v764
    %v797 = vpack.c.bf16 %v765, %v765
    %v798 = vpack.c.bf16 %v766, %v766
    %v799 = vpack.c.bf16 %v767, %v767
    %v800 = vpack.c.bf16 %v768, %v768
    %v801 = vpack.c.bf16 %v769, %v769
    %v802 = vpack.c.bf16 %v770, %v770
    %v803 = vpack.c.bf16 %v771, %v771
    %v804 = vpack.c.bf16 %v772, %v772
    %v805 = vpack.c.bf16 %v773, %v773
    %v806 = vpack.c.bf16 %v774, %v774
    %v807 = vpack.c.bf16 %v775, %v775
    %v808 = vpack.c.bf16 %v776, %v776
    %v809 = vpack.c.bf16 %v777, %v777
    %v810 = vpack.c.bf16 %v778, %v778
    %v811 = vpack.c.bf16 %v779, %v779
    %v812 = vpack.c.bf16 %v780, %v780
    %v813 = vpack.c.bf16 %v781, %v781
    %v814 = vpack.c.bf16 %v782, %v782
    %v815 = vpack.c.bf16 %v783, %v783
    %v816 = vpack.c.bf16 %v784, %v784
    %v817 = vpack.c.bf16 %v785, %v785
    %v850 = vunpack.c.l.b16 %v786
    %v851 = vunpack.c.l.b16 %v787
    %v852 = vunpack.c.l.b16 %v788
    %v853 = vunpack.c.l.b16 %v789
    %v854 = vunpack.c.l.b16 %v790
    %v855 = vunpack.c.l.b16 %v791
    %v856 = vunpack.c.l.b16 %v792
    %v857 = vunpack.c.l.b16 %v793
    %v858 = vunpack.c.l.b16 %v794
    %v859 = vunpack.c.l.b16 %v795
    %v860 = vunpack.c.l.b16 %v796
    %v861 = vunpack.c.l.b16 %v797
    %v862 = vunpack.c.l.b16 %v798
    %v863 = vunpack.c.l.b16 %v799
    %v864 = vunpack.c.l.b16 %v800
    %v865 = vunpack.c.l.b16 %v801
    %v866 = vunpack.c.l.b16 %v802
    %v867 = vunpack.c.l.b16 %v803
    %v868 = vunpack.c.l.b16 %v804
    %v869 = vunpack.c.l.b16 %v805
    %v870 = vunpack.c.l.b16 %v806
    %v871 = vunpack.c.l.b16 %v807
    %v872 = vunpack.c.l.b16 %v808
    %v873 = vunpack.c.l.b16 %v809
    %v874 = vunpack.c.l.b16 %v810
    %v875 = vunpack.c.l.b16 %v811
    %v876 = vunpack.c.l.b16 %v812
    %v877 = vunpack.c.l.b16 %v813
    %v878 = vunpack.c.l.b16 %v814
    %v879 = vunpack.c.l.b16 %v815
    %v880 = vunpack.c.l.b16 %v816
    %v881 = vunpack.c.l.b16 %v817
    %v882 = vpack.c.b16 %v850, %v850
    %v883 = vpack.c.b16 %v851, %v851
    %v884 = vpack.c.b16 %v852, %v852
    %v885 = vpack.c.b16 %v853, %v853
    %v886 = vpack.c.b16 %v854, %v854
    %v887 = vpack.c.b16 %v855, %v855
    %v888 = vpack.c.b16 %v856, %v856
    %v889 = vpack.c.b16 %v857, %v857
    %v890 = vpack.c.b16 %v858, %v858
    %v891 = vpack.c.b16 %v859, %v859
    %v892 = vpack.c.b16 %v860, %v860
    %v893 = vpack.c.b16 %v861, %v861
    %v894 = vpack.c.b16 %v862, %v862
    %v895 = vpack.c.b16 %v863, %v863
    %v896 = vpack.c.b16 %v864, %v864
    %v897 = vpack.c.b16 %v865, %v865
    %v898 = vpack.c.b16 %v866, %v866
    %v899 = vpack.c.b16 %v867, %v867
    %v900 = vpack.c.b16 %v868, %v868
    %v901 = vpack.c.b16 %v869, %v869
    %v902 = vpack.c.b16 %v870, %v870
    %v903 = vpack.c.b16 %v871, %v871
    %v904 = vpack.c.b16 %v872, %v872
    %v905 = vpack.c.b16 %v873, %v873
    %v906 = vpack.c.b16 %v874, %v874
    %v907 = vpack.c.b16 %v875, %v875
    %v908 = vpack.c.b16 %v876, %v876
    %v909 = vpack.c.b16 %v877, %v877
    %v910 = vpack.c.b16 %v878, %v878
    %v911 = vpack.c.b16 %v879, %v879
    %v912 = vpack.c.b16 %v880, %v880
    %v913 = vpack.c.b16 %v881, %v881
    %914 = vrot.lane.b32.xlu0 %v882, 32
    %v915 = vpop.permute.xlu0 %914
    %916 = vrot.lane.b32.xlu0 %v883, 32
    %v917 = vpop.permute.xlu0 %916
    %918 = vrot.lane.b32.xlu0 %v884, 32
    %v919 = vpop.permute.xlu0 %918
    %920 = vrot.lane.b32.xlu0 %v885, 32
    %v921 = vpop.permute.xlu0 %920
    %922 = vrot.lane.b32.xlu0 %v886, 32
    %v923 = vpop.permute.xlu0 %922
    %924 = vrot.lane.b32.xlu0 %v887, 32
    %v925 = vpop.permute.xlu0 %924
    %926 = vrot.lane.b32.xlu0 %v888, 32
    %v927 = vpop.permute.xlu0 %926
    %928 = vrot.lane.b32.xlu0 %v889, 32
    %v929 = vpop.permute.xlu0 %928
    %930 = vrot.lane.b32.xlu0 %v890, 32
    %v931 = vpop.permute.xlu0 %930
    %932 = vrot.lane.b32.xlu0 %v891, 32
    %v933 = vpop.permute.xlu0 %932
    %934 = vrot.lane.b32.xlu0 %v892, 32
    %v935 = vpop.permute.xlu0 %934
    %936 = vrot.lane.b32.xlu0 %v893, 32
    %v937 = vpop.permute.xlu0 %936
    %938 = vrot.lane.b32.xlu0 %v894, 32
    %v939 = vpop.permute.xlu0 %938
    %940 = vrot.lane.b32.xlu0 %v895, 32
    %v941 = vpop.permute.xlu0 %940
    %942 = vrot.lane.b32.xlu0 %v896, 32
    %v943 = vpop.permute.xlu0 %942
    %944 = vrot.lane.b32.xlu0 %v897, 32
    %v945 = vpop.permute.xlu0 %944
    %946 = vrot.lane.b32.xlu0 %v898, 32
    %v947 = vpop.permute.xlu0 %946
    %948 = vrot.lane.b32.xlu0 %v899, 32
    %v949 = vpop.permute.xlu0 %948
    %950 = vrot.lane.b32.xlu0 %v900, 32
    %v951 = vpop.permute.xlu0 %950
    %952 = vrot.lane.b32.xlu0 %v901, 32
    %v953 = vpop.permute.xlu0 %952
    %954 = vrot.lane.b32.xlu0 %v902, 32
    %v955 = vpop.permute.xlu0 %954
    %956 = vrot.lane.b32.xlu0 %v903, 32
    %v957 = vpop.permute.xlu0 %956
    %958 = vrot.lane.b32.xlu0 %v904, 32
    %v959 = vpop.permute.xlu0 %958
    %960 = vrot.lane.b32.xlu0 %v905, 32
    %v961 = vpop.permute.xlu0 %960
    %962 = vrot.lane.b32.xlu0 %v906, 32
    %v963 = vpop.permute.xlu0 %962
    %964 = vrot.lane.b32.xlu0 %v907, 32
    %v965 = vpop.permute.xlu0 %964
    %966 = vrot.lane.b32.xlu0 %v908, 32
    %v967 = vpop.permute.xlu0 %966
    %968 = vrot.lane.b32.xlu0 %v909, 32
    %v969 = vpop.permute.xlu0 %968
    %970 = vrot.lane.b32.xlu0 %v910, 32
    %v971 = vpop.permute.xlu0 %970
    %972 = vrot.lane.b32.xlu0 %v911, 32
    %v973 = vpop.permute.xlu0 %972
    %974 = vrot.lane.b32.xlu0 %v912, 32
    %v975 = vpop.permute.xlu0 %974
    %976 = vrot.lane.b32.xlu0 %v913, 32
    %v977 = vpop.permute.xlu0 %976
    %978 = vrot.lane.b32.xlu0 %v884, 64
    %v979 = vpop.permute.xlu0 %978
    %980 = vrot.lane.b32.xlu0 %v885, 64
    %v981 = vpop.permute.xlu0 %980
    %982 = vrot.lane.b32.xlu0 %v886, 64
    %v983 = vpop.permute.xlu0 %982
    %984 = vrot.lane.b32.xlu0 %v887, 64
    %v985 = vpop.permute.xlu0 %984
    %986 = vrot.lane.b32.xlu0 %v888, 64
    %v987 = vpop.permute.xlu0 %986
    %988 = vrot.lane.b32.xlu0 %v889, 64
    %v989 = vpop.permute.xlu0 %988
    %990 = vrot.lane.b32.xlu0 %v890, 64
    %v991 = vpop.permute.xlu0 %990
    %992 = vrot.lane.b32.xlu0 %v891, 64
    %v993 = vpop.permute.xlu0 %992
    %994 = vrot.lane.b32.xlu0 %v892, 64
    %v995 = vpop.permute.xlu0 %994
    %996 = vrot.lane.b32.xlu0 %v893, 64
    %v997 = vpop.permute.xlu0 %996
    %998 = vrot.lane.b32.xlu0 %v894, 64
    %v999 = vpop.permute.xlu0 %998
    %1000 = vrot.lane.b32.xlu0 %v895, 64
    %v1001 = vpop.permute.xlu0 %1000
    %1002 = vrot.lane.b32.xlu0 %v896, 64
    %v1003 = vpop.permute.xlu0 %1002
    %1004 = vrot.lane.b32.xlu0 %v897, 64
    %v1005 = vpop.permute.xlu0 %1004
    %1006 = vrot.lane.b32.xlu0 %v898, 64
    %v1007 = vpop.permute.xlu0 %1006
    %1008 = vrot.lane.b32.xlu0 %v899, 64
    %v1009 = vpop.permute.xlu0 %1008
    %1010 = vrot.lane.b32.xlu0 %v900, 64
    %v1011 = vpop.permute.xlu0 %1010
    %1012 = vrot.lane.b32.xlu0 %v901, 64
    %v1013 = vpop.permute.xlu0 %1012
    %1014 = vrot.lane.b32.xlu0 %v902, 64
    %v1015 = vpop.permute.xlu0 %1014
    %1016 = vrot.lane.b32.xlu0 %v903, 64
    %v1017 = vpop.permute.xlu0 %1016
    %1018 = vrot.lane.b32.xlu0 %v904, 64
    %v1019 = vpop.permute.xlu0 %1018
    %1020 = vrot.lane.b32.xlu0 %v905, 64
    %v1021 = vpop.permute.xlu0 %1020
    %1022 = vrot.lane.b32.xlu0 %v906, 64
    %v1023 = vpop.permute.xlu0 %1022
    %1024 = vrot.lane.b32.xlu0 %v907, 64
    %v1025 = vpop.permute.xlu0 %1024
    %1026 = vrot.lane.b32.xlu0 %v908, 64
    %v1027 = vpop.permute.xlu0 %1026
    %1028 = vrot.lane.b32.xlu0 %v909, 64
    %v1029 = vpop.permute.xlu0 %1028
    %1030 = vrot.lane.b32.xlu0 %v910, 64
    %v1031 = vpop.permute.xlu0 %1030
    %1032 = vrot.lane.b32.xlu0 %v911, 64
    %v1033 = vpop.permute.xlu0 %1032
    %1034 = vrot.lane.b32.xlu0 %v912, 64
    %v1035 = vpop.permute.xlu0 %1034
    %1036 = vrot.lane.b32.xlu0 %v913, 64
    %v1037 = vpop.permute.xlu0 %1036
    %1038 = vrot.lane.b32.xlu0 %v298, 64
    %v1039 = vpop.permute.xlu0 %1038
    %vm1040 = vcmask 261120
    %v1042 = vsel %vm1040, 0, %v915
    %v1044 = vsel %vm1040, 0, %v917
    %v1047 = vsel %vm1040, %v786, %v919
    %v1050 = vsel %vm1040, %v787, %v921
    %v1053 = vsel %vm1040, %v788, %v923
    %v1056 = vsel %vm1040, %v789, %v925
    %v1059 = vsel %vm1040, %v790, %v927
    %v1062 = vsel %vm1040, %v791, %v929
    %v1065 = vsel %vm1040, %v792, %v931
    %v1068 = vsel %vm1040, %v793, %v933
    %v1071 = vsel %vm1040, %v794, %v935
    %v1074 = vsel %vm1040, %v795, %v937
    %v1077 = vsel %vm1040, %v796, %v939
    %v1080 = vsel %vm1040, %v797, %v941
    %v1083 = vsel %vm1040, %v798, %v943
    %v1086 = vsel %vm1040, %v799, %v945
    %v1089 = vsel %vm1040, %v800, %v947
    %v1092 = vsel %vm1040, %v801, %v949
    %v1095 = vsel %vm1040, %v802, %v951
    %v1098 = vsel %vm1040, %v803, %v953
    %v1101 = vsel %vm1040, %v804, %v955
    %v1104 = vsel %vm1040, %v805, %v957
    %v1107 = vsel %vm1040, %v806, %v959
    %v1110 = vsel %vm1040, %v807, %v961
    %v1113 = vsel %vm1040, %v808, %v963
    %v1116 = vsel %vm1040, %v809, %v965
    %v1119 = vsel %vm1040, %v810, %v967
    %v1122 = vsel %vm1040, %v811, %v969
    %v1125 = vsel %vm1040, %v812, %v971
    %v1128 = vsel %vm1040, %v813, %v973
    %v1131 = vsel %vm1040, %v814, %v975
    %v1134 = vsel %vm1040, %v815, %v977
    %vm1135 = vcmask 523264
    %v1137 = vsel %vm1135, %v1042, %v979
    %v1139 = vsel %vm1135, %v1044, %v981
    %v1141 = vsel %vm1135, %v1047, %v983
    %v1143 = vsel %vm1135, %v1050, %v985
    %v1145 = vsel %vm1135, %v1053, %v987
    %v1147 = vsel %vm1135, %v1056, %v989
    %v1149 = vsel %vm1135, %v1059, %v991
    %v1151 = vsel %vm1135, %v1062, %v993
    %v1153 = vsel %vm1135, %v1065, %v995
    %v1155 = vsel %vm1135, %v1068, %v997
    %v1157 = vsel %vm1135, %v1071, %v999
    %v1159 = vsel %vm1135, %v1074, %v1001
    %v1161 = vsel %vm1135, %v1077, %v1003
    %v1163 = vsel %vm1135, %v1080, %v1005
    %v1165 = vsel %vm1135, %v1083, %v1007
    %v1167 = vsel %vm1135, %v1086, %v1009
    %v1169 = vsel %vm1135, %v1089, %v1011
    %v1171 = vsel %vm1135, %v1092, %v1013
    %v1173 = vsel %vm1135, %v1095, %v1015
    %v1175 = vsel %vm1135, %v1098, %v1017
    %v1177 = vsel %vm1135, %v1101, %v1019
    %v1179 = vsel %vm1135, %v1104, %v1021
    %v1181 = vsel %vm1135, %v1107, %v1023
    %v1183 = vsel %vm1135, %v1110, %v1025
    %v1185 = vsel %vm1135, %v1113, %v1027
    %v1187 = vsel %vm1135, %v1116, %v1029
    %v1189 = vsel %vm1135, %v1119, %v1031
    %v1191 = vsel %vm1135, %v1122, %v1033
    %v1193 = vsel %vm1135, %v1125, %v1035
    %v1195 = vsel %vm1135, %v1128, %v1037
    %v1197 = vsel %vm1135, %v1131, %v1039
    %v1198 = vsel %vm1135, %v1134, %v1039
    %v1199 = vld [vmem:[%s3] sm:$0xf]
    %v1200 = vld [vmem:[%s3 + $0x4] sm:$0xf]
    %v1201 = vld [vmem:[%s3 + $0x8] sm:$0xf]
    %v1202 = vld [vmem:[%s3 + $0xc] sm:$0xf]
    %v1203 = vld [vmem:[%s3 + $0x10] sm:$0xf]
    %v1204 = vld [vmem:[%s3 + $0x14] sm:$0xf]
    %v1205 = vld [vmem:[%s3 + $0x18] sm:$0xf]
    %v1206 = vld [vmem:[%s3 + $0x1c] sm:$0xf]
    %v1207 = vld [vmem:[%s3 + $0x20] sm:$0xf]
    %v1208 = vld [vmem:[%s3 + $0x24] sm:$0xf]
    %v1209 = vld [vmem:[%s3 + $0x28] sm:$0xf]
    %v1210 = vld [vmem:[%s3 + $0x2c] sm:$0xf]
    %v1211 = vld [vmem:[%s4] sm:$0x1]
    %v1213 = vperm.slane %v1211, 0
    %v1247 = vunpack.c.l.b16 %v1137
    %v1248 = vunpack.c.l.b16 %v1139
    %v1249 = vunpack.c.l.b16 %v1141
    %v1250 = vunpack.c.l.b16 %v1143
    %v1251 = vunpack.c.l.b16 %v1145
    %v1252 = vunpack.c.l.b16 %v1147
    %v1253 = vunpack.c.l.b16 %v1149
    %v1254 = vunpack.c.l.b16 %v1151
    %v1255 = vunpack.c.l.b16 %v1153
    %v1256 = vunpack.c.l.b16 %v1155
    %v1257 = vunpack.c.l.b16 %v1157
    %v1258 = vunpack.c.l.b16 %v1159
    %v1259 = vunpack.c.l.b16 %v1161
    %v1260 = vunpack.c.l.b16 %v1163
    %v1261 = vunpack.c.l.b16 %v1165
    %v1262 = vunpack.c.l.b16 %v1167
    %v1263 = vunpack.c.l.b16 %v1169
    %v1264 = vunpack.c.l.b16 %v1171
    %v1265 = vunpack.c.l.b16 %v1173
    %v1266 = vunpack.c.l.b16 %v1175
    %v1267 = vunpack.c.l.b16 %v1177
    %v1268 = vunpack.c.l.b16 %v1179
    %v1269 = vunpack.c.l.b16 %v1181
    %v1270 = vunpack.c.l.b16 %v1183
    %v1271 = vunpack.c.l.b16 %v1185
    %v1272 = vunpack.c.l.b16 %v1187
    %v1273 = vunpack.c.l.b16 %v1189
    %v1274 = vunpack.c.l.b16 %v1191
    %v1275 = vunpack.c.l.b16 %v1193
    %v1276 = vunpack.c.l.b16 %v1195
    %v1277 = vunpack.c.l.b16 %v1197
    %v1278 = vunpack.c.l.b16 %v1198
    %v1279 = vpack.c.b16 %v1248, %v1247
    %v1280 = vpack.c.b16 %v1250, %v1249
    %v1281 = vpack.c.b16 %v1252, %v1251
    %v1282 = vpack.c.b16 %v1254, %v1253
    %v1283 = vpack.c.b16 %v1256, %v1255
    %v1284 = vpack.c.b16 %v1258, %v1257
    %v1285 = vpack.c.b16 %v1260, %v1259
    %v1286 = vpack.c.b16 %v1262, %v1261
    %v1287 = vpack.c.b16 %v1264, %v1263
    %v1288 = vpack.c.b16 %v1266, %v1265
    %v1289 = vpack.c.b16 %v1268, %v1267
    %v1290 = vpack.c.b16 %v1270, %v1269
    %v1291 = vpack.c.b16 %v1272, %v1271
    %v1292 = vpack.c.b16 %v1274, %v1273
    %v1293 = vpack.c.b16 %v1276, %v1275
    %v1294 = vpack.c.b16 %v1278, %v1277
    %v1307 = vunpack.c.l.b16 %v1199
    %v1308 = vunpack.c.l.b16 %v1200
    %v1309 = vunpack.c.l.b16 %v1201
    %v1310 = vunpack.c.l.b16 %v1202
    %v1311 = vunpack.c.l.b16 %v1203
    %v1312 = vunpack.c.l.b16 %v1204
    %v1313 = vunpack.c.l.b16 %v1205
    %v1314 = vunpack.c.l.b16 %v1206
    %v1315 = vunpack.c.l.b16 %v1207
    %v1316 = vunpack.c.l.b16 %v1208
    %v1317 = vunpack.c.l.b16 %v1209
    %v1318 = vunpack.c.l.b16 %v1210
    %v1319 = vpack.c.b16 %v1308, %v1307
    %v1320 = vpack.c.b16 %v1310, %v1309
    %v1321 = vpack.c.b16 %v1312, %v1311
    %v1322 = vpack.c.b16 %v1314, %v1313
    %v1323 = vpack.c.b16 %v1316, %v1315
    %v1324 = vpack.c.b16 %v1318, %v1317
    %vm1331 = vcmask 785408
    %v1333 = vsel %vm1331, %v1279, 0
    %v1336 = vsel %vm1331, %v1280, 0
    %v1339 = vsel %vm1331, %v1281, 0
    %v1342 = vsel %vm1331, %v1282, 0
    %v1345 = vsel %vm1331, %v1283, 0
    %v1348 = vsel %vm1331, %v1284, 0
    %v1351 = vsel %vm1331, %v1285, 0
    %v1354 = vsel %vm1331, %v1286, 0
    %v1357 = vsel %vm1331, %v1287, 0
    %v1360 = vsel %vm1331, %v1288, 0
    %v1363 = vsel %vm1331, %v1289, 0
    %v1366 = vsel %vm1331, %v1290, 0
    %v1369 = vsel %vm1331, %v1291, 0
    %v1372 = vsel %vm1331, %v1292, 0
    %v1375 = vsel %vm1331, %v1293, 0
    %v1378 = vsel %vm1331, %v1294, 0
    %1380 = vmatpush.bf16.msra.mxu0 0
    %1381 = vmatpush.bf16.msra.mxu0 0
    %1382 = vmatpush.bf16.msra.mxu0 %v1324
    %1383 = vmatpush.bf16.msra.mxu0 %v1323
    %1384 = vmatpush.bf16.msra.mxu0 %v1322
    %1385 = vmatpush.bf16.msra.mxu0 %v1321
    %1386 = vmatpush.bf16.msra.mxu0 %v1320
    %1387 = vmatpush.bf16.msra.mxu0 %v1319
    %1388 = vmatmul.bf16.gmra.mxu0 %v1333
    %v1389 = vpop.f32.mrf.mxu0
    %v1390 = vadd.f32 %v1213, %v1389
    %v1391 = vpop.f32.mrf.mxu0
    %v1392 = vadd.f32 %v1213, %v1391
    %1393 = vmatmul.bf16.gmra.mxu0 %v1336
    %v1394 = vpop.f32.mrf.mxu0
    %v1395 = vadd.f32 %v1213, %v1394
    %v1396 = vpop.f32.mrf.mxu0
    %v1397 = vadd.f32 %v1213, %v1396
    %1398 = vmatmul.bf16.gmra.mxu0 %v1339
    %v1399 = vpop.f32.mrf.mxu0
    %v1400 = vadd.f32 %v1213, %v1399
    %v1401 = vpop.f32.mrf.mxu0
    %v1402 = vadd.f32 %v1213, %v1401
    %1403 = vmatmul.bf16.gmra.mxu0 %v1342
    %v1404 = vpop.f32.mrf.mxu0
    %v1405 = vadd.f32 %v1213, %v1404
    %v1406 = vpop.f32.mrf.mxu0
    %v1407 = vadd.f32 %v1213, %v1406
    %1408 = vmatmul.bf16.gmra.mxu0 %v1345
    %v1409 = vpop.f32.mrf.mxu0
    %v1410 = vadd.f32 %v1213, %v1409
    %v1411 = vpop.f32.mrf.mxu0
    %v1412 = vadd.f32 %v1213, %v1411
    %1413 = vmatmul.bf16.gmra.mxu0 %v1348
    %v1414 = vpop.f32.mrf.mxu0
    %v1415 = vadd.f32 %v1213, %v1414
    %v1416 = vpop.f32.mrf.mxu0
    %v1417 = vadd.f32 %v1213, %v1416
    %1418 = vmatmul.bf16.gmra.mxu0 %v1351
    %v1419 = vpop.f32.mrf.mxu0
    %v1420 = vadd.f32 %v1213, %v1419
    %v1421 = vpop.f32.mrf.mxu0
    %v1422 = vadd.f32 %v1213, %v1421
    %1423 = vmatmul.bf16.gmra.mxu0 %v1354
    %v1424 = vpop.f32.mrf.mxu0
    %v1425 = vadd.f32 %v1213, %v1424
    %v1426 = vpop.f32.mrf.mxu0
    %v1427 = vadd.f32 %v1213, %v1426
    %1428 = vmatmul.bf16.gmra.mxu0 %v1357
    %v1429 = vpop.f32.mrf.mxu0
    %v1430 = vadd.f32 %v1213, %v1429
    %v1431 = vpop.f32.mrf.mxu0
    %v1432 = vadd.f32 %v1213, %v1431
    %1433 = vmatmul.bf16.gmra.mxu0 %v1360
    %v1434 = vpop.f32.mrf.mxu0
    %v1435 = vadd.f32 %v1213, %v1434
    %v1436 = vpop.f32.mrf.mxu0
    %v1437 = vadd.f32 %v1213, %v1436
    %1438 = vmatmul.bf16.gmra.mxu0 %v1363
    %v1439 = vpop.f32.mrf.mxu0
    %v1440 = vadd.f32 %v1213, %v1439
    %v1441 = vpop.f32.mrf.mxu0
    %v1442 = vadd.f32 %v1213, %v1441
    %1443 = vmatmul.bf16.gmra.mxu0 %v1366
    %v1444 = vpop.f32.mrf.mxu0
    %v1445 = vadd.f32 %v1213, %v1444
    %v1446 = vpop.f32.mrf.mxu0
    %v1447 = vadd.f32 %v1213, %v1446
    %1448 = vmatmul.bf16.gmra.mxu0 %v1369
    %v1449 = vpop.f32.mrf.mxu0
    %v1450 = vadd.f32 %v1213, %v1449
    %v1451 = vpop.f32.mrf.mxu0
    %v1452 = vadd.f32 %v1213, %v1451
    %1453 = vmatmul.bf16.gmra.mxu0 %v1372
    %v1454 = vpop.f32.mrf.mxu0
    %v1455 = vadd.f32 %v1213, %v1454
    %v1456 = vpop.f32.mrf.mxu0
    %v1457 = vadd.f32 %v1213, %v1456
    %1458 = vmatmul.bf16.gmra.mxu0 %v1375
    %v1459 = vpop.f32.mrf.mxu0
    %v1460 = vadd.f32 %v1213, %v1459
    %v1461 = vpop.f32.mrf.mxu0
    %v1462 = vadd.f32 %v1213, %v1461
    %1463 = vmatmul.bf16.gmra.mxu0 %v1378
    %v1464 = vpop.f32.mrf.mxu0
    %v1465 = vadd.f32 %v1213, %v1464
    %v1466 = vpop.f32.mrf.mxu0
    %v1467 = vadd.f32 %v1213, %v1466
    %1468 = vdwg.mxu0
    %v1469 = vadd.f32 %v1390, 0.0
    %v1470 = vadd.f32 %v1392, %v1395
    %v1471 = vadd.f32 %v1397, %v1400
    %v1472 = vadd.f32 %v1402, %v1405
    %v1473 = vadd.f32 %v1407, %v1410
    %v1474 = vadd.f32 %v1412, %v1415
    %v1475 = vadd.f32 %v1417, %v1420
    %v1476 = vadd.f32 %v1422, %v1425
    %v1477 = vadd.f32 %v1427, %v1430
    %v1478 = vadd.f32 %v1432, %v1435
    %v1479 = vadd.f32 %v1437, %v1440
    %v1480 = vadd.f32 %v1442, %v1445
    %v1481 = vadd.f32 %v1447, %v1450
    %v1482 = vadd.f32 %v1452, %v1455
    %v1483 = vadd.f32 %v1457, %v1460
    %v1484 = vadd.f32 %v1462, %v1465
    %v1485 = vadd.f32 %v1469, %v1392
    %v1486 = vadd.f32 %v1470, %v1397
    %v1487 = vadd.f32 %v1471, %v1402
    %v1488 = vadd.f32 %v1472, %v1407
    %v1489 = vadd.f32 %v1473, %v1412
    %v1490 = vadd.f32 %v1474, %v1417
    %v1491 = vadd.f32 %v1475, %v1422
    %v1492 = vadd.f32 %v1476, %v1427
    %v1493 = vadd.f32 %v1477, %v1432
    %v1494 = vadd.f32 %v1478, %v1437
    %v1495 = vadd.f32 %v1479, %v1442
    %v1496 = vadd.f32 %v1480, %v1447
    %v1497 = vadd.f32 %v1481, %v1452
    %v1498 = vadd.f32 %v1482, %v1457
    %v1499 = vadd.f32 %v1483, %v1462
    %v1500 = vadd.f32 %v1484, %v1467
    %v1501 = vmul.f32 %v1485, 0.33333334
    %v1502 = vmul.f32 %v1486, 0.33333334
    %v1503 = vmul.f32 %v1487, 0.33333334
    %v1504 = vmul.f32 %v1488, 0.33333334
    %v1505 = vmul.f32 %v1489, 0.33333334
    %v1506 = vmul.f32 %v1490, 0.33333334
    %v1507 = vmul.f32 %v1491, 0.33333334
    %v1508 = vmul.f32 %v1492, 0.33333334
    %v1509 = vmul.f32 %v1493, 0.33333334
    %v1510 = vmul.f32 %v1494, 0.33333334
    %v1511 = vmul.f32 %v1495, 0.33333334
    %v1512 = vmul.f32 %v1496, 0.33333334
    %v1513 = vmul.f32 %v1497, 0.33333334
    %v1514 = vmul.f32 %v1498, 0.33333334
    %v1515 = vmul.f32 %v1499, 0.33333334
    %v1516 = vmul.f32 %v1500, 0.33333334
    %v1517 = vld [vmem:[%s5] sm:$0x1]
    %v1519 = vperm.slane %v1517, 0
    %v1521 = vadd.f32 %v1501, %v1519
    %v1522 = vadd.f32 %v1502, %v1519
    %v1523 = vadd.f32 %v1503, %v1519
    %v1524 = vadd.f32 %v1504, %v1519
    %v1525 = vadd.f32 %v1505, %v1519
    %v1526 = vadd.f32 %v1506, %v1519
    %v1527 = vadd.f32 %v1507, %v1519
    %v1528 = vadd.f32 %v1508, %v1519
    %v1529 = vadd.f32 %v1509, %v1519
    %v1530 = vadd.f32 %v1510, %v1519
    %v1531 = vadd.f32 %v1511, %v1519
    %v1532 = vadd.f32 %v1512, %v1519
    %v1533 = vadd.f32 %v1513, %v1519
    %v1534 = vadd.f32 %v1514, %v1519
    %v1535 = vadd.f32 %v1515, %v1519
    %v1536 = vadd.f32 %v1516, %v1519
    %v1537 = vmax.f32 %v1521, 0.0
    %v1538 = vmax.f32 %v1522, 0.0
    %v1539 = vmax.f32 %v1523, 0.0
    %v1540 = vmax.f32 %v1524, 0.0
    %v1541 = vmax.f32 %v1525, 0.0
    %v1542 = vmax.f32 %v1526, 0.0
    %v1543 = vmax.f32 %v1527, 0.0
    %v1544 = vmax.f32 %v1528, 0.0
    %v1545 = vmax.f32 %v1529, 0.0
    %v1546 = vmax.f32 %v1530, 0.0
    %v1547 = vmax.f32 %v1531, 0.0
    %v1548 = vmax.f32 %v1532, 0.0
    %v1549 = vmax.f32 %v1533, 0.0
    %v1550 = vmax.f32 %v1534, 0.0
    %v1551 = vmax.f32 %v1535, 0.0
    %v1552 = vmax.f32 %v1536, 0.0
    %v1553 = vpack.c.bf16 %v1537, %v1537
    %v1554 = vpack.c.bf16 %v1538, %v1538
    %v1555 = vpack.c.bf16 %v1539, %v1539
    %v1556 = vpack.c.bf16 %v1540, %v1540
    %v1557 = vpack.c.bf16 %v1541, %v1541
    %v1558 = vpack.c.bf16 %v1542, %v1542
    %v1559 = vpack.c.bf16 %v1543, %v1543
    %v1560 = vpack.c.bf16 %v1544, %v1544
    %v1561 = vpack.c.bf16 %v1545, %v1545
    %v1562 = vpack.c.bf16 %v1546, %v1546
    %v1563 = vpack.c.bf16 %v1547, %v1547
    %v1564 = vpack.c.bf16 %v1548, %v1548
    %v1565 = vpack.c.bf16 %v1549, %v1549
    %v1566 = vpack.c.bf16 %v1550, %v1550
    %v1567 = vpack.c.bf16 %v1551, %v1551
    %v1568 = vpack.c.bf16 %v1552, %v1552
    %v1585 = vunpack.c.l.b16 %v1553
    %v1586 = vunpack.c.l.b16 %v1554
    %v1587 = vunpack.c.l.b16 %v1555
    %v1588 = vunpack.c.l.b16 %v1556
    %v1589 = vunpack.c.l.b16 %v1557
    %v1590 = vunpack.c.l.b16 %v1558
    %v1591 = vunpack.c.l.b16 %v1559
    %v1592 = vunpack.c.l.b16 %v1560
    %v1593 = vunpack.c.l.b16 %v1561
    %v1594 = vunpack.c.l.b16 %v1562
    %v1595 = vunpack.c.l.b16 %v1563
    %v1596 = vunpack.c.l.b16 %v1564
    %v1597 = vunpack.c.l.b16 %v1565
    %v1598 = vunpack.c.l.b16 %v1566
    %v1599 = vunpack.c.l.b16 %v1567
    %v1600 = vunpack.c.l.b16 %v1568
    %v1601 = vpack.c.b16 %v1585, %v1585
    %v1602 = vpack.c.b16 %v1586, %v1586
    %v1603 = vpack.c.b16 %v1587, %v1587
    %v1604 = vpack.c.b16 %v1588, %v1588
    %v1605 = vpack.c.b16 %v1589, %v1589
    %v1606 = vpack.c.b16 %v1590, %v1590
    %v1607 = vpack.c.b16 %v1591, %v1591
    %v1608 = vpack.c.b16 %v1592, %v1592
    %v1609 = vpack.c.b16 %v1593, %v1593
    %v1610 = vpack.c.b16 %v1594, %v1594
    %v1611 = vpack.c.b16 %v1595, %v1595
    %v1612 = vpack.c.b16 %v1596, %v1596
    %v1613 = vpack.c.b16 %v1597, %v1597
    %v1614 = vpack.c.b16 %v1598, %v1598
    %v1615 = vpack.c.b16 %v1599, %v1599
    %v1616 = vpack.c.b16 %v1600, %v1600
    %1617 = vrot.lane.b32.xlu0 %v1601, 64
    %v1618 = vpop.permute.xlu0 %1617
    %1619 = vrot.lane.b32.xlu0 %v1602, 64
    %v1620 = vpop.permute.xlu0 %1619
    %1621 = vrot.lane.b32.xlu0 %v1603, 64
    %v1622 = vpop.permute.xlu0 %1621
    %1623 = vrot.lane.b32.xlu0 %v1604, 64
    %v1624 = vpop.permute.xlu0 %1623
    %1625 = vrot.lane.b32.xlu0 %v1605, 64
    %v1626 = vpop.permute.xlu0 %1625
    %1627 = vrot.lane.b32.xlu0 %v1606, 64
    %v1628 = vpop.permute.xlu0 %1627
    %1629 = vrot.lane.b32.xlu0 %v1607, 64
    %v1630 = vpop.permute.xlu0 %1629
    %1631 = vrot.lane.b32.xlu0 %v1608, 64
    %v1632 = vpop.permute.xlu0 %1631
    %1633 = vrot.lane.b32.xlu0 %v1609, 64
    %v1634 = vpop.permute.xlu0 %1633
    %1635 = vrot.lane.b32.xlu0 %v1610, 64
    %v1636 = vpop.permute.xlu0 %1635
    %1637 = vrot.lane.b32.xlu0 %v1611, 64
    %v1638 = vpop.permute.xlu0 %1637
    %1639 = vrot.lane.b32.xlu0 %v1612, 64
    %v1640 = vpop.permute.xlu0 %1639
    %1641 = vrot.lane.b32.xlu0 %v1613, 64
    %v1642 = vpop.permute.xlu0 %1641
    %1643 = vrot.lane.b32.xlu0 %v1614, 64
    %v1644 = vpop.permute.xlu0 %1643
    %1645 = vrot.lane.b32.xlu0 %v1615, 64
    %v1646 = vpop.permute.xlu0 %1645
    %1647 = vrot.lane.b32.xlu0 %v1616, 64
    %v1648 = vpop.permute.xlu0 %1647
    %v1650 = vsel %vm1135, 0, %v1618
    %v1652 = vsel %vm1135, 0, %v1620
    %v1655 = vsel %vm1135, %v1553, %v1622
    %v1658 = vsel %vm1135, %v1554, %v1624
    %v1661 = vsel %vm1135, %v1555, %v1626
    %v1664 = vsel %vm1135, %v1556, %v1628
    %v1667 = vsel %vm1135, %v1557, %v1630
    %v1670 = vsel %vm1135, %v1558, %v1632
    %v1673 = vsel %vm1135, %v1559, %v1634
    %v1676 = vsel %vm1135, %v1560, %v1636
    %v1679 = vsel %vm1135, %v1561, %v1638
    %v1682 = vsel %vm1135, %v1562, %v1640
    %v1685 = vsel %vm1135, %v1563, %v1642
    %v1688 = vsel %vm1135, %v1564, %v1644
    %v1691 = vsel %vm1135, %v1565, %v1646
    %v1694 = vsel %vm1135, %v1566, %v1648
    %v1711 = vunpack.c.l.b16 %v1650
    %v1712 = vunpack.c.l.b16 %v1652
    %v1713 = vunpack.c.l.b16 %v1655
    %v1714 = vunpack.c.l.b16 %v1658
    %v1715 = vunpack.c.l.b16 %v1661
    %v1716 = vunpack.c.l.b16 %v1664
    %v1717 = vunpack.c.l.b16 %v1667
    %v1718 = vunpack.c.l.b16 %v1670
    %v1719 = vunpack.c.l.b16 %v1673
    %v1720 = vunpack.c.l.b16 %v1676
    %v1721 = vunpack.c.l.b16 %v1679
    %v1722 = vunpack.c.l.b16 %v1682
    %v1723 = vunpack.c.l.b16 %v1685
    %v1724 = vunpack.c.l.b16 %v1688
    %v1725 = vunpack.c.l.b16 %v1691
    %v1726 = vunpack.c.l.b16 %v1694
    %v1727 = vld [vmem:[%s6] sm:$0xf]
    %v1728 = vld [vmem:[%s6 + $0x4] sm:$0xf]
    %v1729 = vld [vmem:[%s6 + $0x8] sm:$0xf]
    %v1730 = vld [vmem:[%s6 + $0xc] sm:$0xf]
    %v1731 = vld [vmem:[%s6 + $0x10] sm:$0xf]
    %v1732 = vld [vmem:[%s6 + $0x14] sm:$0xf]
    %v1733 = vld [vmem:[%s6 + $0x18] sm:$0xf]
    %v1734 = vld [vmem:[%s6 + $0x1c] sm:$0xf]
    %v1735 = vld [vmem:[%s6 + $0x20] sm:$0xf]
    %v1736 = vld [vmem:[%s6 + $0x24] sm:$0xf]
    %v1737 = vld [vmem:[%s6 + $0x28] sm:$0xf]
    %v1738 = vld [vmem:[%s6 + $0x2c] sm:$0xf]
    %v1739 = vld [vmem:[%s6 + $0x30] sm:$0xf]
    %v1740 = vld [vmem:[%s6 + $0x34] sm:$0xf]
    %v1741 = vld [vmem:[%s6 + $0x38] sm:$0xf]
    %v1742 = vld [vmem:[%s6 + $0x3c] sm:$0xf]
    %v1743 = vld [vmem:[%s6 + $0x40] sm:$0xf]
    %v1744 = vld [vmem:[%s6 + $0x44] sm:$0xf]
    %v1745 = vld [vmem:[%s6 + $0x48] sm:$0xf]
    %v1746 = vld [vmem:[%s6 + $0x4c] sm:$0xf]
    %v1747 = vld [vmem:[%s6 + $0x50] sm:$0xf]
    %v1748 = vld [vmem:[%s6 + $0x54] sm:$0xf]
    %v1749 = vld [vmem:[%s6 + $0x58] sm:$0xf]
    %v1750 = vld [vmem:[%s6 + $0x5c] sm:$0xf]
    %v1751 = vld [vmem:[%s7] sm:$0x1]
    %v1753 = vperm.slane %v1751, 0
    %v1755 = vpack.c.b16 %v1712, %v1711
    %v1756 = vpack.c.b16 %v1588, %v1587
    %v1757 = vpack.c.b16 %v1714, %v1713
    %v1758 = vpack.c.b16 %v1590, %v1589
    %v1759 = vpack.c.b16 %v1716, %v1715
    %v1760 = vpack.c.b16 %v1592, %v1591
    %v1761 = vpack.c.b16 %v1718, %v1717
    %v1762 = vpack.c.b16 %v1594, %v1593
    %v1763 = vpack.c.b16 %v1720, %v1719
    %v1764 = vpack.c.b16 %v1596, %v1595
    %v1765 = vpack.c.b16 %v1722, %v1721
    %v1766 = vpack.c.b16 %v1598, %v1597
    %v1767 = vpack.c.b16 %v1724, %v1723
    %v1768 = vpack.c.b16 %v1600, %v1599
    %v1769 = vpack.c.b16 %v1726, %v1725
    %v1802 = vunpack.c.l.b16 %v1727
    %v1803 = vunpack.c.l.b16 %v1728
    %v1804 = vunpack.c.l.b16 %v1729
    %v1805 = vunpack.c.l.b16 %v1730
    %v1806 = vunpack.c.l.b16 %v1731
    %v1807 = vunpack.c.l.b16 %v1732
    %v1808 = vunpack.c.l.b16 %v1733
    %v1809 = vunpack.c.l.b16 %v1734
    %v1810 = vunpack.c.l.b16 %v1735
    %v1811 = vunpack.c.l.b16 %v1736
    %v1812 = vunpack.c.l.b16 %v1737
    %v1813 = vunpack.c.l.b16 %v1738
    %v1814 = vunpack.c.l.b16 %v1739
    %v1815 = vunpack.c.l.b16 %v1740
    %v1816 = vunpack.c.l.b16 %v1741
    %v1817 = vunpack.c.l.b16 %v1742
    %v1818 = vunpack.c.l.b16 %v1743
    %v1819 = vunpack.c.l.b16 %v1744
    %v1820 = vunpack.c.l.b16 %v1745
    %v1821 = vunpack.c.l.b16 %v1746
    %v1822 = vunpack.c.l.b16 %v1747
    %v1823 = vunpack.c.l.b16 %v1748
    %v1824 = vunpack.c.l.b16 %v1749
    %v1825 = vunpack.c.l.b16 %v1750
    %v1826 = vpack.c.b16 %v1803, %v1802
    %v1827 = vpack.c.b16 %v1805, %v1804
    %v1828 = vpack.c.b16 %v1807, %v1806
    %v1829 = vpack.c.b16 %v1809, %v1808
    %v1830 = vpack.c.b16 %v1811, %v1810
    %v1831 = vpack.c.b16 %v1813, %v1812
    %v1832 = vpack.c.b16 %v1815, %v1814
    %v1833 = vpack.c.b16 %v1817, %v1816
    %v1834 = vpack.c.b16 %v1819, %v1818
    %v1835 = vpack.c.b16 %v1821, %v1820
    %v1836 = vpack.c.b16 %v1823, %v1822
    %v1837 = vpack.c.b16 %v1825, %v1824
    %v1851 = vsel %vm1135, %v1756, 0
    %v1854 = vsel %vm1135, %v1758, 0
    %v1857 = vsel %vm1135, %v1760, 0
    %v1860 = vsel %vm1135, %v1762, 0
    %v1863 = vsel %vm1135, %v1764, 0
    %v1866 = vsel %vm1135, %v1766, 0
    %v1869 = vsel %vm1135, %v1768, 0
    %v1872 = vsel %vm1135, %v298, 0
    %1874 = vmatpush.bf16.msra.mxu0 %v1833
    %1875 = vmatpush.bf16.msra.mxu0 %v1832
    %1876 = vmatpush.bf16.msra.mxu0 %v1831
    %1877 = vmatpush.bf16.msra.mxu0 %v1830
    %1878 = vmatpush.bf16.msra.mxu0 %v1829
    %1879 = vmatpush.bf16.msra.mxu0 %v1828
    %1880 = vmatpush.bf16.msra.mxu0 %v1827
    %1881 = vmatpush.bf16.msra.mxu0 %v1826
    %1882 = vmatmul.bf16.gmra.mxu0 %v1755
    %v1883 = vpop.f32.mrf.mxu0
    %v1884 = vadd.f32 %v1753, %v1883
    %v1885 = vpop.f32.mrf.mxu0
    %v1886 = vadd.f32 %v1753, %v1885
    %1887 = vmatmul.bf16.gmra.mxu0 %v1757
    %v1888 = vpop.f32.mrf.mxu0
    %v1889 = vadd.f32 %v1753, %v1888
    %v1890 = vpop.f32.mrf.mxu0
    %v1891 = vadd.f32 %v1753, %v1890
    %1892 = vmatmul.bf16.gmra.mxu0 %v1759
    %v1893 = vpop.f32.mrf.mxu0
    %v1894 = vadd.f32 %v1753, %v1893
    %v1895 = vpop.f32.mrf.mxu0
    %v1896 = vadd.f32 %v1753, %v1895
    %1897 = vmatmul.bf16.gmra.mxu0 %v1761
    %v1898 = vpop.f32.mrf.mxu0
    %v1899 = vadd.f32 %v1753, %v1898
    %v1900 = vpop.f32.mrf.mxu0
    %v1901 = vadd.f32 %v1753, %v1900
    %1902 = vmatmul.bf16.gmra.mxu0 %v1763
    %v1903 = vpop.f32.mrf.mxu0
    %v1904 = vadd.f32 %v1753, %v1903
    %v1905 = vpop.f32.mrf.mxu0
    %v1906 = vadd.f32 %v1753, %v1905
    %1907 = vmatmul.bf16.gmra.mxu0 %v1765
    %v1908 = vpop.f32.mrf.mxu0
    %v1909 = vadd.f32 %v1753, %v1908
    %v1910 = vpop.f32.mrf.mxu0
    %v1911 = vadd.f32 %v1753, %v1910
    %1912 = vmatmul.bf16.gmra.mxu0 %v1767
    %v1913 = vpop.f32.mrf.mxu0
    %v1914 = vadd.f32 %v1753, %v1913
    %v1915 = vpop.f32.mrf.mxu0
    %v1916 = vadd.f32 %v1753, %v1915
    %1917 = vmatmul.bf16.gmra.mxu0 %v1769
    %v1918 = vpop.f32.mrf.mxu0
    %v1919 = vadd.f32 %v1753, %v1918
    %v1920 = vpop.f32.mrf.mxu0
    %v1921 = vadd.f32 %v1753, %v1920
    %1922 = vdwg.mxu0
    %1923 = vmatpush.bf16.msra.mxu0 0
    %1924 = vmatpush.bf16.msra.mxu0 0
    %1925 = vmatpush.bf16.msra.mxu0 0
    %1926 = vmatpush.bf16.msra.mxu0 0
    %1927 = vmatpush.bf16.msra.mxu0 %v1837
    %1928 = vmatpush.bf16.msra.mxu0 %v1836
    %1929 = vmatpush.bf16.msra.mxu0 %v1835
    %1930 = vmatpush.bf16.msra.mxu0 %v1834
    %1931 = vmatmul.bf16.gmra.mxu0 %v1851
    %v1932 = vpop.f32.mrf.mxu0
    %v1933 = vadd.f32 %v1884, %v1932
    %v1934 = vpop.f32.mrf.mxu0
    %v1935 = vadd.f32 %v1886, %v1934
    %1936 = vmatmul.bf16.gmra.mxu0 %v1854
    %v1937 = vpop.f32.mrf.mxu0
    %v1938 = vadd.f32 %v1889, %v1937
    %v1939 = vpop.f32.mrf.mxu0
    %v1940 = vadd.f32 %v1891, %v1939
    %1941 = vmatmul.bf16.gmra.mxu0 %v1857
    %v1942 = vpop.f32.mrf.mxu0
    %v1943 = vadd.f32 %v1894, %v1942
    %v1944 = vpop.f32.mrf.mxu0
    %v1945 = vadd.f32 %v1896, %v1944
    %1946 = vmatmul.bf16.gmra.mxu0 %v1860
    %v1947 = vpop.f32.mrf.mxu0
    %v1948 = vadd.f32 %v1899, %v1947
    %v1949 = vpop.f32.mrf.mxu0
    %v1950 = vadd.f32 %v1901, %v1949
    %1951 = vmatmul.bf16.gmra.mxu0 %v1863
    %v1952 = vpop.f32.mrf.mxu0
    %v1953 = vadd.f32 %v1904, %v1952
    %v1954 = vpop.f32.mrf.mxu0
    %v1955 = vadd.f32 %v1906, %v1954
    %1956 = vmatmul.bf16.gmra.mxu0 %v1866
    %v1957 = vpop.f32.mrf.mxu0
    %v1958 = vadd.f32 %v1909, %v1957
    %v1959 = vpop.f32.mrf.mxu0
    %v1960 = vadd.f32 %v1911, %v1959
    %1961 = vmatmul.bf16.gmra.mxu0 %v1869
    %v1962 = vpop.f32.mrf.mxu0
    %v1963 = vadd.f32 %v1914, %v1962
    %v1964 = vpop.f32.mrf.mxu0
    %v1965 = vadd.f32 %v1916, %v1964
    %1966 = vmatmul.bf16.gmra.mxu0 %v1872
    %v1967 = vpop.f32.mrf.mxu0
    %v1968 = vadd.f32 %v1919, %v1967
    %v1969 = vpop.f32.mrf.mxu0
    %v1970 = vadd.f32 %v1921, %v1969
    %1971 = vdwg.mxu0
    %v1972 = vmax.f32 %v1933, 0.0
    %v1973 = vmax.f32 %v1935, 0.0
    %v1974 = vmax.f32 %v1938, 0.0
    %v1975 = vmax.f32 %v1940, 0.0
    %v1976 = vmax.f32 %v1943, 0.0
    %v1977 = vmax.f32 %v1945, 0.0
    %v1978 = vmax.f32 %v1948, 0.0
    %v1979 = vmax.f32 %v1950, 0.0
    %v1980 = vmax.f32 %v1953, 0.0
    %v1981 = vmax.f32 %v1955, 0.0
    %v1982 = vmax.f32 %v1958, 0.0
    %v1983 = vmax.f32 %v1960, 0.0
    %v1984 = vmax.f32 %v1963, 0.0
    %v1985 = vmax.f32 %v1965, 0.0
    %v1986 = vmax.f32 %v1968, 0.0
    %v1987 = vmax.f32 %v1970, 0.0
    %v1988 = vpack.c.bf16 %v1972, %v1972
    %v1989 = vpack.c.bf16 %v1973, %v1973
    %v1990 = vpack.c.bf16 %v1974, %v1974
    %v1991 = vpack.c.bf16 %v1975, %v1975
    %v1992 = vpack.c.bf16 %v1976, %v1976
    %v1993 = vpack.c.bf16 %v1977, %v1977
    %v1994 = vpack.c.bf16 %v1978, %v1978
    %v1995 = vpack.c.bf16 %v1979, %v1979
    %v1996 = vpack.c.bf16 %v1980, %v1980
    %v1997 = vpack.c.bf16 %v1981, %v1981
    %v1998 = vpack.c.bf16 %v1982, %v1982
    %v1999 = vpack.c.bf16 %v1983, %v1983
    %v2000 = vpack.c.bf16 %v1984, %v1984
    %v2001 = vpack.c.bf16 %v1985, %v1985
    %v2002 = vpack.c.bf16 %v1986, %v1986
    %v2003 = vpack.c.bf16 %v1987, %v1987
    %v2020 = vunpack.c.l.b16 %v1988
    %v2021 = vunpack.c.l.b16 %v1989
    %v2022 = vunpack.c.l.b16 %v1990
    %v2023 = vunpack.c.l.b16 %v1991
    %v2024 = vunpack.c.l.b16 %v1992
    %v2025 = vunpack.c.l.b16 %v1993
    %v2026 = vunpack.c.l.b16 %v1994
    %v2027 = vunpack.c.l.b16 %v1995
    %v2028 = vunpack.c.l.b16 %v1996
    %v2029 = vunpack.c.l.b16 %v1997
    %v2030 = vunpack.c.l.b16 %v1998
    %v2031 = vunpack.c.l.b16 %v1999
    %v2032 = vunpack.c.l.b16 %v2000
    %v2033 = vunpack.c.l.b16 %v2001
    %v2034 = vunpack.c.l.b16 %v2002
    %v2035 = vunpack.c.l.b16 %v2003
    %v2036 = vpack.c.b16 %v2020, %v2020
    %v2037 = vpack.c.b16 %v2021, %v2021
    %v2038 = vpack.c.b16 %v2022, %v2022
    %v2039 = vpack.c.b16 %v2023, %v2023
    %v2040 = vpack.c.b16 %v2024, %v2024
    %v2041 = vpack.c.b16 %v2025, %v2025
    %v2042 = vpack.c.b16 %v2026, %v2026
    %v2043 = vpack.c.b16 %v2027, %v2027
    %v2044 = vpack.c.b16 %v2028, %v2028
    %v2045 = vpack.c.b16 %v2029, %v2029
    %v2046 = vpack.c.b16 %v2030, %v2030
    %v2047 = vpack.c.b16 %v2031, %v2031
    %v2048 = vpack.c.b16 %v2032, %v2032
    %v2049 = vpack.c.b16 %v2033, %v2033
    %v2050 = vpack.c.b16 %v2034, %v2034
    %v2051 = vpack.c.b16 %v2035, %v2035
    %2052 = vrot.lane.b32.xlu0 %v2036, 64
    %v2053 = vpop.permute.xlu0 %2052
    %2054 = vrot.lane.b32.xlu0 %v2037, 64
    %v2055 = vpop.permute.xlu0 %2054
    %2056 = vrot.lane.b32.xlu0 %v2038, 64
    %v2057 = vpop.permute.xlu0 %2056
    %2058 = vrot.lane.b32.xlu0 %v2039, 64
    %v2059 = vpop.permute.xlu0 %2058
    %2060 = vrot.lane.b32.xlu0 %v2040, 64
    %v2061 = vpop.permute.xlu0 %2060
    %2062 = vrot.lane.b32.xlu0 %v2041, 64
    %v2063 = vpop.permute.xlu0 %2062
    %2064 = vrot.lane.b32.xlu0 %v2042, 64
    %v2065 = vpop.permute.xlu0 %2064
    %2066 = vrot.lane.b32.xlu0 %v2043, 64
    %v2067 = vpop.permute.xlu0 %2066
    %2068 = vrot.lane.b32.xlu0 %v2044, 64
    %v2069 = vpop.permute.xlu0 %2068
    %2070 = vrot.lane.b32.xlu0 %v2045, 64
    %v2071 = vpop.permute.xlu0 %2070
    %2072 = vrot.lane.b32.xlu0 %v2046, 64
    %v2073 = vpop.permute.xlu0 %2072
    %2074 = vrot.lane.b32.xlu0 %v2047, 64
    %v2075 = vpop.permute.xlu0 %2074
    %2076 = vrot.lane.b32.xlu0 %v2048, 64
    %v2077 = vpop.permute.xlu0 %2076
    %2078 = vrot.lane.b32.xlu0 %v2049, 64
    %v2079 = vpop.permute.xlu0 %2078
    %2080 = vrot.lane.b32.xlu0 %v2050, 64
    %v2081 = vpop.permute.xlu0 %2080
    %2082 = vrot.lane.b32.xlu0 %v2051, 64
    %v2083 = vpop.permute.xlu0 %2082
    %v2085 = vsel %vm1135, 0, %v2053
    %v2087 = vsel %vm1135, 0, %v2055
    %v2090 = vsel %vm1135, %v1988, %v2057
    %v2093 = vsel %vm1135, %v1989, %v2059
    %v2096 = vsel %vm1135, %v1990, %v2061
    %v2099 = vsel %vm1135, %v1991, %v2063
    %v2102 = vsel %vm1135, %v1992, %v2065
    %v2105 = vsel %vm1135, %v1993, %v2067
    %v2108 = vsel %vm1135, %v1994, %v2069
    %v2111 = vsel %vm1135, %v1995, %v2071
    %v2114 = vsel %vm1135, %v1996, %v2073
    %v2117 = vsel %vm1135, %v1997, %v2075
    %v2120 = vsel %vm1135, %v1998, %v2077
    %v2123 = vsel %vm1135, %v1999, %v2079
    %v2126 = vsel %vm1135, %v2000, %v2081
    %v2129 = vsel %vm1135, %v2001, %v2083
    %v2146 = vunpack.c.l.b16 %v2085
    %v2147 = vunpack.c.l.b16 %v2087
    %v2148 = vunpack.c.l.b16 %v2090
    %v2149 = vunpack.c.l.b16 %v2093
    %v2150 = vunpack.c.l.b16 %v2096
    %v2151 = vunpack.c.l.b16 %v2099
    %v2152 = vunpack.c.l.b16 %v2102
    %v2153 = vunpack.c.l.b16 %v2105
    %v2154 = vunpack.c.l.b16 %v2108
    %v2155 = vunpack.c.l.b16 %v2111
    %v2156 = vunpack.c.l.b16 %v2114
    %v2157 = vunpack.c.l.b16 %v2117
    %v2158 = vunpack.c.l.b16 %v2120
    %v2159 = vunpack.c.l.b16 %v2123
    %v2160 = vunpack.c.l.b16 %v2126
    %v2161 = vunpack.c.l.b16 %v2129
    %v2162 = vld [vmem:[#allocation2] sm:$0xf]
    %v2163 = vld [vmem:[#allocation2 + $0x4] sm:$0xf]
    %v2164 = vld [vmem:[#allocation2 + $0x8] sm:$0xf]
    %v2165 = vld [vmem:[#allocation2 + $0xc] sm:$0xf]
    %v2166 = vld [vmem:[#allocation2 + $0x10] sm:$0xf]
    %v2167 = vld [vmem:[#allocation2 + $0x14] sm:$0xf]
    %v2168 = vld [vmem:[#allocation2 + $0x18] sm:$0xf]
    %v2169 = vld [vmem:[#allocation2 + $0x1c] sm:$0xf]
    %v2170 = vld [vmem:[#allocation2 + $0x20] sm:$0xf]
    %v2171 = vld [vmem:[#allocation2 + $0x24] sm:$0xf]
    %v2172 = vld [vmem:[#allocation2 + $0x28] sm:$0xf]
    %v2173 = vld [vmem:[#allocation2 + $0x2c] sm:$0xf]
    %v2174 = vld [vmem:[#allocation2 + $0x30] sm:$0xf]
    %v2175 = vld [vmem:[#allocation2 + $0x34] sm:$0xf]
    %v2176 = vld [vmem:[#allocation2 + $0x38] sm:$0xf]
    %v2177 = vld [vmem:[#allocation2 + $0x3c] sm:$0xf]
    %v2178 = vld [vmem:[#allocation2 + $0x40] sm:$0xf]
    %v2179 = vld [vmem:[#allocation2 + $0x44] sm:$0xf]
    %v2180 = vld [vmem:[#allocation2 + $0x48] sm:$0xf]
    %v2181 = vld [vmem:[#allocation2 + $0x4c] sm:$0xf]
    %v2182 = vld [vmem:[#allocation2 + $0x50] sm:$0xf]
    %v2183 = vld [vmem:[#allocation2 + $0x54] sm:$0xf]
    %v2184 = vld [vmem:[#allocation2 + $0x58] sm:$0xf]
    %v2185 = vld [vmem:[#allocation2 + $0x5c] sm:$0xf]
    %v2186 = vld [vmem:[%s9] sm:$0x1]
    %v2188 = vperm.slane %v2186, 0
    %v2190 = vpack.c.b16 %v2147, %v2146
    %v2191 = vpack.c.b16 %v2023, %v2022
    %v2192 = vpack.c.b16 %v2149, %v2148
    %v2193 = vpack.c.b16 %v2025, %v2024
    %v2194 = vpack.c.b16 %v2151, %v2150
    %v2195 = vpack.c.b16 %v2027, %v2026
    %v2196 = vpack.c.b16 %v2153, %v2152
    %v2197 = vpack.c.b16 %v2029, %v2028
    %v2198 = vpack.c.b16 %v2155, %v2154
    %v2199 = vpack.c.b16 %v2031, %v2030
    %v2200 = vpack.c.b16 %v2157, %v2156
    %v2201 = vpack.c.b16 %v2033, %v2032
    %v2202 = vpack.c.b16 %v2159, %v2158
    %v2203 = vpack.c.b16 %v2035, %v2034
    %v2204 = vpack.c.b16 %v2161, %v2160
    %v2237 = vunpack.c.l.b16 %v2162
    %v2238 = vunpack.c.l.b16 %v2163
    %v2239 = vunpack.c.l.b16 %v2164
    %v2240 = vunpack.c.l.b16 %v2165
    %v2241 = vunpack.c.l.b16 %v2166
    %v2242 = vunpack.c.l.b16 %v2167
    %v2243 = vunpack.c.l.b16 %v2168
    %v2244 = vunpack.c.l.b16 %v2169
    %v2245 = vunpack.c.l.b16 %v2170
    %v2246 = vunpack.c.l.b16 %v2171
    %v2247 = vunpack.c.l.b16 %v2172
    %v2248 = vunpack.c.l.b16 %v2173
    %v2249 = vunpack.c.l.b16 %v2174
    %v2250 = vunpack.c.l.b16 %v2175
    %v2251 = vunpack.c.l.b16 %v2176
    %v2252 = vunpack.c.l.b16 %v2177
    %v2253 = vunpack.c.l.b16 %v2178
    %v2254 = vunpack.c.l.b16 %v2179
    %v2255 = vunpack.c.l.b16 %v2180
    %v2256 = vunpack.c.l.b16 %v2181
    %v2257 = vunpack.c.l.b16 %v2182
    %v2258 = vunpack.c.l.b16 %v2183
    %v2259 = vunpack.c.l.b16 %v2184
    %v2260 = vunpack.c.l.b16 %v2185
    %v2261 = vpack.c.b16 %v2238, %v2237
    %v2262 = vpack.c.b16 %v2240, %v2239
    %v2263 = vpack.c.b16 %v2242, %v2241
    %v2264 = vpack.c.b16 %v2244, %v2243
    %v2265 = vpack.c.b16 %v2246, %v2245
    %v2266 = vpack.c.b16 %v2248, %v2247
    %v2267 = vpack.c.b16 %v2250, %v2249
    %v2268 = vpack.c.b16 %v2252, %v2251
    %v2269 = vpack.c.b16 %v2254, %v2253
    %v2270 = vpack.c.b16 %v2256, %v2255
    %v2271 = vpack.c.b16 %v2258, %v2257
    %v2272 = vpack.c.b16 %v2260, %v2259
    %v2286 = vsel %vm1135, %v2191, 0
    %v2289 = vsel %vm1135, %v2193, 0
    %v2292 = vsel %vm1135, %v2195, 0
    %v2295 = vsel %vm1135, %v2197, 0
    %v2298 = vsel %vm1135, %v2199, 0
    %v2301 = vsel %vm1135, %v2201, 0
    %v2304 = vsel %vm1135, %v2203, 0
    %2306 = vmatpush.bf16.msra.mxu0 %v2268
    %2307 = vmatpush.bf16.msra.mxu0 %v2267
    %2308 = vmatpush.bf16.msra.mxu0 %v2266
    %2309 = vmatpush.bf16.msra.mxu0 %v2265
    %2310 = vmatpush.bf16.msra.mxu0 %v2264
    %2311 = vmatpush.bf16.msra.mxu0 %v2263
    %2312 = vmatpush.bf16.msra.mxu0 %v2262
    %2313 = vmatpush.bf16.msra.mxu0 %v2261
    %2314 = vmatmul.bf16.gmra.mxu0 %v2190
    %v2315 = vpop.f32.mrf.mxu0
    %v2316 = vadd.f32 %v2188, %v2315
    %v2317 = vpop.f32.mrf.mxu0
    %v2318 = vadd.f32 %v2188, %v2317
    %2319 = vmatmul.bf16.gmra.mxu0 %v2192
    %v2320 = vpop.f32.mrf.mxu0
    %v2321 = vadd.f32 %v2188, %v2320
    %v2322 = vpop.f32.mrf.mxu0
    %v2323 = vadd.f32 %v2188, %v2322
    %2324 = vmatmul.bf16.gmra.mxu0 %v2194
    %v2325 = vpop.f32.mrf.mxu0
    %v2326 = vadd.f32 %v2188, %v2325
    %v2327 = vpop.f32.mrf.mxu0
    %v2328 = vadd.f32 %v2188, %v2327
    %2329 = vmatmul.bf16.gmra.mxu0 %v2196
    %v2330 = vpop.f32.mrf.mxu0
    %v2331 = vadd.f32 %v2188, %v2330
    %v2332 = vpop.f32.mrf.mxu0
    %v2333 = vadd.f32 %v2188, %v2332
    %2334 = vmatmul.bf16.gmra.mxu0 %v2198
    %v2335 = vpop.f32.mrf.mxu0
    %v2336 = vadd.f32 %v2188, %v2335
    %v2337 = vpop.f32.mrf.mxu0
    %v2338 = vadd.f32 %v2188, %v2337
    %2339 = vmatmul.bf16.gmra.mxu0 %v2200
    %v2340 = vpop.f32.mrf.mxu0
    %v2341 = vadd.f32 %v2188, %v2340
    %v2342 = vpop.f32.mrf.mxu0
    %v2343 = vadd.f32 %v2188, %v2342
    %2344 = vmatmul.bf16.gmra.mxu0 %v2202
    %v2345 = vpop.f32.mrf.mxu0
    %v2346 = vadd.f32 %v2188, %v2345
    %v2347 = vpop.f32.mrf.mxu0
    %v2348 = vadd.f32 %v2188, %v2347
    %2349 = vmatmul.bf16.gmra.mxu0 %v2204
    %v2350 = vpop.f32.mrf.mxu0
    %v2351 = vadd.f32 %v2188, %v2350
    %v2352 = vpop.f32.mrf.mxu0
    %v2353 = vadd.f32 %v2188, %v2352
    %2354 = vdwg.mxu0
    %2355 = vmatpush.bf16.msra.mxu0 0
    %2356 = vmatpush.bf16.msra.mxu0 0
    %2357 = vmatpush.bf16.msra.mxu0 0
    %2358 = vmatpush.bf16.msra.mxu0 0
    %2359 = vmatpush.bf16.msra.mxu0 %v2272
    %2360 = vmatpush.bf16.msra.mxu0 %v2271
    %2361 = vmatpush.bf16.msra.mxu0 %v2270
    %2362 = vmatpush.bf16.msra.mxu0 %v2269
    %2363 = vmatmul.bf16.gmra.mxu0 %v2286
    %v2364 = vpop.f32.mrf.mxu0
    %v2365 = vadd.f32 %v2316, %v2364
    %v2366 = vpop.f32.mrf.mxu0
    %v2367 = vadd.f32 %v2318, %v2366
    %2368 = vmatmul.bf16.gmra.mxu0 %v2289
    %v2369 = vpop.f32.mrf.mxu0
    %v2370 = vadd.f32 %v2321, %v2369
    %v2371 = vpop.f32.mrf.mxu0
    %v2372 = vadd.f32 %v2323, %v2371
    %2373 = vmatmul.bf16.gmra.mxu0 %v2292
    %v2374 = vpop.f32.mrf.mxu0
    %v2375 = vadd.f32 %v2326, %v2374
    %v2376 = vpop.f32.mrf.mxu0
    %v2377 = vadd.f32 %v2328, %v2376
    %2378 = vmatmul.bf16.gmra.mxu0 %v2295
    %v2379 = vpop.f32.mrf.mxu0
    %v2380 = vadd.f32 %v2331, %v2379
    %v2381 = vpop.f32.mrf.mxu0
    %v2382 = vadd.f32 %v2333, %v2381
    %2383 = vmatmul.bf16.gmra.mxu0 %v2298
    %v2384 = vpop.f32.mrf.mxu0
    %v2385 = vadd.f32 %v2336, %v2384
    %v2386 = vpop.f32.mrf.mxu0
    %v2387 = vadd.f32 %v2338, %v2386
    %2388 = vmatmul.bf16.gmra.mxu0 %v2301
    %v2389 = vpop.f32.mrf.mxu0
    %v2390 = vadd.f32 %v2341, %v2389
    %v2391 = vpop.f32.mrf.mxu0
    %v2392 = vadd.f32 %v2343, %v2391
    %2393 = vmatmul.bf16.gmra.mxu0 %v2304
    %v2394 = vpop.f32.mrf.mxu0
    %v2395 = vadd.f32 %v2346, %v2394
    %v2396 = vpop.f32.mrf.mxu0
    %v2397 = vadd.f32 %v2348, %v2396
    %2398 = vmatmul.bf16.gmra.mxu0 %v1872
    %v2399 = vpop.f32.mrf.mxu0
    %v2400 = vadd.f32 %v2351, %v2399
    %v2401 = vpop.f32.mrf.mxu0
    %v2402 = vadd.f32 %v2353, %v2401
    %2403 = vdwg.mxu0
    %v2404 = vadd.f32 %v2365, 0.0
    %v2405 = vadd.f32 %v2367, %v2370
    %v2406 = vadd.f32 %v2372, %v2375
    %v2407 = vadd.f32 %v2377, %v2380
    %v2408 = vadd.f32 %v2382, %v2385
    %v2409 = vadd.f32 %v2387, %v2390
    %v2410 = vadd.f32 %v2392, %v2395
    %v2411 = vadd.f32 %v2397, %v2400
    %v2412 = vadd.f32 %v2404, %v2367
    %v2413 = vadd.f32 %v2405, %v2372
    %v2414 = vadd.f32 %v2406, %v2377
    %v2415 = vadd.f32 %v2407, %v2382
    %v2416 = vadd.f32 %v2408, %v2387
    %v2417 = vadd.f32 %v2409, %v2392
    %v2418 = vadd.f32 %v2410, %v2397
    %v2419 = vadd.f32 %v2411, %v2402
    %v2420 = vmul.f32 %v2412, 0.33333334
    %v2421 = vmul.f32 %v2413, 0.33333334
    %v2422 = vmul.f32 %v2414, 0.33333334
    %v2423 = vmul.f32 %v2415, 0.33333334
    %v2424 = vmul.f32 %v2416, 0.33333334
    %v2425 = vmul.f32 %v2417, 0.33333334
    %v2426 = vmul.f32 %v2418, 0.33333334
    %v2427 = vmul.f32 %v2419, 0.33333334
    %v2428 = vld [vmem:[%s10] sm:$0x1]
    %v2430 = vperm.slane %v2428, 0
    %v2432 = vadd.f32 %v2420, %v2430
    %v2433 = vadd.f32 %v2421, %v2430
    %v2434 = vadd.f32 %v2422, %v2430
    %v2435 = vadd.f32 %v2423, %v2430
    %v2436 = vadd.f32 %v2424, %v2430
    %v2437 = vadd.f32 %v2425, %v2430
    %v2438 = vadd.f32 %v2426, %v2430
    %v2439 = vadd.f32 %v2427, %v2430
    %v2440 = vmax.f32 %v2432, 0.0
    %v2441 = vmax.f32 %v2433, 0.0
    %v2442 = vmax.f32 %v2434, 0.0
    %v2443 = vmax.f32 %v2435, 0.0
    %v2444 = vmax.f32 %v2436, 0.0
    %v2445 = vmax.f32 %v2437, 0.0
    %v2446 = vmax.f32 %v2438, 0.0
    %v2447 = vmax.f32 %v2439, 0.0
    %v2448 = vpack.c.bf16 %v2440, %v2440
    %v2449 = vpack.c.bf16 %v2441, %v2441
    %v2450 = vpack.c.bf16 %v2442, %v2442
    %v2451 = vpack.c.bf16 %v2443, %v2443
    %v2452 = vpack.c.bf16 %v2444, %v2444
    %v2453 = vpack.c.bf16 %v2445, %v2445
    %v2454 = vpack.c.bf16 %v2446, %v2446
    %v2455 = vpack.c.bf16 %v2447, %v2447
    %v2464 = vunpack.c.l.b16 %v2448
    %v2465 = vunpack.c.l.b16 %v2452
    %v2466 = vunpack.c.l.b16 %v2449
    %v2467 = vunpack.c.l.b16 %v2453
    %v2468 = vunpack.c.l.b16 %v2450
    %v2469 = vunpack.c.l.b16 %v2454
    %v2470 = vunpack.c.l.b16 %v2451
    %v2471 = vunpack.c.l.b16 %v2455
    %v2472 = vld [vmem:[%s11] sm:$0xf]
    %v2473 = vld [vmem:[%s11 + $0x4] sm:$0xf]
    %v2474 = vld [vmem:[%s11 + $0x8] sm:$0xf]
    %v2475 = vld [vmem:[%s11 + $0xc] sm:$0xf]
    %v2476 = vld [vmem:[%s11 + $0x10] sm:$0xf]
    %v2477 = vld [vmem:[%s11 + $0x14] sm:$0xf]
    %v2478 = vld [vmem:[%s11 + $0x18] sm:$0xf]
    %v2479 = vld [vmem:[%s11 + $0x1c] sm:$0xf]
    %v2480 = vld [vmem:[%s11 + $0x20] sm:$0xf]
    %v2481 = vld [vmem:[%s11 + $0x24] sm:$0xf]
    %v2482 = vld [vmem:[%s11 + $0x28] sm:$0xf]
    %v2483 = vld [vmem:[%s11 + $0x2c] sm:$0xf]
    %v2484 = vld [vmem:[%s11 + $0x30] sm:$0xf]
    %v2485 = vld [vmem:[%s11 + $0x34] sm:$0xf]
    %v2486 = vld [vmem:[%s11 + $0x38] sm:$0xf]
    %v2487 = vld [vmem:[%s11 + $0x3c] sm:$0xf]
    %v2488 = vld [vmem:[%s11 + $0x40] sm:$0xf]
    %v2489 = vld [vmem:[%s11 + $0x44] sm:$0xf]
    %v2490 = vld [vmem:[%s11 + $0x48] sm:$0xf]
    %v2491 = vld [vmem:[%s11 + $0x4c] sm:$0xf]
    %v2492 = vld [vmem:[%s11 + $0x50] sm:$0xf]
    %v2493 = vld [vmem:[%s11 + $0x54] sm:$0xf]
    %v2494 = vld [vmem:[%s11 + $0x58] sm:$0xf]
    %v2495 = vld [vmem:[%s11 + $0x5c] sm:$0xf]
    %v2496 = vld [vmem:[%s11 + $0x60] sm:$0xf]
    %v2497 = vld [vmem:[%s11 + $0x64] sm:$0xf]
    %v2498 = vld [vmem:[%s11 + $0x68] sm:$0xf]
    %v2499 = vld [vmem:[%s11 + $0x6c] sm:$0xf]
    %v2500 = vld [vmem:[%s11 + $0x70] sm:$0xf]
    %v2501 = vld [vmem:[%s11 + $0x74] sm:$0xf]
    %v2502 = vld [vmem:[%s11 + $0x78] sm:$0xf]
    %v2503 = vld [vmem:[%s11 + $0x7c] sm:$0xf]
    %v2504 = vld [vmem:[%s11 + $0x80] sm:$0xf]
    %v2505 = vld [vmem:[%s11 + $0x84] sm:$0xf]
    %v2506 = vld [vmem:[%s11 + $0x88] sm:$0xf]
    %v2507 = vld [vmem:[%s11 + $0x8c] sm:$0xf]
    %v2508 = vld [vmem:[%s11 + $0x90] sm:$0xf]
    %v2509 = vld [vmem:[%s11 + $0x94] sm:$0xf]
    %v2510 = vld [vmem:[%s11 + $0x98] sm:$0xf]
    %v2511 = vld [vmem:[%s11 + $0x9c] sm:$0xf]
    %v2512 = vld [vmem:[%s11 + $0xa0] sm:$0xf]
    %v2513 = vld [vmem:[%s11 + $0xa4] sm:$0xf]
    %v2514 = vld [vmem:[%s11 + $0xa8] sm:$0xf]
    %v2515 = vld [vmem:[%s11 + $0xac] sm:$0xf]
    %v2516 = vld [vmem:[%s11 + $0xb0] sm:$0xf]
    %v2517 = vld [vmem:[%s11 + $0xb4] sm:$0xf]
    %v2518 = vld [vmem:[%s11 + $0xb8] sm:$0xf]
    %v2519 = vld [vmem:[%s11 + $0xbc] sm:$0xf]
    %v2520 = vld [vmem:[%s12] sm:$0x1]
    %v2522 = vperm.slane %v2520, 0
    %v2524 = vpack.c.b16 %v2466, %v2464
    %v2525 = vpack.c.b16 %v2467, %v2465
    %v2526 = vpack.c.b16 %v2470, %v2468
    %v2527 = vpack.c.b16 %v2471, %v2469
    %v2581 = vunpack.c.l.b16 %v2472
    %v2582 = vunpack.c.l.b16 %v2473
    %v2583 = vunpack.c.l.b16 %v2474
    %v2584 = vunpack.c.l.b16 %v2475
    %v2585 = vunpack.c.l.b16 %v2476
    %v2586 = vunpack.c.l.b16 %v2477
    %v2587 = vunpack.c.l.b16 %v2478
    %v2588 = vunpack.c.l.b16 %v2479
    %v2589 = vunpack.c.l.b16 %v2480
    %v2590 = vunpack.c.l.b16 %v2481
    %v2591 = vunpack.c.l.b16 %v2482
    %v2592 = vunpack.c.l.b16 %v2483
    %v2593 = vunpack.c.l.b16 %v2484
    %v2594 = vunpack.c.l.b16 %v2485
    %v2595 = vunpack.c.l.b16 %v2486
    %v2596 = vunpack.c.l.b16 %v2487
    %v2597 = vunpack.c.l.b16 %v2488
    %v2598 = vunpack.c.l.b16 %v2489
    %v2599 = vunpack.c.l.b16 %v2490
    %v2600 = vunpack.c.l.b16 %v2491
    %v2601 = vunpack.c.l.b16 %v2492
    %v2602 = vunpack.c.l.b16 %v2493
    %v2603 = vunpack.c.l.b16 %v2494
    %v2604 = vunpack.c.l.b16 %v2495
    %v2605 = vunpack.c.l.b16 %v2496
    %v2606 = vunpack.c.l.b16 %v2497
    %v2607 = vunpack.c.l.b16 %v2498
    %v2608 = vunpack.c.l.b16 %v2499
    %v2609 = vunpack.c.l.b16 %v2500
    %v2610 = vunpack.c.l.b16 %v2501
    %v2611 = vunpack.c.l.b16 %v2502
    %v2612 = vunpack.c.l.b16 %v2503
    %v2613 = vunpack.c.l.b16 %v2504
    %v2614 = vunpack.c.l.b16 %v2505
    %v2615 = vunpack.c.l.b16 %v2506
    %v2616 = vunpack.c.l.b16 %v2507
    %v2617 = vunpack.c.l.b16 %v2508
    %v2618 = vunpack.c.l.b16 %v2509
    %v2619 = vunpack.c.l.b16 %v2510
    %v2620 = vunpack.c.l.b16 %v2511
    %v2621 = vunpack.c.l.b16 %v2512
    %v2622 = vunpack.c.l.b16 %v2513
    %v2623 = vunpack.c.l.b16 %v2514
    %v2624 = vunpack.c.l.b16 %v2515
    %v2625 = vunpack.c.l.b16 %v2516
    %v2626 = vunpack.c.l.b16 %v2517
    %v2627 = vunpack.c.l.b16 %v2518
    %v2628 = vunpack.c.l.b16 %v2519
    %v2629 = vpack.c.b16 %v2582, %v2581
    %v2630 = vpack.c.b16 %v2584, %v2583
    %v2631 = vpack.c.b16 %v2586, %v2585
    %v2632 = vpack.c.b16 %v2588, %v2587
    %v2633 = vpack.c.b16 %v2590, %v2589
    %v2634 = vpack.c.b16 %v2592, %v2591
    %v2635 = vpack.c.b16 %v2594, %v2593
    %v2636 = vpack.c.b16 %v2596, %v2595
    %v2637 = vpack.c.b16 %v2598, %v2597
    %v2638 = vpack.c.b16 %v2600, %v2599
    %v2639 = vpack.c.b16 %v2602, %v2601
    %v2640 = vpack.c.b16 %v2604, %v2603
    %v2641 = vpack.c.b16 %v2606, %v2605
    %v2642 = vpack.c.b16 %v2608, %v2607
    %v2643 = vpack.c.b16 %v2610, %v2609
    %v2644 = vpack.c.b16 %v2612, %v2611
    %v2645 = vpack.c.b16 %v2614, %v2613
    %v2646 = vpack.c.b16 %v2616, %v2615
    %v2647 = vpack.c.b16 %v2618, %v2617
    %v2648 = vpack.c.b16 %v2620, %v2619
    %v2649 = vpack.c.b16 %v2622, %v2621
    %v2650 = vpack.c.b16 %v2624, %v2623
    %v2651 = vpack.c.b16 %v2626, %v2625
    %v2652 = vpack.c.b16 %v2628, %v2627
    %2677 = vmatpush.bf16.msra.mxu0 %v2636
    %2678 = vmatpush.bf16.msra.mxu0 %v2635
    %2679 = vmatpush.bf16.msra.mxu0 %v2634
    %2680 = vmatpush.bf16.msra.mxu0 %v2633
    %2681 = vmatpush.bf16.msra.mxu0 %v2632
    %2682 = vmatpush.bf16.msra.mxu0 %v2631
    %2683 = vmatpush.bf16.msra.mxu0 %v2630
    %2684 = vmatpush.bf16.msra.mxu0 %v2629
    %2685 = vmatmul.bf16.gmra.mxu0 %v298
    %v2686 = vpop.f32.mrf.mxu0
    %v2687 = vadd.f32 %v2522, %v2686
    %v2688 = vpop.f32.mrf.mxu0
    %v2689 = vadd.f32 %v2522, %v2688
    %2690 = vmatmul.bf16.gmra.mxu0 %v298
    %v2691 = vpop.f32.mrf.mxu0
    %v2692 = vadd.f32 %v2522, %v2691
    %v2693 = vpop.f32.mrf.mxu0
    %v2694 = vadd.f32 %v2522, %v2693
    %2695 = vmatmul.bf16.gmra.mxu0 %v2524
    %v2696 = vpop.f32.mrf.mxu0
    %v2697 = vadd.f32 %v2522, %v2696
    %v2698 = vpop.f32.mrf.mxu0
    %v2699 = vadd.f32 %v2522, %v2698
    %2700 = vmatmul.bf16.gmra.mxu0 %v2526
    %v2701 = vpop.f32.mrf.mxu0
    %v2702 = vadd.f32 %v2522, %v2701
    %v2703 = vpop.f32.mrf.mxu0
    %v2704 = vadd.f32 %v2522, %v2703
    %2705 = vdwg.mxu0
    %2706 = vmatpush.bf16.msra.mxu0 %v2644
    %2707 = vmatpush.bf16.msra.mxu0 %v2643
    %2708 = vmatpush.bf16.msra.mxu0 %v2642
    %2709 = vmatpush.bf16.msra.mxu0 %v2641
    %2710 = vmatpush.bf16.msra.mxu0 %v2640
    %2711 = vmatpush.bf16.msra.mxu0 %v2639
    %2712 = vmatpush.bf16.msra.mxu0 %v2638
    %2713 = vmatpush.bf16.msra.mxu0 %v2637
    %2714 = vmatmul.bf16.gmra.mxu0 %v2524
    %v2715 = vpop.f32.mrf.mxu0
    %v2716 = vadd.f32 %v2687, %v2715
    %v2717 = vpop.f32.mrf.mxu0
    %v2718 = vadd.f32 %v2689, %v2717
    %2719 = vmatmul.bf16.gmra.mxu0 %v2526
    %v2720 = vpop.f32.mrf.mxu0
    %v2721 = vadd.f32 %v2692, %v2720
    %v2722 = vpop.f32.mrf.mxu0
    %v2723 = vadd.f32 %v2694, %v2722
    %2724 = vmatmul.bf16.gmra.mxu0 %v2525
    %v2725 = vpop.f32.mrf.mxu0
    %v2726 = vadd.f32 %v2697, %v2725
    %v2727 = vpop.f32.mrf.mxu0
    %v2728 = vadd.f32 %v2699, %v2727
    %2729 = vmatmul.bf16.gmra.mxu0 %v2527
    %v2730 = vpop.f32.mrf.mxu0
    %v2731 = vadd.f32 %v2702, %v2730
    %v2732 = vpop.f32.mrf.mxu0
    %v2733 = vadd.f32 %v2704, %v2732
    %2734 = vdwg.mxu0
    %2735 = vmatpush.bf16.msra.mxu0 %v2652
    %2736 = vmatpush.bf16.msra.mxu0 %v2651
    %2737 = vmatpush.bf16.msra.mxu0 %v2650
    %2738 = vmatpush.bf16.msra.mxu0 %v2649
    %2739 = vmatpush.bf16.msra.mxu0 %v2648
    %2740 = vmatpush.bf16.msra.mxu0 %v2647
    %2741 = vmatpush.bf16.msra.mxu0 %v2646
    %2742 = vmatpush.bf16.msra.mxu0 %v2645
    %2743 = vmatmul.bf16.gmra.mxu0 %v2525
    %v2744 = vpop.f32.mrf.mxu0
    %v2745 = vadd.f32 %v2716, %v2744
    %v2746 = vpop.f32.mrf.mxu0
    %v2747 = vadd.f32 %v2718, %v2746
    %2748 = vmatmul.bf16.gmra.mxu0 %v2527
    %v2749 = vpop.f32.mrf.mxu0
    %v2750 = vadd.f32 %v2721, %v2749
    %v2751 = vpop.f32.mrf.mxu0
    %v2752 = vadd.f32 %v2723, %v2751
    %2753 = vmatmul.bf16.gmra.mxu0 %v298
    %v2754 = vpop.f32.mrf.mxu0
    %v2755 = vadd.f32 %v2726, %v2754
    %v2756 = vpop.f32.mrf.mxu0
    %v2757 = vadd.f32 %v2728, %v2756
    %2758 = vmatmul.bf16.gmra.mxu0 %v298
    %v2759 = vpop.f32.mrf.mxu0
    %v2760 = vadd.f32 %v2731, %v2759
    %v2761 = vpop.f32.mrf.mxu0
    %v2762 = vadd.f32 %v2733, %v2761
    %2763 = vdwg.mxu0
    %v2764 = vmax.f32 %v2745, 0.0
    %v2765 = vmax.f32 %v2747, 0.0
    %v2766 = vmax.f32 %v2750, 0.0
    %v2767 = vmax.f32 %v2752, 0.0
    %v2768 = vmax.f32 %v2755, 0.0
    %v2769 = vmax.f32 %v2757, 0.0
    %v2770 = vmax.f32 %v2760, 0.0
    %v2771 = vmax.f32 %v2762, 0.0
    %v2772 = vpack.c.bf16 %v2764, %v2764
    %v2773 = vpack.c.bf16 %v2765, %v2765
    %v2774 = vpack.c.bf16 %v2766, %v2766
    %v2775 = vpack.c.bf16 %v2767, %v2767
    %v2776 = vpack.c.bf16 %v2768, %v2768
    %v2777 = vpack.c.bf16 %v2769, %v2769
    %v2778 = vpack.c.bf16 %v2770, %v2770
    %v2779 = vpack.c.bf16 %v2771, %v2771
    %v2788 = vunpack.c.l.b16 %v2772
    %v2789 = vunpack.c.l.b16 %v2776
    %v2790 = vunpack.c.l.b16 %v2773
    %v2791 = vunpack.c.l.b16 %v2777
    %v2792 = vunpack.c.l.b16 %v2774
    %v2793 = vunpack.c.l.b16 %v2778
    %v2794 = vunpack.c.l.b16 %v2775
    %v2795 = vunpack.c.l.b16 %v2779
    %v2796 = vld [vmem:[%s13] sm:$0xf]
    %v2797 = vld [vmem:[%s13 + $0x4] sm:$0xf]
    %v2798 = vld [vmem:[%s13 + $0x8] sm:$0xf]
    %v2799 = vld [vmem:[%s13 + $0xc] sm:$0xf]
    %v2800 = vld [vmem:[%s13 + $0x10] sm:$0xf]
    %v2801 = vld [vmem:[%s13 + $0x14] sm:$0xf]
    %v2802 = vld [vmem:[%s13 + $0x18] sm:$0xf]
    %v2803 = vld [vmem:[%s13 + $0x1c] sm:$0xf]
    %v2804 = vld [vmem:[%s13 + $0x20] sm:$0xf]
    %v2805 = vld [vmem:[%s13 + $0x24] sm:$0xf]
    %v2806 = vld [vmem:[%s13 + $0x28] sm:$0xf]
    %v2807 = vld [vmem:[%s13 + $0x2c] sm:$0xf]
    %v2808 = vld [vmem:[%s13 + $0x30] sm:$0xf]
    %v2809 = vld [vmem:[%s13 + $0x34] sm:$0xf]
    %v2810 = vld [vmem:[%s13 + $0x38] sm:$0xf]
    %v2811 = vld [vmem:[%s13 + $0x3c] sm:$0xf]
    %v2812 = vld [vmem:[%s13 + $0x40] sm:$0xf]
    %v2813 = vld [vmem:[%s13 + $0x44] sm:$0xf]
    %v2814 = vld [vmem:[%s13 + $0x48] sm:$0xf]
    %v2815 = vld [vmem:[%s13 + $0x4c] sm:$0xf]
    %v2816 = vld [vmem:[%s13 + $0x50] sm:$0xf]
    %v2817 = vld [vmem:[%s13 + $0x54] sm:$0xf]
    %v2818 = vld [vmem:[%s13 + $0x58] sm:$0xf]
    %v2819 = vld [vmem:[%s13 + $0x5c] sm:$0xf]
    %v2820 = vld [vmem:[%s13 + $0x60] sm:$0xf]
    %v2821 = vld [vmem:[%s13 + $0x64] sm:$0xf]
    %v2822 = vld [vmem:[%s13 + $0x68] sm:$0xf]
    %v2823 = vld [vmem:[%s13 + $0x6c] sm:$0xf]
    %v2824 = vld [vmem:[%s13 + $0x70] sm:$0xf]
    %v2825 = vld [vmem:[%s13 + $0x74] sm:$0xf]
    %v2826 = vld [vmem:[%s13 + $0x78] sm:$0xf]
    %v2827 = vld [vmem:[%s13 + $0x7c] sm:$0xf]
    %v2828 = vld [vmem:[%s13 + $0x80] sm:$0xf]
    %v2829 = vld [vmem:[%s13 + $0x84] sm:$0xf]
    %v2830 = vld [vmem:[%s13 + $0x88] sm:$0xf]
    %v2831 = vld [vmem:[%s13 + $0x8c] sm:$0xf]
    %v2832 = vld [vmem:[%s13 + $0x90] sm:$0xf]
    %v2833 = vld [vmem:[%s13 + $0x94] sm:$0xf]
    %v2834 = vld [vmem:[%s13 + $0x98] sm:$0xf]
    %v2835 = vld [vmem:[%s13 + $0x9c] sm:$0xf]
    %v2836 = vld [vmem:[%s13 + $0xa0] sm:$0xf]
    %v2837 = vld [vmem:[%s13 + $0xa4] sm:$0xf]
    %v2838 = vld [vmem:[%s13 + $0xa8] sm:$0xf]
    %v2839 = vld [vmem:[%s13 + $0xac] sm:$0xf]
    %v2840 = vld [vmem:[%s13 + $0xb0] sm:$0xf]
    %v2841 = vld [vmem:[%s13 + $0xb4] sm:$0xf]
    %v2842 = vld [vmem:[%s13 + $0xb8] sm:$0xf]
    %v2843 = vld [vmem:[%s13 + $0xbc] sm:$0xf]
    %v2844 = vld [vmem:[%s14] sm:$0x1]
    %v2846 = vperm.slane %v2844, 0
    %v2848 = vpack.c.b16 %v2790, %v2788
    %v2849 = vpack.c.b16 %v2791, %v2789
    %v2850 = vpack.c.b16 %v2794, %v2792
    %v2851 = vpack.c.b16 %v2795, %v2793
    %v2904 = vunpack.c.l.b16 %v2796
    %v2905 = vunpack.c.l.b16 %v2797
    %v2906 = vunpack.c.l.b16 %v2798
    %v2907 = vunpack.c.l.b16 %v2799
    %v2908 = vunpack.c.l.b16 %v2800
    %v2909 = vunpack.c.l.b16 %v2801
    %v2910 = vunpack.c.l.b16 %v2802
    %v2911 = vunpack.c.l.b16 %v2803
    %v2912 = vunpack.c.l.b16 %v2804
    %v2913 = vunpack.c.l.b16 %v2805
    %v2914 = vunpack.c.l.b16 %v2806
    %v2915 = vunpack.c.l.b16 %v2807
    %v2916 = vunpack.c.l.b16 %v2808
    %v2917 = vunpack.c.l.b16 %v2809
    %v2918 = vunpack.c.l.b16 %v2810
    %v2919 = vunpack.c.l.b16 %v2811
    %v2920 = vunpack.c.l.b16 %v2812
    %v2921 = vunpack.c.l.b16 %v2813
    %v2922 = vunpack.c.l.b16 %v2814
    %v2923 = vunpack.c.l.b16 %v2815
    %v2924 = vunpack.c.l.b16 %v2816
    %v2925 = vunpack.c.l.b16 %v2817
    %v2926 = vunpack.c.l.b16 %v2818
    %v2927 = vunpack.c.l.b16 %v2819
    %v2928 = vunpack.c.l.b16 %v2820
    %v2929 = vunpack.c.l.b16 %v2821
    %v2930 = vunpack.c.l.b16 %v2822
    %v2931 = vunpack.c.l.b16 %v2823
    %v2932 = vunpack.c.l.b16 %v2824
    %v2933 = vunpack.c.l.b16 %v2825
    %v2934 = vunpack.c.l.b16 %v2826
    %v2935 = vunpack.c.l.b16 %v2827
    %v2936 = vunpack.c.l.b16 %v2828
    %v2937 = vunpack.c.l.b16 %v2829
    %v2938 = vunpack.c.l.b16 %v2830
    %v2939 = vunpack.c.l.b16 %v2831
    %v2940 = vunpack.c.l.b16 %v2832
    %v2941 = vunpack.c.l.b16 %v2833
    %v2942 = vunpack.c.l.b16 %v2834
    %v2943 = vunpack.c.l.b16 %v2835
    %v2944 = vunpack.c.l.b16 %v2836
    %v2945 = vunpack.c.l.b16 %v2837
    %v2946 = vunpack.c.l.b16 %v2838
    %v2947 = vunpack.c.l.b16 %v2839
    %v2948 = vunpack.c.l.b16 %v2840
    %v2949 = vunpack.c.l.b16 %v2841
    %v2950 = vunpack.c.l.b16 %v2842
    %v2951 = vunpack.c.l.b16 %v2843
    %v2952 = vpack.c.b16 %v2905, %v2904
    %v2953 = vpack.c.b16 %v2907, %v2906
    %v2954 = vpack.c.b16 %v2909, %v2908
    %v2955 = vpack.c.b16 %v2911, %v2910
    %v2956 = vpack.c.b16 %v2913, %v2912
    %v2957 = vpack.c.b16 %v2915, %v2914
    %v2958 = vpack.c.b16 %v2917, %v2916
    %v2959 = vpack.c.b16 %v2919, %v2918
    %v2960 = vpack.c.b16 %v2921, %v2920
    %v2961 = vpack.c.b16 %v2923, %v2922
    %v2962 = vpack.c.b16 %v2925, %v2924
    %v2963 = vpack.c.b16 %v2927, %v2926
    %v2964 = vpack.c.b16 %v2929, %v2928
    %v2965 = vpack.c.b16 %v2931, %v2930
    %v2966 = vpack.c.b16 %v2933, %v2932
    %v2967 = vpack.c.b16 %v2935, %v2934
    %v2968 = vpack.c.b16 %v2937, %v2936
    %v2969 = vpack.c.b16 %v2939, %v2938
    %v2970 = vpack.c.b16 %v2941, %v2940
    %v2971 = vpack.c.b16 %v2943, %v2942
    %v2972 = vpack.c.b16 %v2945, %v2944
    %v2973 = vpack.c.b16 %v2947, %v2946
    %v2974 = vpack.c.b16 %v2949, %v2948
    %v2975 = vpack.c.b16 %v2951, %v2950
    %3000 = vmatpush.bf16.msra.mxu0 %v2959
    %3001 = vmatpush.bf16.msra.mxu0 %v2958
    %3002 = vmatpush.bf16.msra.mxu0 %v2957
    %3003 = vmatpush.bf16.msra.mxu0 %v2956
    %3004 = vmatpush.bf16.msra.mxu0 %v2955
    %3005 = vmatpush.bf16.msra.mxu0 %v2954
    %3006 = vmatpush.bf16.msra.mxu0 %v2953
    %3007 = vmatpush.bf16.msra.mxu0 %v2952
    %3008 = vmatmul.bf16.gmra.mxu0 %v298
    %v3009 = vpop.f32.mrf.mxu0
    %v3010 = vadd.f32 %v2846, %v3009
    %v3011 = vpop.f32.mrf.mxu0
    %v3012 = vadd.f32 %v2846, %v3011
    %3013 = vmatmul.bf16.gmra.mxu0 %v298
    %v3014 = vpop.f32.mrf.mxu0
    %v3015 = vadd.f32 %v2846, %v3014
    %v3016 = vpop.f32.mrf.mxu0
    %v3017 = vadd.f32 %v2846, %v3016
    %3018 = vmatmul.bf16.gmra.mxu0 %v2848
    %v3019 = vpop.f32.mrf.mxu0
    %v3020 = vadd.f32 %v2846, %v3019
    %v3021 = vpop.f32.mrf.mxu0
    %v3022 = vadd.f32 %v2846, %v3021
    %3023 = vmatmul.bf16.gmra.mxu0 %v2850
    %v3024 = vpop.f32.mrf.mxu0
    %v3025 = vadd.f32 %v2846, %v3024
    %v3026 = vpop.f32.mrf.mxu0
    %v3027 = vadd.f32 %v2846, %v3026
    %3028 = vdwg.mxu0
    %3029 = vmatpush.bf16.msra.mxu0 %v2967
    %3030 = vmatpush.bf16.msra.mxu0 %v2966
    %3031 = vmatpush.bf16.msra.mxu0 %v2965
    %3032 = vmatpush.bf16.msra.mxu0 %v2964
    %3033 = vmatpush.bf16.msra.mxu0 %v2963
    %3034 = vmatpush.bf16.msra.mxu0 %v2962
    %3035 = vmatpush.bf16.msra.mxu0 %v2961
    %3036 = vmatpush.bf16.msra.mxu0 %v2960
    %3037 = vmatmul.bf16.gmra.mxu0 %v2848
    %v3038 = vpop.f32.mrf.mxu0
    %v3039 = vadd.f32 %v3010, %v3038
    %v3040 = vpop.f32.mrf.mxu0
    %v3041 = vadd.f32 %v3012, %v3040
    %3042 = vmatmul.bf16.gmra.mxu0 %v2850
    %v3043 = vpop.f32.mrf.mxu0
    %v3044 = vadd.f32 %v3015, %v3043
    %v3045 = vpop.f32.mrf.mxu0
    %v3046 = vadd.f32 %v3017, %v3045
    %3047 = vmatmul.bf16.gmra.mxu0 %v2849
    %v3048 = vpop.f32.mrf.mxu0
    %v3049 = vadd.f32 %v3020, %v3048
    %v3050 = vpop.f32.mrf.mxu0
    %v3051 = vadd.f32 %v3022, %v3050
    %3052 = vmatmul.bf16.gmra.mxu0 %v2851
    %v3053 = vpop.f32.mrf.mxu0
    %v3054 = vadd.f32 %v3025, %v3053
    %v3055 = vpop.f32.mrf.mxu0
    %v3056 = vadd.f32 %v3027, %v3055
    %3057 = vdwg.mxu0
    %3058 = vmatpush.bf16.msra.mxu0 %v2975
    %3059 = vmatpush.bf16.msra.mxu0 %v2974
    %3060 = vmatpush.bf16.msra.mxu0 %v2973
    %3061 = vmatpush.bf16.msra.mxu0 %v2972
    %3062 = vmatpush.bf16.msra.mxu0 %v2971
    %3063 = vmatpush.bf16.msra.mxu0 %v2970
    %3064 = vmatpush.bf16.msra.mxu0 %v2969
    %3065 = vmatpush.bf16.msra.mxu0 %v2968
    %3066 = vmatmul.bf16.gmra.mxu0 %v2849
    %v3067 = vpop.f32.mrf.mxu0
    %v3068 = vadd.f32 %v3039, %v3067
    %v3069 = vpop.f32.mrf.mxu0
    %v3070 = vadd.f32 %v3041, %v3069
    %3071 = vmatmul.bf16.gmra.mxu0 %v2851
    %v3072 = vpop.f32.mrf.mxu0
    %v3073 = vadd.f32 %v3044, %v3072
    %v3074 = vpop.f32.mrf.mxu0
    %v3075 = vadd.f32 %v3046, %v3074
    %3076 = vmatmul.bf16.gmra.mxu0 %v298
    %v3077 = vpop.f32.mrf.mxu0
    %v3078 = vadd.f32 %v3049, %v3077
    %v3079 = vpop.f32.mrf.mxu0
    %v3080 = vadd.f32 %v3051, %v3079
    %3081 = vmatmul.bf16.gmra.mxu0 %v298
    %v3082 = vpop.f32.mrf.mxu0
    %v3083 = vadd.f32 %v3054, %v3082
    %v3084 = vpop.f32.mrf.mxu0
    %v3085 = vadd.f32 %v3056, %v3084
    %3086 = vdwg.mxu0
    %v3087 = vadd.f32 %v3068, 0.0
    %v3088 = vadd.f32 %v3070, %v3073
    %v3089 = vadd.f32 %v3075, %v3078
    %v3090 = vadd.f32 %v3080, %v3083
    %v3091 = vadd.f32 %v3087, %v3070
    %v3092 = vadd.f32 %v3088, %v3075
    %v3093 = vadd.f32 %v3089, %v3080
    %v3094 = vadd.f32 %v3090, %v3085
    %v3095 = vmul.f32 %v3091, 0.33333334
    %v3096 = vmul.f32 %v3092, 0.33333334
    %v3097 = vmul.f32 %v3093, 0.33333334
    %v3098 = vmul.f32 %v3094, 0.33333334
    %v3099 = vld [vmem:[%s15] sm:$0x1]
    %v3101 = vperm.slane %v3099, 0
    %v3103 = vadd.f32 %v3095, %v3101
    %v3104 = vadd.f32 %v3096, %v3101
    %v3105 = vadd.f32 %v3097, %v3101
    %v3106 = vadd.f32 %v3098, %v3101
    %v3107 = vmax.f32 %v3103, 0.0
    %v3108 = vmax.f32 %v3104, 0.0
    %v3109 = vmax.f32 %v3105, 0.0
    %v3110 = vmax.f32 %v3106, 0.0
    %v3111 = vpack.c.bf16 %v3107, %v3107
    %v3112 = vpack.c.bf16 %v3108, %v3108
    %v3113 = vpack.c.bf16 %v3109, %v3109
    %v3114 = vpack.c.bf16 %v3110, %v3110
    %v3115 = vld [vmem:[#allocation4] sm:$0xff]
    %v3116 = vld [vmem:[#allocation4 + $0x8] sm:$0xff]
    %v3117 = vld [vmem:[#allocation4 + $0x10] sm:$0xff]
    %v3118 = vld [vmem:[#allocation4 + $0x18] sm:$0xff]
    %v3119 = vld [vmem:[#allocation4 + $0x20] sm:$0xff]
    %v3120 = vld [vmem:[#allocation4 + $0x28] sm:$0xff]
    %v3121 = vld [vmem:[#allocation4 + $0x30] sm:$0xff]
    %v3122 = vld [vmem:[#allocation4 + $0x38] sm:$0xff]
    %v3123 = vld [vmem:[#allocation4 + $0x40] sm:$0xff]
    %v3124 = vld [vmem:[#allocation4 + $0x48] sm:$0xff]
    %v3125 = vld [vmem:[#allocation4 + $0x50] sm:$0xff]
    %v3126 = vld [vmem:[#allocation4 + $0x58] sm:$0xff]
    %v3127 = vld [vmem:[#allocation4 + $0x60] sm:$0xff]
    %v3128 = vld [vmem:[#allocation4 + $0x68] sm:$0xff]
    %v3129 = vld [vmem:[#allocation4 + $0x70] sm:$0xff]
    %v3130 = vld [vmem:[#allocation4 + $0x78] sm:$0xff]
    %v3131 = vld [vmem:[#allocation4 + $0x80] sm:$0xff]
    %v3132 = vld [vmem:[#allocation4 + $0x88] sm:$0xff]
    %v3133 = vld [vmem:[#allocation4 + $0x90] sm:$0xff]
    %v3134 = vld [vmem:[#allocation4 + $0x98] sm:$0xff]
    %v3135 = vld [vmem:[#allocation4 + $0xa0] sm:$0xff]
    %v3136 = vld [vmem:[#allocation4 + $0xa8] sm:$0xff]
    %v3137 = vld [vmem:[#allocation4 + $0xb0] sm:$0xff]
    %v3138 = vld [vmem:[#allocation4 + $0xb8] sm:$0xff]
    %v3139 = vld [vmem:[#allocation4 + $0xc0] sm:$0xff]
    %v3140 = vld [vmem:[#allocation4 + $0xc8] sm:$0xff]
    %v3141 = vld [vmem:[#allocation4 + $0xd0] sm:$0xff]
    %v3142 = vld [vmem:[#allocation4 + $0xd8] sm:$0xff]
    %v3143 = vld [vmem:[#allocation4 + $0xe0] sm:$0xff]
    %v3144 = vld [vmem:[#allocation4 + $0xe8] sm:$0xff]
    %v3145 = vld [vmem:[#allocation4 + $0xf0] sm:$0xff]
    %v3146 = vld [vmem:[#allocation4 + $0xf8] sm:$0xff]
    %v3147 = vld [vmem:[#allocation4 + $0x100] sm:$0xff]
    %v3148 = vld [vmem:[#allocation4 + $0x108] sm:$0xff]
    %v3149 = vld [vmem:[#allocation4 + $0x110] sm:$0xff]
    %v3150 = vld [vmem:[#allocation4 + $0x118] sm:$0xff]
    %v3151 = vld [vmem:[#allocation4 + $0x120] sm:$0xff]
    %v3152 = vld [vmem:[#allocation4 + $0x128] sm:$0xff]
    %v3153 = vld [vmem:[#allocation4 + $0x130] sm:$0xff]
    %v3154 = vld [vmem:[#allocation4 + $0x138] sm:$0xff]
    %v3155 = vld [vmem:[#allocation4 + $0x140] sm:$0xff]
    %v3156 = vld [vmem:[#allocation4 + $0x148] sm:$0xff]
    %v3157 = vld [vmem:[#allocation4 + $0x150] sm:$0xff]
    %v3158 = vld [vmem:[#allocation4 + $0x158] sm:$0xff]
    %v3159 = vld [vmem:[#allocation4 + $0x160] sm:$0xff]
    %v3160 = vld [vmem:[#allocation4 + $0x168] sm:$0xff]
    %v3161 = vld [vmem:[#allocation4 + $0x170] sm:$0xff]
    %v3162 = vld [vmem:[#allocation4 + $0x178] sm:$0xff]
    %v3163 = vld [vmem:[#allocation4 + $0x180] sm:$0xff]
    %v3164 = vld [vmem:[#allocation4 + $0x188] sm:$0xff]
    %v3165 = vld [vmem:[#allocation4 + $0x190] sm:$0xff]
    %v3166 = vld [vmem:[#allocation4 + $0x198] sm:$0xff]
    %v3167 = vld [vmem:[#allocation4 + $0x1a0] sm:$0xff]
    %v3168 = vld [vmem:[#allocation4 + $0x1a8] sm:$0xff]
    %v3169 = vld [vmem:[#allocation4 + $0x1b0] sm:$0xff]
    %v3170 = vld [vmem:[#allocation4 + $0x1b8] sm:$0xff]
    %v3171 = vld [vmem:[#allocation4 + $0x1c0] sm:$0xff]
    %v3172 = vld [vmem:[#allocation4 + $0x1c8] sm:$0xff]
    %v3173 = vld [vmem:[#allocation4 + $0x1d0] sm:$0xff]
    %v3174 = vld [vmem:[#allocation4 + $0x1d8] sm:$0xff]
    %v3175 = vld [vmem:[#allocation4 + $0x1e0] sm:$0xff]
    %v3176 = vld [vmem:[#allocation4 + $0x1e8] sm:$0xff]
    %v3177 = vld [vmem:[#allocation4 + $0x1f0] sm:$0xff]
    %v3178 = vld [vmem:[#allocation4 + $0x1f8] sm:$0xff]
    %v3179 = vld [vmem:[%s17] sm:$0x3]
    %v3181 = vperm.slane %v3179, 0
    %v3182 = vperm.slane %v3179, 1
    %v3249 = vunpack.c.l.b16 %v3115
    %v3250 = vunpack.c.h.b16 %v3115
    %v3251 = vunpack.c.l.b16 %v3116
    %v3252 = vunpack.c.h.b16 %v3116
    %v3253 = vunpack.c.l.b16 %v3117
    %v3254 = vunpack.c.h.b16 %v3117
    %v3255 = vunpack.c.l.b16 %v3118
    %v3256 = vunpack.c.h.b16 %v3118
    %v3257 = vunpack.c.l.b16 %v3119
    %v3258 = vunpack.c.h.b16 %v3119
    %v3259 = vunpack.c.l.b16 %v3120
    %v3260 = vunpack.c.h.b16 %v3120
    %v3261 = vunpack.c.l.b16 %v3121
    %v3262 = vunpack.c.h.b16 %v3121
    %v3263 = vunpack.c.l.b16 %v3122
    %v3264 = vunpack.c.h.b16 %v3122
    %v3265 = vunpack.c.l.b16 %v3123
    %v3266 = vunpack.c.h.b16 %v3123
    %v3267 = vunpack.c.l.b16 %v3124
    %v3268 = vunpack.c.h.b16 %v3124
    %v3269 = vunpack.c.l.b16 %v3125
    %v3270 = vunpack.c.h.b16 %v3125
    %v3271 = vunpack.c.l.b16 %v3126
    %v3272 = vunpack.c.h.b16 %v3126
    %v3273 = vunpack.c.l.b16 %v3127
    %v3274 = vunpack.c.h.b16 %v3127
    %v3275 = vunpack.c.l.b16 %v3128
    %v3276 = vunpack.c.h.b16 %v3128
    %v3277 = vunpack.c.l.b16 %v3129
    %v3278 = vunpack.c.h.b16 %v3129
    %v3279 = vunpack.c.l.b16 %v3130
    %v3280 = vunpack.c.h.b16 %v3130
    %v3281 = vunpack.c.l.b16 %v3131
    %v3282 = vunpack.c.h.b16 %v3131
    %v3283 = vunpack.c.l.b16 %v3132
    %v3284 = vunpack.c.h.b16 %v3132
    %v3285 = vunpack.c.l.b16 %v3133
    %v3286 = vunpack.c.h.b16 %v3133
    %v3287 = vunpack.c.l.b16 %v3134
    %v3288 = vunpack.c.h.b16 %v3134
    %v3289 = vunpack.c.l.b16 %v3135
    %v3290 = vunpack.c.h.b16 %v3135
    %v3291 = vunpack.c.l.b16 %v3136
    %v3292 = vunpack.c.h.b16 %v3136
    %v3293 = vunpack.c.l.b16 %v3137
    %v3294 = vunpack.c.h.b16 %v3137
    %v3295 = vunpack.c.l.b16 %v3138
    %v3296 = vunpack.c.h.b16 %v3138
    %v3297 = vunpack.c.l.b16 %v3139
    %v3298 = vunpack.c.h.b16 %v3139
    %v3299 = vunpack.c.l.b16 %v3140
    %v3300 = vunpack.c.h.b16 %v3140
    %v3301 = vunpack.c.l.b16 %v3141
    %v3302 = vunpack.c.h.b16 %v3141
    %v3303 = vunpack.c.l.b16 %v3142
    %v3304 = vunpack.c.h.b16 %v3142
    %v3305 = vunpack.c.l.b16 %v3143
    %v3306 = vunpack.c.h.b16 %v3143
    %v3307 = vunpack.c.l.b16 %v3144
    %v3308 = vunpack.c.h.b16 %v3144
    %v3309 = vunpack.c.l.b16 %v3145
    %v3310 = vunpack.c.h.b16 %v3145
    %v3311 = vunpack.c.l.b16 %v3146
    %v3312 = vunpack.c.h.b16 %v3146
    %v3313 = vunpack.c.l.b16 %v3147
    %v3314 = vunpack.c.h.b16 %v3147
    %v3315 = vunpack.c.l.b16 %v3148
    %v3316 = vunpack.c.h.b16 %v3148
    %v3317 = vunpack.c.l.b16 %v3149
    %v3318 = vunpack.c.h.b16 %v3149
    %v3319 = vunpack.c.l.b16 %v3150
    %v3320 = vunpack.c.h.b16 %v3150
    %v3321 = vunpack.c.l.b16 %v3151
    %v3322 = vunpack.c.h.b16 %v3151
    %v3323 = vunpack.c.l.b16 %v3152
    %v3324 = vunpack.c.h.b16 %v3152
    %v3325 = vunpack.c.l.b16 %v3153
    %v3326 = vunpack.c.h.b16 %v3153
    %v3327 = vunpack.c.l.b16 %v3154
    %v3328 = vunpack.c.h.b16 %v3154
    %v3329 = vunpack.c.l.b16 %v3155
    %v3330 = vunpack.c.h.b16 %v3155
    %v3331 = vunpack.c.l.b16 %v3156
    %v3332 = vunpack.c.h.b16 %v3156
    %v3333 = vunpack.c.l.b16 %v3157
    %v3334 = vunpack.c.h.b16 %v3157
    %v3335 = vunpack.c.l.b16 %v3158
    %v3336 = vunpack.c.h.b16 %v3158
    %v3337 = vunpack.c.l.b16 %v3159
    %v3338 = vunpack.c.h.b16 %v3159
    %v3339 = vunpack.c.l.b16 %v3160
    %v3340 = vunpack.c.h.b16 %v3160
    %v3341 = vunpack.c.l.b16 %v3161
    %v3342 = vunpack.c.h.b16 %v3161
    %v3343 = vunpack.c.l.b16 %v3162
    %v3344 = vunpack.c.h.b16 %v3162
    %v3345 = vunpack.c.l.b16 %v3163
    %v3346 = vunpack.c.h.b16 %v3163
    %v3347 = vunpack.c.l.b16 %v3164
    %v3348 = vunpack.c.h.b16 %v3164
    %v3349 = vunpack.c.l.b16 %v3165
    %v3350 = vunpack.c.h.b16 %v3165
    %v3351 = vunpack.c.l.b16 %v3166
    %v3352 = vunpack.c.h.b16 %v3166
    %v3353 = vunpack.c.l.b16 %v3167
    %v3354 = vunpack.c.h.b16 %v3167
    %v3355 = vunpack.c.l.b16 %v3168
    %v3356 = vunpack.c.h.b16 %v3168
    %v3357 = vunpack.c.l.b16 %v3169
    %v3358 = vunpack.c.h.b16 %v3169
    %v3359 = vunpack.c.l.b16 %v3170
    %v3360 = vunpack.c.h.b16 %v3170
    %v3361 = vunpack.c.l.b16 %v3171
    %v3362 = vunpack.c.h.b16 %v3171
    %v3363 = vunpack.c.l.b16 %v3172
    %v3364 = vunpack.c.h.b16 %v3172
    %v3365 = vunpack.c.l.b16 %v3173
    %v3366 = vunpack.c.h.b16 %v3173
    %v3367 = vunpack.c.l.b16 %v3174
    %v3368 = vunpack.c.h.b16 %v3174
    %v3369 = vunpack.c.l.b16 %v3175
    %v3370 = vunpack.c.h.b16 %v3175
    %v3371 = vunpack.c.l.b16 %v3176
    %v3372 = vunpack.c.h.b16 %v3176
    %v3373 = vunpack.c.l.b16 %v3177
    %v3374 = vunpack.c.h.b16 %v3177
    %v3375 = vunpack.c.l.b16 %v3178
    %v3376 = vunpack.c.h.b16 %v3178
    %v3377 = vpack.c.b16 %v3251, %v3249
    %v3378 = vpack.c.b16 %v3252, %v3250
    %v3379 = vpack.c.b16 %v3255, %v3253
    %v3380 = vpack.c.b16 %v3256, %v3254
    %v3381 = vpack.c.b16 %v3259, %v3257
    %v3382 = vpack.c.b16 %v3260, %v3258
    %v3383 = vpack.c.b16 %v3263, %v3261
    %v3384 = vpack.c.b16 %v3264, %v3262
    %v3385 = vpack.c.b16 %v3267, %v3265
    %v3386 = vpack.c.b16 %v3268, %v3266
    %v3387 = vpack.c.b16 %v3271, %v3269
    %v3388 = vpack.c.b16 %v3272, %v3270
    %v3389 = vpack.c.b16 %v3275, %v3273
    %v3390 = vpack.c.b16 %v3276, %v3274
    %v3391 = vpack.c.b16 %v3279, %v3277
    %v3392 = vpack.c.b16 %v3280, %v3278
    %v3393 = vpack.c.b16 %v3283, %v3281
    %v3394 = vpack.c.b16 %v3284, %v3282
    %v3395 = vpack.c.b16 %v3287, %v3285
    %v3396 = vpack.c.b16 %v3288, %v3286
    %v3397 = vpack.c.b16 %v3291, %v3289
    %v3398 = vpack.c.b16 %v3292, %v3290
    %v3399 = vpack.c.b16 %v3295, %v3293
    %v3400 = vpack.c.b16 %v3296, %v3294
    %v3401 = vpack.c.b16 %v3299, %v3297
    %v3402 = vpack.c.b16 %v3300, %v3298
    %v3403 = vpack.c.b16 %v3303, %v3301
    %v3404 = vpack.c.b16 %v3304, %v3302
    %v3405 = vpack.c.b16 %v3307, %v3305
    %v3406 = vpack.c.b16 %v3308, %v3306
    %v3407 = vpack.c.b16 %v3311, %v3309
    %v3408 = vpack.c.b16 %v3312, %v3310
    %v3409 = vpack.c.b16 %v3315, %v3313
    %v3410 = vpack.c.b16 %v3316, %v3314
    %v3411 = vpack.c.b16 %v3319, %v3317
    %v3412 = vpack.c.b16 %v3320, %v3318
    %v3413 = vpack.c.b16 %v3323, %v3321
    %v3414 = vpack.c.b16 %v3324, %v3322
    %v3415 = vpack.c.b16 %v3327, %v3325
    %v3416 = vpack.c.b16 %v3328, %v3326
    %v3417 = vpack.c.b16 %v3331, %v3329
    %v3418 = vpack.c.b16 %v3332, %v3330
    %v3419 = vpack.c.b16 %v3335, %v3333
    %v3420 = vpack.c.b16 %v3336, %v3334
    %v3421 = vpack.c.b16 %v3339, %v3337
    %v3422 = vpack.c.b16 %v3340, %v3338
    %v3423 = vpack.c.b16 %v3343, %v3341
    %v3424 = vpack.c.b16 %v3344, %v3342
    %v3425 = vpack.c.b16 %v3347, %v3345
    %v3426 = vpack.c.b16 %v3348, %v3346
    %v3427 = vpack.c.b16 %v3351, %v3349
    %v3428 = vpack.c.b16 %v3352, %v3350
    %v3429 = vpack.c.b16 %v3355, %v3353
    %v3430 = vpack.c.b16 %v3356, %v3354
    %v3431 = vpack.c.b16 %v3359, %v3357
    %v3432 = vpack.c.b16 %v3360, %v3358
    %v3433 = vpack.c.b16 %v3363, %v3361
    %v3434 = vpack.c.b16 %v3364, %v3362
    %v3435 = vpack.c.b16 %v3367, %v3365
    %v3436 = vpack.c.b16 %v3368, %v3366
    %v3437 = vpack.c.b16 %v3371, %v3369
    %v3438 = vpack.c.b16 %v3372, %v3370
    %v3439 = vpack.c.b16 %v3375, %v3373
    %v3440 = vpack.c.b16 %v3376, %v3374
    %3505 = vmatpush.bf16.msra.mxu0 %v3391
    %3506 = vmatpush.bf16.msra.mxu0 %v3389
    %3507 = vmatpush.bf16.msra.mxu0 %v3387
    %3508 = vmatpush.bf16.msra.mxu0 %v3385
    %3509 = vmatpush.bf16.msra.mxu0 %v3383
    %3510 = vmatpush.bf16.msra.mxu0 %v3381
    %3511 = vmatpush.bf16.msra.mxu0 %v3379
    %3512 = vmatpush.bf16.msra.mxu0 %v3377
    %3513 = vmatmul.bf16.gmra.mxu0 %v3111
    %v3514 = vpop.f32.mrf.mxu0
    %v3515 = vadd.f32 %v3181, %v3514
    %v3516 = vpop.f32.mrf.mxu0
    %3517 = vdwg.mxu0
    %3518 = vmatpush.bf16.msra.mxu0 %v3407
    %3519 = vmatpush.bf16.msra.mxu0 %v3405
    %3520 = vmatpush.bf16.msra.mxu0 %v3403
    %3521 = vmatpush.bf16.msra.mxu0 %v3401
    %3522 = vmatpush.bf16.msra.mxu0 %v3399
    %3523 = vmatpush.bf16.msra.mxu0 %v3397
    %3524 = vmatpush.bf16.msra.mxu0 %v3395
    %3525 = vmatpush.bf16.msra.mxu0 %v3393
    %3526 = vmatmul.bf16.gmra.mxu0 %v3112
    %v3527 = vpop.f32.mrf.mxu0
    %v3528 = vadd.f32 %v3515, %v3527
    %v3529 = vpop.f32.mrf.mxu0
    %3530 = vdwg.mxu0
    %3531 = vmatpush.bf16.msra.mxu0 %v3423
    %3532 = vmatpush.bf16.msra.mxu0 %v3421
    %3533 = vmatpush.bf16.msra.mxu0 %v3419
    %3534 = vmatpush.bf16.msra.mxu0 %v3417
    %3535 = vmatpush.bf16.msra.mxu0 %v3415
    %3536 = vmatpush.bf16.msra.mxu0 %v3413
    %3537 = vmatpush.bf16.msra.mxu0 %v3411
    %3538 = vmatpush.bf16.msra.mxu0 %v3409
    %3539 = vmatmul.bf16.gmra.mxu0 %v3113
    %v3540 = vpop.f32.mrf.mxu0
    %v3541 = vadd.f32 %v3528, %v3540
    %v3542 = vpop.f32.mrf.mxu0
    %3543 = vdwg.mxu0
    %3544 = vmatpush.bf16.msra.mxu0 %v3439
    %3545 = vmatpush.bf16.msra.mxu0 %v3437
    %3546 = vmatpush.bf16.msra.mxu0 %v3435
    %3547 = vmatpush.bf16.msra.mxu0 %v3433
    %3548 = vmatpush.bf16.msra.mxu0 %v3431
    %3549 = vmatpush.bf16.msra.mxu0 %v3429
    %3550 = vmatpush.bf16.msra.mxu0 %v3427
    %3551 = vmatpush.bf16.msra.mxu0 %v3425
    %3552 = vmatmul.bf16.gmra.mxu0 %v3114
    %v3553 = vpop.f32.mrf.mxu0
    %v3554 = vadd.f32 %v3541, %v3553
    %v3555 = vpop.f32.mrf.mxu0
    %3556 = vdwg.mxu0
    %3557 = vmatpush.bf16.msra.mxu0 %v3392
    %3558 = vmatpush.bf16.msra.mxu0 %v3390
    %3559 = vmatpush.bf16.msra.mxu0 %v3388
    %3560 = vmatpush.bf16.msra.mxu0 %v3386
    %3561 = vmatpush.bf16.msra.mxu0 %v3384
    %3562 = vmatpush.bf16.msra.mxu0 %v3382
    %3563 = vmatpush.bf16.msra.mxu0 %v3380
    %3564 = vmatpush.bf16.msra.mxu0 %v3378
    %3565 = vmatmul.bf16.gmra.mxu0 %v3111
    %v3566 = vpop.f32.mrf.mxu0
    %v3567 = vadd.f32 %v3182, %v3566
    %v3568 = vpop.f32.mrf.mxu0
    %3569 = vdwg.mxu0
    %3570 = vmatpush.bf16.msra.mxu0 %v3408
    %3571 = vmatpush.bf16.msra.mxu0 %v3406
    %3572 = vmatpush.bf16.msra.mxu0 %v3404
    %3573 = vmatpush.bf16.msra.mxu0 %v3402
    %3574 = vmatpush.bf16.msra.mxu0 %v3400
    %3575 = vmatpush.bf16.msra.mxu0 %v3398
    %3576 = vmatpush.bf16.msra.mxu0 %v3396
    %3577 = vmatpush.bf16.msra.mxu0 %v3394
    %3578 = vmatmul.bf16.gmra.mxu0 %v3112
    %v3579 = vpop.f32.mrf.mxu0
    %v3580 = vadd.f32 %v3567, %v3579
    %v3581 = vpop.f32.mrf.mxu0
    %3582 = vdwg.mxu0
    %3583 = vmatpush.bf16.msra.mxu0 %v3424
    %3584 = vmatpush.bf16.msra.mxu0 %v3422
    %3585 = vmatpush.bf16.msra.mxu0 %v3420
    %3586 = vmatpush.bf16.msra.mxu0 %v3418
    %3587 = vmatpush.bf16.msra.mxu0 %v3416
    %3588 = vmatpush.bf16.msra.mxu0 %v3414
    %3589 = vmatpush.bf16.msra.mxu0 %v3412
    %3590 = vmatpush.bf16.msra.mxu0 %v3410
    %3591 = vmatmul.bf16.gmra.mxu0 %v3113
    %v3592 = vpop.f32.mrf.mxu0
    %v3593 = vadd.f32 %v3580, %v3592
    %v3594 = vpop.f32.mrf.mxu0
    %3595 = vdwg.mxu0
    %3596 = vmatpush.bf16.msra.mxu0 %v3440
    %3597 = vmatpush.bf16.msra.mxu0 %v3438
    %3598 = vmatpush.bf16.msra.mxu0 %v3436
    %3599 = vmatpush.bf16.msra.mxu0 %v3434
    %3600 = vmatpush.bf16.msra.mxu0 %v3432
    %3601 = vmatpush.bf16.msra.mxu0 %v3430
    %3602 = vmatpush.bf16.msra.mxu0 %v3428
    %3603 = vmatpush.bf16.msra.mxu0 %v3426
    %3604 = vmatmul.bf16.gmra.mxu0 %v3114
    %v3605 = vpop.f32.mrf.mxu0
    %v3606 = vadd.f32 %v3593, %v3605
    %v3607 = vpop.f32.mrf.mxu0
    %3608 = vdwg.mxu0
    %v3609 = vmax.f32 %v3554, 0.0
    %v3610 = vmax.f32 %v3606, 0.0
    %v3611 = vpack.c.bf16 %v3609, %v3609
    %v3612 = vpack.c.bf16 %v3610, %v3610
    %v3613 = vld [vmem:[%s18] sm:$0xf]
    %v3614 = vld [vmem:[%s18 + $0x4] sm:$0xf]
    %v3615 = vld [vmem:[%s18 + $0x8] sm:$0xf]
    %v3616 = vld [vmem:[%s18 + $0xc] sm:$0xf]
    %v3617 = vld [vmem:[%s18 + $0x10] sm:$0xf]
    %v3618 = vld [vmem:[%s18 + $0x14] sm:$0xf]
    %v3619 = vld [vmem:[%s18 + $0x18] sm:$0xf]
    %v3620 = vld [vmem:[%s18 + $0x1c] sm:$0xf]
    %v3621 = vld [vmem:[%s18 + $0x20] sm:$0xf]
    %v3622 = vld [vmem:[%s18 + $0x24] sm:$0xf]
    %v3623 = vld [vmem:[%s18 + $0x28] sm:$0xf]
    %v3624 = vld [vmem:[%s18 + $0x2c] sm:$0xf]
    %v3625 = vld [vmem:[%s18 + $0x30] sm:$0xf]
    %v3626 = vld [vmem:[%s18 + $0x34] sm:$0xf]
    %v3627 = vld [vmem:[%s18 + $0x38] sm:$0xf]
    %v3628 = vld [vmem:[%s18 + $0x3c] sm:$0xf]
    %v3629 = vld [vmem:[%s18 + $0x40] sm:$0xf]
    %v3630 = vld [vmem:[%s18 + $0x44] sm:$0xf]
    %v3631 = vld [vmem:[%s18 + $0x48] sm:$0xf]
    %v3632 = vld [vmem:[%s18 + $0x4c] sm:$0xf]
    %v3633 = vld [vmem:[%s18 + $0x50] sm:$0xf]
    %v3634 = vld [vmem:[%s18 + $0x54] sm:$0xf]
    %v3635 = vld [vmem:[%s18 + $0x58] sm:$0xf]
    %v3636 = vld [vmem:[%s18 + $0x5c] sm:$0xf]
    %v3637 = vld [vmem:[%s18 + $0x60] sm:$0xf]
    %v3638 = vld [vmem:[%s18 + $0x64] sm:$0xf]
    %v3639 = vld [vmem:[%s18 + $0x68] sm:$0xf]
    %v3640 = vld [vmem:[%s18 + $0x6c] sm:$0xf]
    %v3641 = vld [vmem:[%s18 + $0x70] sm:$0xf]
    %v3642 = vld [vmem:[%s18 + $0x74] sm:$0xf]
    %v3643 = vld [vmem:[%s18 + $0x78] sm:$0xf]
    %v3644 = vld [vmem:[%s18 + $0x7c] sm:$0xf]
    %v3645 = vld [vmem:[%s19] sm:$0x1]
    %v3647 = vperm.slane %v3645, 0
    %v3681 = vunpack.c.l.b16 %v3613
    %v3682 = vunpack.c.l.b16 %v3614
    %v3683 = vunpack.c.l.b16 %v3615
    %v3684 = vunpack.c.l.b16 %v3616
    %v3685 = vunpack.c.l.b16 %v3617
    %v3686 = vunpack.c.l.b16 %v3618
    %v3687 = vunpack.c.l.b16 %v3619
    %v3688 = vunpack.c.l.b16 %v3620
    %v3689 = vunpack.c.l.b16 %v3621
    %v3690 = vunpack.c.l.b16 %v3622
    %v3691 = vunpack.c.l.b16 %v3623
    %v3692 = vunpack.c.l.b16 %v3624
    %v3693 = vunpack.c.l.b16 %v3625
    %v3694 = vunpack.c.l.b16 %v3626
    %v3695 = vunpack.c.l.b16 %v3627
    %v3696 = vunpack.c.l.b16 %v3628
    %v3697 = vunpack.c.l.b16 %v3629
    %v3698 = vunpack.c.l.b16 %v3630
    %v3699 = vunpack.c.l.b16 %v3631
    %v3700 = vunpack.c.l.b16 %v3632
    %v3701 = vunpack.c.l.b16 %v3633
    %v3702 = vunpack.c.l.b16 %v3634
    %v3703 = vunpack.c.l.b16 %v3635
    %v3704 = vunpack.c.l.b16 %v3636
    %v3705 = vunpack.c.l.b16 %v3637
    %v3706 = vunpack.c.l.b16 %v3638
    %v3707 = vunpack.c.l.b16 %v3639
    %v3708 = vunpack.c.l.b16 %v3640
    %v3709 = vunpack.c.l.b16 %v3641
    %v3710 = vunpack.c.l.b16 %v3642
    %v3711 = vunpack.c.l.b16 %v3643
    %v3712 = vunpack.c.l.b16 %v3644
    %v3713 = vpack.c.b16 %v3682, %v3681
    %v3714 = vpack.c.b16 %v3684, %v3683
    %v3715 = vpack.c.b16 %v3686, %v3685
    %v3716 = vpack.c.b16 %v3688, %v3687
    %v3717 = vpack.c.b16 %v3690, %v3689
    %v3718 = vpack.c.b16 %v3692, %v3691
    %v3719 = vpack.c.b16 %v3694, %v3693
    %v3720 = vpack.c.b16 %v3696, %v3695
    %v3721 = vpack.c.b16 %v3698, %v3697
    %v3722 = vpack.c.b16 %v3700, %v3699
    %v3723 = vpack.c.b16 %v3702, %v3701
    %v3724 = vpack.c.b16 %v3704, %v3703
    %v3725 = vpack.c.b16 %v3706, %v3705
    %v3726 = vpack.c.b16 %v3708, %v3707
    %v3727 = vpack.c.b16 %v3710, %v3709
    %v3728 = vpack.c.b16 %v3712, %v3711
    %3745 = vmatpush.bf16.msra.mxu0 %v3720
    %3746 = vmatpush.bf16.msra.mxu0 %v3719
    %3747 = vmatpush.bf16.msra.mxu0 %v3718
    %3748 = vmatpush.bf16.msra.mxu0 %v3717
    %3749 = vmatpush.bf16.msra.mxu0 %v3716
    %3750 = vmatpush.bf16.msra.mxu0 %v3715
    %3751 = vmatpush.bf16.msra.mxu0 %v3714
    %3752 = vmatpush.bf16.msra.mxu0 %v3713
    %3753 = vmatmul.bf16.gmra.mxu0 %v3611
    %v3754 = vpop.f32.mrf.mxu0
    %v3755 = vadd.f32 %v3647, %v3754
    %v3756 = vpop.f32.mrf.mxu0
    %3757 = vdwg.mxu0
    %3758 = vmatpush.bf16.msra.mxu0 %v3728
    %3759 = vmatpush.bf16.msra.mxu0 %v3727
    %3760 = vmatpush.bf16.msra.mxu0 %v3726
    %3761 = vmatpush.bf16.msra.mxu0 %v3725
    %3762 = vmatpush.bf16.msra.mxu0 %v3724
    %3763 = vmatpush.bf16.msra.mxu0 %v3723
    %3764 = vmatpush.bf16.msra.mxu0 %v3722
    %3765 = vmatpush.bf16.msra.mxu0 %v3721
    %3766 = vmatmul.bf16.gmra.mxu0 %v3612
    %v3767 = vpop.f32.mrf.mxu0
    %v3768 = vadd.f32 %v3755, %v3767
    %v3769 = vpop.f32.mrf.mxu0
    %3770 = vdwg.mxu0
    %v3771 = vmax.f32 %v3768, 0.0
    %v3772 = vpack.c.bf16 %v3771, %v3771
    %v3773 = vld [vmem:[%s20] sm:$0xf]
    %v3774 = vld [vmem:[%s20 + $0x4] sm:$0xf]
    %v3775 = vld [vmem:[%s20 + $0x8] sm:$0xf]
    %v3776 = vld [vmem:[%s20 + $0xc] sm:$0xf]
    %v3777 = vld [vmem:[%s20 + $0x10] sm:$0xf]
    %v3778 = vld [vmem:[%s20 + $0x14] sm:$0xf]
    %v3779 = vld [vmem:[%s20 + $0x18] sm:$0xf]
    %v3780 = vld [vmem:[%s20 + $0x1c] sm:$0xf]
    %v3781 = vld [vmem:[%s21] sm:$0x1]
    %v3783 = vperm.slane %v3781, 0
    %v3793 = vunpack.c.l.b16 %v3773
    %v3794 = vunpack.c.l.b16 %v3774
    %v3795 = vunpack.c.l.b16 %v3775
    %v3796 = vunpack.c.l.b16 %v3776
    %v3797 = vunpack.c.l.b16 %v3777
    %v3798 = vunpack.c.l.b16 %v3778
    %v3799 = vunpack.c.l.b16 %v3779
    %v3800 = vunpack.c.l.b16 %v3780
    %v3801 = vpack.c.b16 %v3794, %v3793
    %v3802 = vpack.c.b16 %v3796, %v3795
    %v3803 = vpack.c.b16 %v3798, %v3797
    %v3804 = vpack.c.b16 %v3800, %v3799
    %v3810 = vsel %vm1135, %v3772, 0
    %3812 = vmatpush.bf16.msra.mxu0 0
    %3813 = vmatpush.bf16.msra.mxu0 0
    %3814 = vmatpush.bf16.msra.mxu0 0
    %3815 = vmatpush.bf16.msra.mxu0 0
    %3816 = vmatpush.bf16.msra.mxu0 %v3804
    %3817 = vmatpush.bf16.msra.mxu0 %v3803
    %3818 = vmatpush.bf16.msra.mxu0 %v3802
    %3819 = vmatpush.bf16.msra.mxu0 %v3801
    %3820 = vmatmul.bf16.gmra.mxu0 %v3810
    %v3821 = vpop.f32.mrf.mxu0
    %v3822 = vadd.f32 %v3783, %v3821
    %v3823 = vpop.f32.mrf.mxu0
    %3824 = vdwg.mxu0
    %vm3825 = vcmask 15360
    %3826 = vst.msk [vmem:[%s22] sm:$0xff] %vm3825, %v3822
    // Predicated region
    $region98: #{tpu_custom_call.1} parent=1 // pred_check
      _
    $region99: #{tpu_custom_call.1} parent=1 // pred_check_branch
      %3828 = sbr.rel (0) target = $region101
    $region100: #{tpu_custom_call.1} parent=1 // pred_region
      _
    $region101: #{tpu_custom_call.1} parent=1 // pred_fallthru
      _
    // Predicated region
    $region102: #{tpu_custom_call.1} parent=1 // pred_check
      _
    $region103: #{tpu_custom_call.1} parent=1 // pred_check_branch
      %3830 = sbr.rel (0) target = $region105
    $region104: #{tpu_custom_call.1} parent=1 // pred_region
      _
    $region105: #{tpu_custom_call.1} parent=1 // pred_fallthru
      _
    %3831 = vsyncpa [#allocation3], 1
    %3832 = vsyncpa [#allocation5], 1

</llo_original>
